<compile_context>
chip_gen: v7x
topology: tpu7x:2x2x1
jax: 0.10.0
libtpu: 0.0.40
codegen_flags: <defaults>
</compile_context>

<pallas_src>
import functools
import math

import jax
import jax.numpy as jnp
from jax.experimental import pallas as pl
from jax.experimental.pallas import tpu as pltpu  # noqa: F401  (TPU backend)


# ----------------------------------------------------------------------------
# Config
# ----------------------------------------------------------------------------
class Config:
    vocab_size = 100
    type_vocab_size = 2
    max_position = 16
    hidden = 32
    num_heads = 2
    num_layers = 2
    intermediate = 64
    num_classes = 34
    padded_classes = 128   # lane-dense classifier output (sliced to 34 outside)
    padded_vocab = 128     # lane-dense one-hot gather inside the kernel


# ----------------------------------------------------------------------------
# Kernel helpers
# ----------------------------------------------------------------------------
def _layernorm(x, g, b, eps):
    # Statistics kept in f32 (v5e has no bf16 VPU/EUP).
    mean = jnp.mean(x, axis=-1, keepdims=True)
    xc = x - mean
    var = jnp.mean(xc * xc, axis=-1, keepdims=True)
    inv = jax.lax.rsqrt(var + eps)
    return xc * inv * g + b


def _softmax_rows(scores):
    scores = scores - jnp.max(scores, axis=-1, keepdims=True)
    p = jnp.exp(scores)
    denom = jnp.sum(p, axis=-1, keepdims=True)
    # Divide goes to the EUP slot instead of the VPU (approx recip, ~1e-3 rel
    # error; acceptable at inference).
    return p * pl.reciprocal(denom, approx=True)


# ----------------------------------------------------------------------------
# Fused forward kernel
# ----------------------------------------------------------------------------
def _bert_fused_kernel(
    ids_ref, mask_ref,
    word_emb_ref, pos_type_ref,
    emb_ln_g_ref, emb_ln_b_ref,
    wqkv_ref, bqkv_ref, wo_ref, bo_ref,
    ln1_g_ref, ln1_b_ref,
    wi_ref, bi_ref, wo2_ref, bo2_ref,
    ln2_g_ref, ln2_b_ref,
    pool_w_ref, pool_b_ref,
    fc1_w_ref, fc1_b_ref,
    out_ref,
    *, num_layers, B, S, H, nH, Dh, Vp, eps,
):
    T = B * S

    # ---- Embedding gather as a lane-dense one-hot matmul (MXU), plus the
    # precomputed positional + token-type slab; then embedding layernorm.
    ids = ids_ref[...]                                               # [T, 1] i32
    vocab_iota = jax.lax.broadcasted_iota(jnp.int32, (T, Vp), 1)
    onehot = (ids == vocab_iota).astype(jnp.float32)                 # [T, Vp]
    x = jnp.dot(onehot, word_emb_ref[...],
                preferred_element_type=jnp.float32)                  # [T, H]
    x = x + pos_type_ref[...]
    x = _layernorm(x, emb_ln_g_ref[...], emb_ln_b_ref[...], eps)

    # Additive attention mask built in-kernel: 0 where attended, -1e9 where pad.
    add_mask = (1.0 - mask_ref[...].astype(jnp.float32)) * -1e9      # [B, S]
    add_mask = add_mask[:, None, :]                                  # [B, 1, S]

    for l in range(num_layers):                  # static unroll (L = 2)
        # ---- Self-attention.  Per-head Q/K/V projections use pre-packed
        # head-local weights (no lane slicing of a fused QKV tensor); the
        # 1/sqrt(Dh) scale is already folded into Wq/bq.  The output
        # projection is folded in per head (sum, not concat/transpose).
        attn = jnp.zeros((T, H), jnp.float32)
        for h in range(nH):                      # static unroll (nH = 2)
            qh = (jnp.dot(x, wqkv_ref[l, 0, h],
                          preferred_element_type=jnp.float32)
                  + bqkv_ref[l, 0, h]).reshape(B, S, Dh)
            kh = (jnp.dot(x, wqkv_ref[l, 1, h],
                          preferred_element_type=jnp.float32)
                  + bqkv_ref[l, 1, h]).reshape(B, S, Dh)
            vh = (jnp.dot(x, wqkv_ref[l, 2, h],
                          preferred_element_type=jnp.float32)
                  + bqkv_ref[l, 2, h]).reshape(B, S, Dh)

            scores = jnp.einsum('bqd,bkd->bqk', qh, kh,
                                preferred_element_type=jnp.float32)
            scores = scores + add_mask
            p = _softmax_rows(scores)
            ctx_h = jnp.einsum('bqk,bkd->bqd', p, vh,
                               preferred_element_type=jnp.float32)
            ctx_h = ctx_h.reshape(T, Dh)
            attn = attn + jnp.dot(ctx_h, wo_ref[l, h],
                                  preferred_element_type=jnp.float32)
        attn = attn + bo_ref[l]

        # Residual add fused into the layernorm.
        x = _layernorm(x + attn, ln1_g_ref[l], ln1_b_ref[l], eps)

        # ---- FFN.  tanh-GELU lowers to the EUP slot (erf-GELU would expand
        # to a VPU polynomial); small numerical difference vs erf-GELU.
        inter = jnp.dot(x, wi_ref[l], preferred_element_type=jnp.float32)
        inter = jax.nn.gelu(inter + bi_ref[l], approximate=True)
        ffn = jnp.dot(inter, wo2_ref[l], preferred_element_type=jnp.float32)
        ffn = ffn + bo2_ref[l]
        x = _layernorm(x + ffn, ln2_g_ref[l], ln2_b_ref[l], eps)

    # ---- Pooler: dense + tanh on the [CLS] token (single strided extract).
    x_cls = x.reshape(B, S, H)[:, 0, :]                              # [B, H]
    pooled = jnp.tanh(
        jnp.dot(x_cls, pool_w_ref[...], preferred_element_type=jnp.float32)
        + pool_b_ref[...])

    # ---- Dropout is identity at inference; classifier + Sigmoid into a
    # lane-dense 128-wide output slab (sliced to 34 columns in the wrapper).
    logits = jnp.dot(pooled, fc1_w_ref[...], preferred_element_type=jnp.float32)
    logits = logits + fc1_b_ref[...]
    out_ref[...] = jax.nn.sigmoid(logits)


# ----------------------------------------------------------------------------
# Synthetic BERT parameters
# ----------------------------------------------------------------------------
def init_params(key, cfg):
    params = {}

    def nrm(k, shape, scale=0.02):
        return scale * jax.random.normal(k, shape, dtype=jnp.float32)

    keys = iter(jax.random.split(key, 128))
    H, I = cfg.hidden, cfg.intermediate

    params["word_emb"] = nrm(next(keys), (cfg.vocab_size, H))
    params["pos_emb"] = nrm(next(keys), (cfg.max_position, H))
    params["type_emb"] = nrm(next(keys), (cfg.type_vocab_size, H))
    params["emb_ln_g"] = jnp.ones((H,), jnp.float32)
    params["emb_ln_b"] = jnp.zeros((H,), jnp.float32)

    layers = []
    for _ in range(cfg.num_layers):
        layers.append({
            "wq": nrm(next(keys), (H, H)), "bq": jnp.zeros((H,), jnp.float32),
            "wk": nrm(next(keys), (H, H)), "bk": jnp.zeros((H,), jnp.float32),
            "wv": nrm(next(keys), (H, H)), "bv": jnp.zeros((H,), jnp.float32),
            "wo": nrm(next(keys), (H, H)), "bo": jnp.zeros((H,), jnp.float32),
            "ln1_g": jnp.ones((H,), jnp.float32), "ln1_b": jnp.zeros((H,), jnp.float32),
            "wi": nrm(next(keys), (H, I)), "bi": jnp.zeros((I,), jnp.float32),
            "wo2": nrm(next(keys), (I, H)), "bo2": jnp.zeros((H,), jnp.float32),
            "ln2_g": jnp.ones((H,), jnp.float32), "ln2_b": jnp.zeros((H,), jnp.float32),
        })
    params["layers"] = layers

    params["pool_w"] = nrm(next(keys), (H, H))
    params["pool_b"] = jnp.zeros((H,), jnp.float32)

    # Head from the PyTorch module: fc1 = nn.Linear(bert_dim, 34)
    params["fc1_w"] = nrm(next(keys), (H, cfg.num_classes))
    params["fc1_b"] = jnp.zeros((cfg.num_classes,), jnp.float32)
    return params


# ----------------------------------------------------------------------------
# One-time weight packing (hoisted out of the per-call forward)
# ----------------------------------------------------------------------------
def pack_params(params, cfg, B, S):
    H, I, L = cfg.hidden, cfg.intermediate, cfg.num_layers
    nH = cfg.num_heads
    Dh = H // nH
    Np, Vp = cfg.padded_classes, cfg.padded_vocab
    scale = 1.0 / math.sqrt(Dh)
    layers = params["layers"]

    def cols_per_head(w):        # (H, H) -> (nH, H, Dh): per-head column blocks
        return jnp.transpose(w.reshape(H, nH, Dh), (1, 0, 2))

    def b_per_head(b):           # (H,) -> (nH, 1, Dh)
        return b.reshape(nH, 1, Dh)

    packed = {}

    # Word-embedding table padded to a lane-dense vocab of 128.
    packed["word_emb"] = jnp.pad(
        params["word_emb"], ((0, Vp - cfg.vocab_size), (0, 0)))          # [Vp, H]

    # Positional + token-type (type id 0 everywhere) slab, pre-tiled to T rows.
    pos_type = params["pos_emb"][:S] + params["type_emb"][0][None, :]    # [S, H]
    packed["pos_type"] = jnp.tile(pos_type, (B, 1))                      # [T, H]

    packed["emb_ln_g"] = params["emb_ln_g"].reshape(1, H)
    packed["emb_ln_b"] = params["emb_ln_b"].reshape(1, H)

    # Per-head Q/K/V weights; 1/sqrt(Dh) folded into Wq and bq (free at runtime).
    packed["wqkv"] = jnp.stack([jnp.stack([cols_per_head(l["wq"]) * scale,
                                           cols_per_head(l["wk"]),
                                           cols_per_head(l["wv"])])
                                for l in layers])                        # [L,3,nH,H,Dh]
    packed["bqkv"] = jnp.stack([jnp.stack([b_per_head(l["bq"]) * scale,
                                           b_per_head(l["bk"]),
                                           b_per_head(l["bv"])])
                                for l in layers])                        # [L,3,nH,1,Dh]
    # Per-head output projection rows.
    packed["wo"] = jnp.stack([l["wo"].reshape(nH, Dh, H) for l in layers])   # [L,nH,Dh,H]
    packed["bo"] = jnp.stack([l["bo"].reshape(1, H) for l in layers])
    packed["ln1_g"] = jnp.stack([l["ln1_g"].reshape(1, H) for l in layers])
    packed["ln1_b"] = jnp.stack([l["ln1_b"].reshape(1, H) for l in layers])
    packed["wi"] = jnp.stack([l["wi"] for l in layers])                      # [L, H, I]
    packed["bi"] = jnp.stack([l["bi"].reshape(1, I) for l in layers])
    packed["wo2"] = jnp.stack([l["wo2"] for l in layers])                    # [L, I, H]
    packed["bo2"] = jnp.stack([l["bo2"].reshape(1, H) for l in layers])
    packed["ln2_g"] = jnp.stack([l["ln2_g"].reshape(1, H) for l in layers])
    packed["ln2_b"] = jnp.stack([l["ln2_b"].reshape(1, H) for l in layers])

    packed["pool_w"] = params["pool_w"]
    packed["pool_b"] = params["pool_b"].reshape(1, H)

    # Classifier padded to a lane-dense 128-wide output.
    packed["fc1_w"] = jnp.pad(params["fc1_w"],
                              ((0, 0), (0, Np - cfg.num_classes)))           # [H, Np]
    packed["fc1_b"] = jnp.pad(params["fc1_b"],
                              (0, Np - cfg.num_classes)).reshape(1, Np)
    return packed


# ----------------------------------------------------------------------------
# Forward: a single fused pallas_call
# ----------------------------------------------------------------------------
def bert_forward(packed, text_ids, attention_mask, *, cfg):
    B, S = text_ids.shape
    H, nH, L = cfg.hidden, cfg.num_heads, cfg.num_layers
    Dh = H // nH
    Np, Vp = cfg.padded_classes, cfg.padded_vocab

    ids_col = text_ids.reshape(B * S, 1).astype(jnp.int32)   # [T, 1] for in-kernel gather

    kernel = functools.partial(
        _bert_fused_kernel,
        num_layers=L, B=B, S=S, H=H, nH=nH, Dh=Dh, Vp=Vp, eps=1e-12)

    out_padded = pl.pallas_call(
        kernel,
        out_shape=jax.ShapeDtypeStruct((B, Np), jnp.float32),
    )(ids_col, attention_mask.astype(jnp.int32),
      packed["word_emb"], packed["pos_type"],
      packed["emb_ln_g"], packed["emb_ln_b"],
      packed["wqkv"], packed["bqkv"], packed["wo"], packed["bo"],
      packed["ln1_g"], packed["ln1_b"],
      packed["wi"], packed["bi"], packed["wo2"], packed["bo2"],
      packed["ln2_g"], packed["ln2_b"],
      packed["pool_w"], packed["pool_b"],
      packed["fc1_w"], packed["fc1_b"])

    return out_padded[:, :cfg.num_classes]


if __name__ == "__main__":
    cfg = Config()
    B, S = 2, 8

    key = jax.random.PRNGKey(0)
    k_params, k_ids = jax.random.split(key)
    params = init_params(k_params, cfg)
    packed = pack_params(params, cfg, B, S)          # one-time pack, outside jit

    text_ids = jax.random.randint(k_ids, (B, S), 0, cfg.vocab_size, dtype=jnp.int32)
    attention_mask = jnp.array(
        [[1, 1, 1, 1, 1, 1, 0, 0],
         [1, 1, 1, 1, 0, 0, 0, 0]], dtype=jnp.int32)

    fwd = jax.jit(functools.partial(bert_forward, cfg=cfg))
    out = fwd(packed, text_ids, attention_mask)
    out = jax.block_until_ready(out)

    assert out.shape == (B, cfg.num_classes)
    assert bool(jnp.all((out >= 0.0) & (out <= 1.0)))
    assert bool(jnp.all(jnp.isfinite(out)))
    print("KERNEL_OK")
</pallas_src>

<mosaic_0001>
module attributes {stable_mosaic.version = 11 : i64} {
  func.func @_bert_fused_kernel(%arg0: memref<16x1xi32, #tpu.memory_space<vmem>>, %arg1: memref<2x8xi32, #tpu.memory_space<vmem>>, %arg2: memref<128x32xf32, #tpu.memory_space<vmem>>, %arg3: memref<16x32xf32, #tpu.memory_space<vmem>>, %arg4: memref<1x32xf32, #tpu.memory_space<vmem>>, %arg5: memref<1x32xf32, #tpu.memory_space<vmem>>, %arg6: memref<2x3x2x32x16xf32, #tpu.memory_space<vmem>>, %arg7: memref<2x3x2x1x16xf32, #tpu.memory_space<vmem>>, %arg8: memref<2x2x16x32xf32, #tpu.memory_space<vmem>>, %arg9: memref<2x1x32xf32, #tpu.memory_space<vmem>>, %arg10: memref<2x1x32xf32, #tpu.memory_space<vmem>>, %arg11: memref<2x1x32xf32, #tpu.memory_space<vmem>>, %arg12: memref<2x32x64xf32, #tpu.memory_space<vmem>>, %arg13: memref<2x1x64xf32, #tpu.memory_space<vmem>>, %arg14: memref<2x64x32xf32, #tpu.memory_space<vmem>>, %arg15: memref<2x1x32xf32, #tpu.memory_space<vmem>>, %arg16: memref<2x1x32xf32, #tpu.memory_space<vmem>>, %arg17: memref<2x1x32xf32, #tpu.memory_space<vmem>>, %arg18: memref<32x32xf32, #tpu.memory_space<vmem>>, %arg19: memref<1x32xf32, #tpu.memory_space<vmem>>, %arg20: memref<32x128xf32, #tpu.memory_space<vmem>>, %arg21: memref<1x128xf32, #tpu.memory_space<vmem>>, %arg22: memref<2x128xf32, #tpu.memory_space<vmem>>) attributes {dimension_semantics = [], scalar_prefetch = 0 : i64, scratch_operands = 0 : i64, tpu.core_type = #tpu.core_type<tc>} {
    %c0 = arith.constant 0 : index
    %c0_0 = arith.constant 0 : index
    %0 = vector.load %arg0[%c0, %c0_0] : memref<16x1xi32, #tpu.memory_space<vmem>>, vector<16x1xi32>
    %1 = tpu.iota {dimensions = array<i32: 1>} : vector<16x128xi32>
    %2 = vector.broadcast %0 : vector<16x1xi32> to vector<16x128xi32>
    %3 = arith.cmpi eq, %2, %1 : vector<16x128xi32>
    %4 = arith.extui %3 : vector<16x128xi1> to vector<16x128xi32>
    %5 = arith.sitofp %4 : vector<16x128xi32> to vector<16x128xf32>
    %c0_1 = arith.constant 0 : index
    %c0_2 = arith.constant 0 : index
    %6 = vector.load %arg2[%c0_1, %c0_2] : memref<128x32xf32, #tpu.memory_space<vmem>>, vector<128x32xf32>
    %cst = arith.constant dense<0.000000e+00> : vector<16x32xf32>
    %7 = tpu.matmul %5, %6, %cst {dimension_numbers = #tpu.dot_dimension_numbers<[1], [0], [0], [1], [0, 0, 1, 1], [], []>} : vector<16x128xf32>, vector<128x32xf32>, vector<16x32xf32> -> vector<16x32xf32>
    %c0_3 = arith.constant 0 : index
    %c0_4 = arith.constant 0 : index
    %8 = vector.load %arg3[%c0_3, %c0_4] : memref<16x32xf32, #tpu.memory_space<vmem>>, vector<16x32xf32>
    %9 = arith.addf %7, %8 : vector<16x32xf32>
    %c0_5 = arith.constant 0 : index
    %c0_6 = arith.constant 0 : index
    %10 = vector.load %arg4[%c0_5, %c0_6] : memref<1x32xf32, #tpu.memory_space<vmem>>, vector<1x32xf32>
    %c0_7 = arith.constant 0 : index
    %c0_8 = arith.constant 0 : index
    %11 = vector.load %arg5[%c0_7, %c0_8] : memref<1x32xf32, #tpu.memory_space<vmem>>, vector<1x32xf32>
    %cst_9 = arith.constant dense<0.000000e+00> : vector<16xf32>
    %12 = vector.multi_reduction <add>, %9, %cst_9 [1] : vector<16x32xf32> to vector<16xf32>
    %13 = vector.shape_cast %12 : vector<16xf32> to vector<16x1xf32>
    %cst_10 = arith.constant 3.200000e+01 : f32
    %14 = vector.broadcast %cst_10 : f32 to vector<16x1xf32>
    %15 = arith.divf %13, %14 : vector<16x1xf32>
    %16 = vector.broadcast %15 : vector<16x1xf32> to vector<16x32xf32>
    %17 = arith.subf %9, %16 : vector<16x32xf32>
    %18 = arith.mulf %17, %17 : vector<16x32xf32>
    %cst_11 = arith.constant dense<0.000000e+00> : vector<16xf32>
    %19 = vector.multi_reduction <add>, %18, %cst_11 [1] : vector<16x32xf32> to vector<16xf32>
    %20 = vector.shape_cast %19 : vector<16xf32> to vector<16x1xf32>
    %cst_12 = arith.constant 3.200000e+01 : f32
    %21 = vector.broadcast %cst_12 : f32 to vector<16x1xf32>
    %22 = arith.divf %20, %21 : vector<16x1xf32>
    %cst_13 = arith.constant 9.99999996E-13 : f32
    %23 = vector.broadcast %cst_13 : f32 to vector<16x1xf32>
    %24 = arith.addf %22, %23 : vector<16x1xf32>
    %25 = math.rsqrt %24 : vector<16x1xf32>
    %26 = vector.broadcast %25 : vector<16x1xf32> to vector<16x32xf32>
    %27 = arith.mulf %17, %26 : vector<16x32xf32>
    %28 = vector.broadcast %10 : vector<1x32xf32> to vector<16x32xf32>
    %29 = arith.mulf %27, %28 : vector<16x32xf32>
    %30 = vector.broadcast %11 : vector<1x32xf32> to vector<16x32xf32>
    %31 = arith.addf %29, %30 : vector<16x32xf32>
    %c0_14 = arith.constant 0 : index
    %c0_15 = arith.constant 0 : index
    %32 = vector.load %arg1[%c0_14, %c0_15] : memref<2x8xi32, #tpu.memory_space<vmem>>, vector<2x8xi32>
    %33 = arith.sitofp %32 : vector<2x8xi32> to vector<2x8xf32>
    %cst_16 = arith.constant 1.000000e+00 : f32
    %34 = vector.broadcast %cst_16 : f32 to vector<2x8xf32>
    %35 = arith.subf %34, %33 : vector<2x8xf32>
    %cst_17 = arith.constant -1.000000e+09 : f32
    %36 = vector.broadcast %cst_17 : f32 to vector<2x8xf32>
    %37 = arith.mulf %35, %36 : vector<2x8xf32>
    %38 = vector.shape_cast %37 : vector<2x8xf32> to vector<2x1x8xf32>
    %cst_18 = arith.constant 0.000000e+00 : f32
    %39 = vector.broadcast %cst_18 : f32 to vector<16x32xf32>
    %c0_19 = arith.constant 0 : index
    %c0_20 = arith.constant 0 : index
    %c0_21 = arith.constant 0 : index
    %c0_22 = arith.constant 0 : index
    %c0_23 = arith.constant 0 : index
    %40 = vector.load %arg6[%c0_19, %c0_20, %c0_21, %c0_22, %c0_23] : memref<2x3x2x32x16xf32, #tpu.memory_space<vmem>>, vector<1x1x1x32x16xf32>
    %41 = vector.shape_cast %40 : vector<1x1x1x32x16xf32> to vector<32x16xf32>
    %cst_24 = arith.constant dense<0.000000e+00> : vector<16x16xf32>
    %42 = tpu.matmul %31, %41, %cst_24 {dimension_numbers = #tpu.dot_dimension_numbers<[1], [0], [0], [1], [0, 0, 1, 1], [], []>} : vector<16x32xf32>, vector<32x16xf32>, vector<16x16xf32> -> vector<16x16xf32>
    %c0_25 = arith.constant 0 : index
    %c0_26 = arith.constant 0 : index
    %c0_27 = arith.constant 0 : index
    %c0_28 = arith.constant 0 : index
    %c0_29 = arith.constant 0 : index
    %43 = vector.load %arg7[%c0_25, %c0_26, %c0_27, %c0_28, %c0_29] : memref<2x3x2x1x16xf32, #tpu.memory_space<vmem>>, vector<1x1x1x1x16xf32>
    %44 = vector.shape_cast %43 : vector<1x1x1x1x16xf32> to vector<1x16xf32>
    %45 = vector.broadcast %44 : vector<1x16xf32> to vector<16x16xf32>
    %46 = arith.addf %42, %45 : vector<16x16xf32>
    %47 = vector.shape_cast %46 : vector<16x16xf32> to vector<2x8x16xf32>
    %c0_30 = arith.constant 0 : index
    %c1 = arith.constant 1 : index
    %c0_31 = arith.constant 0 : index
    %c0_32 = arith.constant 0 : index
    %c0_33 = arith.constant 0 : index
    %48 = vector.load %arg6[%c0_30, %c1, %c0_31, %c0_32, %c0_33] : memref<2x3x2x32x16xf32, #tpu.memory_space<vmem>>, vector<1x1x1x32x16xf32>
    %49 = vector.shape_cast %48 : vector<1x1x1x32x16xf32> to vector<32x16xf32>
    %cst_34 = arith.constant dense<0.000000e+00> : vector<16x16xf32>
    %50 = tpu.matmul %31, %49, %cst_34 {dimension_numbers = #tpu.dot_dimension_numbers<[1], [0], [0], [1], [0, 0, 1, 1], [], []>} : vector<16x32xf32>, vector<32x16xf32>, vector<16x16xf32> -> vector<16x16xf32>
    %c0_35 = arith.constant 0 : index
    %c1_36 = arith.constant 1 : index
    %c0_37 = arith.constant 0 : index
    %c0_38 = arith.constant 0 : index
    %c0_39 = arith.constant 0 : index
    %51 = vector.load %arg7[%c0_35, %c1_36, %c0_37, %c0_38, %c0_39] : memref<2x3x2x1x16xf32, #tpu.memory_space<vmem>>, vector<1x1x1x1x16xf32>
    %52 = vector.shape_cast %51 : vector<1x1x1x1x16xf32> to vector<1x16xf32>
    %53 = vector.broadcast %52 : vector<1x16xf32> to vector<16x16xf32>
    %54 = arith.addf %50, %53 : vector<16x16xf32>
    %55 = vector.shape_cast %54 : vector<16x16xf32> to vector<2x8x16xf32>
    %c0_40 = arith.constant 0 : index
    %c2 = arith.constant 2 : index
    %c0_41 = arith.constant 0 : index
    %c0_42 = arith.constant 0 : index
    %c0_43 = arith.constant 0 : index
    %56 = vector.load %arg6[%c0_40, %c2, %c0_41, %c0_42, %c0_43] : memref<2x3x2x32x16xf32, #tpu.memory_space<vmem>>, vector<1x1x1x32x16xf32>
    %57 = vector.shape_cast %56 : vector<1x1x1x32x16xf32> to vector<32x16xf32>
    %cst_44 = arith.constant dense<0.000000e+00> : vector<16x16xf32>
    %58 = tpu.matmul %31, %57, %cst_44 {dimension_numbers = #tpu.dot_dimension_numbers<[1], [0], [0], [1], [0, 0, 1, 1], [], []>} : vector<16x32xf32>, vector<32x16xf32>, vector<16x16xf32> -> vector<16x16xf32>
    %c0_45 = arith.constant 0 : index
    %c2_46 = arith.constant 2 : index
    %c0_47 = arith.constant 0 : index
    %c0_48 = arith.constant 0 : index
    %c0_49 = arith.constant 0 : index
    %59 = vector.load %arg7[%c0_45, %c2_46, %c0_47, %c0_48, %c0_49] : memref<2x3x2x1x16xf32, #tpu.memory_space<vmem>>, vector<1x1x1x1x16xf32>
    %60 = vector.shape_cast %59 : vector<1x1x1x1x16xf32> to vector<1x16xf32>
    %61 = vector.broadcast %60 : vector<1x16xf32> to vector<16x16xf32>
    %62 = arith.addf %58, %61 : vector<16x16xf32>
    %63 = vector.shape_cast %62 : vector<16x16xf32> to vector<2x8x16xf32>
    "tpu.trace_start"() <{level = 10 : i32, message = "bqd,bkd->bqk"}> : () -> ()
    %cst_50 = arith.constant dense<0.000000e+00> : vector<2x8x8xf32>
    %64 = tpu.matmul %47, %55, %cst_50 {dimension_numbers = #tpu.dot_dimension_numbers<[2], [2], [1], [1], [0, 0, 0, 1, 1, 1], [0], [0]>} : vector<2x8x16xf32>, vector<2x8x16xf32>, vector<2x8x8xf32> -> vector<2x8x8xf32>
    "tpu.trace_stop"() : () -> ()
    %65 = vector.broadcast %38 : vector<2x1x8xf32> to vector<2x8x8xf32>
    %66 = arith.addf %64, %65 : vector<2x8x8xf32>
    %cst_51 = arith.constant dense<0xFF800000> : vector<2x8xf32>
    %67 = vector.multi_reduction <maximumf>, %66, %cst_51 [2] : vector<2x8x8xf32> to vector<2x8xf32>
    %68 = vector.shape_cast %67 : vector<2x8xf32> to vector<2x8x1xf32>
    %69 = vector.broadcast %68 : vector<2x8x1xf32> to vector<2x8x8xf32>
    %70 = arith.subf %66, %69 : vector<2x8x8xf32>
    %71 = math.exp %70 : vector<2x8x8xf32>
    %cst_52 = arith.constant dense<0.000000e+00> : vector<2x8xf32>
    %72 = vector.multi_reduction <add>, %71, %cst_52 [2] : vector<2x8x8xf32> to vector<2x8xf32>
    %73 = vector.shape_cast %72 : vector<2x8xf32> to vector<2x8x1xf32>
    %74 = tpu.reciprocal %73 {approx = true} : vector<2x8x1xf32> -> vector<2x8x1xf32>
    %75 = vector.broadcast %74 : vector<2x8x1xf32> to vector<2x8x8xf32>
    %76 = arith.mulf %71, %75 : vector<2x8x8xf32>
    "tpu.trace_start"() <{level = 10 : i32, message = "bqk,bkd->bqd"}> : () -> ()
    %cst_53 = arith.constant dense<0.000000e+00> : vector<2x8x16xf32>
    %77 = tpu.matmul %76, %63, %cst_53 {dimension_numbers = #tpu.dot_dimension_numbers<[2], [1], [1], [2], [0, 0, 0, 1, 1, 2], [0], [0]>} : vector<2x8x8xf32>, vector<2x8x16xf32>, vector<2x8x16xf32> -> vector<2x8x16xf32>
    "tpu.trace_stop"() : () -> ()
    %78 = vector.shape_cast %77 : vector<2x8x16xf32> to vector<16x16xf32>
    %c0_54 = arith.constant 0 : index
    %c0_55 = arith.constant 0 : index
    %c0_56 = arith.constant 0 : index
    %c0_57 = arith.constant 0 : index
    %79 = vector.load %arg8[%c0_54, %c0_55, %c0_56, %c0_57] : memref<2x2x16x32xf32, #tpu.memory_space<vmem>>, vector<1x1x16x32xf32>
    %80 = vector.shape_cast %79 : vector<1x1x16x32xf32> to vector<16x32xf32>
    %cst_58 = arith.constant dense<0.000000e+00> : vector<16x32xf32>
    %81 = tpu.matmul %78, %80, %cst_58 {dimension_numbers = #tpu.dot_dimension_numbers<[1], [0], [0], [1], [0, 0, 1, 1], [], []>} : vector<16x16xf32>, vector<16x32xf32>, vector<16x32xf32> -> vector<16x32xf32>
    %82 = arith.addf %39, %81 : vector<16x32xf32>
    %c0_59 = arith.constant 0 : index
    %c0_60 = arith.constant 0 : index
    %c1_61 = arith.constant 1 : index
    %c0_62 = arith.constant 0 : index
    %c0_63 = arith.constant 0 : index
    %83 = vector.load %arg6[%c0_59, %c0_60, %c1_61, %c0_62, %c0_63] : memref<2x3x2x32x16xf32, #tpu.memory_space<vmem>>, vector<1x1x1x32x16xf32>
    %84 = vector.shape_cast %83 : vector<1x1x1x32x16xf32> to vector<32x16xf32>
    %cst_64 = arith.constant dense<0.000000e+00> : vector<16x16xf32>
    %85 = tpu.matmul %31, %84, %cst_64 {dimension_numbers = #tpu.dot_dimension_numbers<[1], [0], [0], [1], [0, 0, 1, 1], [], []>} : vector<16x32xf32>, vector<32x16xf32>, vector<16x16xf32> -> vector<16x16xf32>
    %c0_65 = arith.constant 0 : index
    %c0_66 = arith.constant 0 : index
    %c1_67 = arith.constant 1 : index
    %c0_68 = arith.constant 0 : index
    %c0_69 = arith.constant 0 : index
    %86 = vector.load %arg7[%c0_65, %c0_66, %c1_67, %c0_68, %c0_69] : memref<2x3x2x1x16xf32, #tpu.memory_space<vmem>>, vector<1x1x1x1x16xf32>
    %87 = vector.shape_cast %86 : vector<1x1x1x1x16xf32> to vector<1x16xf32>
    %88 = vector.broadcast %87 : vector<1x16xf32> to vector<16x16xf32>
    %89 = arith.addf %85, %88 : vector<16x16xf32>
    %90 = vector.shape_cast %89 : vector<16x16xf32> to vector<2x8x16xf32>
    %c0_70 = arith.constant 0 : index
    %c1_71 = arith.constant 1 : index
    %c1_72 = arith.constant 1 : index
    %c0_73 = arith.constant 0 : index
    %c0_74 = arith.constant 0 : index
    %91 = vector.load %arg6[%c0_70, %c1_71, %c1_72, %c0_73, %c0_74] : memref<2x3x2x32x16xf32, #tpu.memory_space<vmem>>, vector<1x1x1x32x16xf32>
    %92 = vector.shape_cast %91 : vector<1x1x1x32x16xf32> to vector<32x16xf32>
    %cst_75 = arith.constant dense<0.000000e+00> : vector<16x16xf32>
    %93 = tpu.matmul %31, %92, %cst_75 {dimension_numbers = #tpu.dot_dimension_numbers<[1], [0], [0], [1], [0, 0, 1, 1], [], []>} : vector<16x32xf32>, vector<32x16xf32>, vector<16x16xf32> -> vector<16x16xf32>
    %c0_76 = arith.constant 0 : index
    %c1_77 = arith.constant 1 : index
    %c1_78 = arith.constant 1 : index
    %c0_79 = arith.constant 0 : index
    %c0_80 = arith.constant 0 : index
    %94 = vector.load %arg7[%c0_76, %c1_77, %c1_78, %c0_79, %c0_80] : memref<2x3x2x1x16xf32, #tpu.memory_space<vmem>>, vector<1x1x1x1x16xf32>
    %95 = vector.shape_cast %94 : vector<1x1x1x1x16xf32> to vector<1x16xf32>
    %96 = vector.broadcast %95 : vector<1x16xf32> to vector<16x16xf32>
    %97 = arith.addf %93, %96 : vector<16x16xf32>
    %98 = vector.shape_cast %97 : vector<16x16xf32> to vector<2x8x16xf32>
    %c0_81 = arith.constant 0 : index
    %c2_82 = arith.constant 2 : index
    %c1_83 = arith.constant 1 : index
    %c0_84 = arith.constant 0 : index
    %c0_85 = arith.constant 0 : index
    %99 = vector.load %arg6[%c0_81, %c2_82, %c1_83, %c0_84, %c0_85] : memref<2x3x2x32x16xf32, #tpu.memory_space<vmem>>, vector<1x1x1x32x16xf32>
    %100 = vector.shape_cast %99 : vector<1x1x1x32x16xf32> to vector<32x16xf32>
    %cst_86 = arith.constant dense<0.000000e+00> : vector<16x16xf32>
    %101 = tpu.matmul %31, %100, %cst_86 {dimension_numbers = #tpu.dot_dimension_numbers<[1], [0], [0], [1], [0, 0, 1, 1], [], []>} : vector<16x32xf32>, vector<32x16xf32>, vector<16x16xf32> -> vector<16x16xf32>
    %c0_87 = arith.constant 0 : index
    %c2_88 = arith.constant 2 : index
    %c1_89 = arith.constant 1 : index
    %c0_90 = arith.constant 0 : index
    %c0_91 = arith.constant 0 : index
    %102 = vector.load %arg7[%c0_87, %c2_88, %c1_89, %c0_90, %c0_91] : memref<2x3x2x1x16xf32, #tpu.memory_space<vmem>>, vector<1x1x1x1x16xf32>
    %103 = vector.shape_cast %102 : vector<1x1x1x1x16xf32> to vector<1x16xf32>
    %104 = vector.broadcast %103 : vector<1x16xf32> to vector<16x16xf32>
    %105 = arith.addf %101, %104 : vector<16x16xf32>
    %106 = vector.shape_cast %105 : vector<16x16xf32> to vector<2x8x16xf32>
    "tpu.trace_start"() <{level = 10 : i32, message = "bqd,bkd->bqk"}> : () -> ()
    %cst_92 = arith.constant dense<0.000000e+00> : vector<2x8x8xf32>
    %107 = tpu.matmul %90, %98, %cst_92 {dimension_numbers = #tpu.dot_dimension_numbers<[2], [2], [1], [1], [0, 0, 0, 1, 1, 1], [0], [0]>} : vector<2x8x16xf32>, vector<2x8x16xf32>, vector<2x8x8xf32> -> vector<2x8x8xf32>
    "tpu.trace_stop"() : () -> ()
    %108 = vector.broadcast %38 : vector<2x1x8xf32> to vector<2x8x8xf32>
    %109 = arith.addf %107, %108 : vector<2x8x8xf32>
    %cst_93 = arith.constant dense<0xFF800000> : vector<2x8xf32>
    %110 = vector.multi_reduction <maximumf>, %109, %cst_93 [2] : vector<2x8x8xf32> to vector<2x8xf32>
    %111 = vector.shape_cast %110 : vector<2x8xf32> to vector<2x8x1xf32>
    %112 = vector.broadcast %111 : vector<2x8x1xf32> to vector<2x8x8xf32>
    %113 = arith.subf %109, %112 : vector<2x8x8xf32>
    %114 = math.exp %113 : vector<2x8x8xf32>
    %cst_94 = arith.constant dense<0.000000e+00> : vector<2x8xf32>
    %115 = vector.multi_reduction <add>, %114, %cst_94 [2] : vector<2x8x8xf32> to vector<2x8xf32>
    %116 = vector.shape_cast %115 : vector<2x8xf32> to vector<2x8x1xf32>
    %117 = tpu.reciprocal %116 {approx = true} : vector<2x8x1xf32> -> vector<2x8x1xf32>
    %118 = vector.broadcast %117 : vector<2x8x1xf32> to vector<2x8x8xf32>
    %119 = arith.mulf %114, %118 : vector<2x8x8xf32>
    "tpu.trace_start"() <{level = 10 : i32, message = "bqk,bkd->bqd"}> : () -> ()
    %cst_95 = arith.constant dense<0.000000e+00> : vector<2x8x16xf32>
    %120 = tpu.matmul %119, %106, %cst_95 {dimension_numbers = #tpu.dot_dimension_numbers<[2], [1], [1], [2], [0, 0, 0, 1, 1, 2], [0], [0]>} : vector<2x8x8xf32>, vector<2x8x16xf32>, vector<2x8x16xf32> -> vector<2x8x16xf32>
    "tpu.trace_stop"() : () -> ()
    %121 = vector.shape_cast %120 : vector<2x8x16xf32> to vector<16x16xf32>
    %c0_96 = arith.constant 0 : index
    %c1_97 = arith.constant 1 : index
    %c0_98 = arith.constant 0 : index
    %c0_99 = arith.constant 0 : index
    %122 = vector.load %arg8[%c0_96, %c1_97, %c0_98, %c0_99] : memref<2x2x16x32xf32, #tpu.memory_space<vmem>>, vector<1x1x16x32xf32>
    %123 = vector.shape_cast %122 : vector<1x1x16x32xf32> to vector<16x32xf32>
    %cst_100 = arith.constant dense<0.000000e+00> : vector<16x32xf32>
    %124 = tpu.matmul %121, %123, %cst_100 {dimension_numbers = #tpu.dot_dimension_numbers<[1], [0], [0], [1], [0, 0, 1, 1], [], []>} : vector<16x16xf32>, vector<16x32xf32>, vector<16x32xf32> -> vector<16x32xf32>
    %125 = arith.addf %82, %124 : vector<16x32xf32>
    %c0_101 = arith.constant 0 : index
    %c0_102 = arith.constant 0 : index
    %c0_103 = arith.constant 0 : index
    %126 = vector.load %arg9[%c0_101, %c0_102, %c0_103] : memref<2x1x32xf32, #tpu.memory_space<vmem>>, vector<1x1x32xf32>
    %127 = vector.shape_cast %126 : vector<1x1x32xf32> to vector<1x32xf32>
    %128 = vector.broadcast %127 : vector<1x32xf32> to vector<16x32xf32>
    %129 = arith.addf %125, %128 : vector<16x32xf32>
    %130 = arith.addf %31, %129 : vector<16x32xf32>
    %c0_104 = arith.constant 0 : index
    %c0_105 = arith.constant 0 : index
    %c0_106 = arith.constant 0 : index
    %131 = vector.load %arg10[%c0_104, %c0_105, %c0_106] : memref<2x1x32xf32, #tpu.memory_space<vmem>>, vector<1x1x32xf32>
    %132 = vector.shape_cast %131 : vector<1x1x32xf32> to vector<1x32xf32>
    %c0_107 = arith.constant 0 : index
    %c0_108 = arith.constant 0 : index
    %c0_109 = arith.constant 0 : index
    %133 = vector.load %arg11[%c0_107, %c0_108, %c0_109] : memref<2x1x32xf32, #tpu.memory_space<vmem>>, vector<1x1x32xf32>
    %134 = vector.shape_cast %133 : vector<1x1x32xf32> to vector<1x32xf32>
    %cst_110 = arith.constant dense<0.000000e+00> : vector<16xf32>
    %135 = vector.multi_reduction <add>, %130, %cst_110 [1] : vector<16x32xf32> to vector<16xf32>
    %136 = vector.shape_cast %135 : vector<16xf32> to vector<16x1xf32>
    %cst_111 = arith.constant 3.200000e+01 : f32
    %137 = vector.broadcast %cst_111 : f32 to vector<16x1xf32>
    %138 = arith.divf %136, %137 : vector<16x1xf32>
    %139 = vector.broadcast %138 : vector<16x1xf32> to vector<16x32xf32>
    %140 = arith.subf %130, %139 : vector<16x32xf32>
    %141 = arith.mulf %140, %140 : vector<16x32xf32>
    %cst_112 = arith.constant dense<0.000000e+00> : vector<16xf32>
    %142 = vector.multi_reduction <add>, %141, %cst_112 [1] : vector<16x32xf32> to vector<16xf32>
    %143 = vector.shape_cast %142 : vector<16xf32> to vector<16x1xf32>
    %cst_113 = arith.constant 3.200000e+01 : f32
    %144 = vector.broadcast %cst_113 : f32 to vector<16x1xf32>
    %145 = arith.divf %143, %144 : vector<16x1xf32>
    %cst_114 = arith.constant 9.99999996E-13 : f32
    %146 = vector.broadcast %cst_114 : f32 to vector<16x1xf32>
    %147 = arith.addf %145, %146 : vector<16x1xf32>
    %148 = math.rsqrt %147 : vector<16x1xf32>
    %149 = vector.broadcast %148 : vector<16x1xf32> to vector<16x32xf32>
    %150 = arith.mulf %140, %149 : vector<16x32xf32>
    %151 = vector.broadcast %132 : vector<1x32xf32> to vector<16x32xf32>
    %152 = arith.mulf %150, %151 : vector<16x32xf32>
    %153 = vector.broadcast %134 : vector<1x32xf32> to vector<16x32xf32>
    %154 = arith.addf %152, %153 : vector<16x32xf32>
    %c0_115 = arith.constant 0 : index
    %c0_116 = arith.constant 0 : index
    %c0_117 = arith.constant 0 : index
    %155 = vector.load %arg12[%c0_115, %c0_116, %c0_117] : memref<2x32x64xf32, #tpu.memory_space<vmem>>, vector<1x32x64xf32>
    %156 = vector.shape_cast %155 : vector<1x32x64xf32> to vector<32x64xf32>
    %cst_118 = arith.constant dense<0.000000e+00> : vector<16x64xf32>
    %157 = tpu.matmul %154, %156, %cst_118 {dimension_numbers = #tpu.dot_dimension_numbers<[1], [0], [0], [1], [0, 0, 1, 1], [], []>} : vector<16x32xf32>, vector<32x64xf32>, vector<16x64xf32> -> vector<16x64xf32>
    %c0_119 = arith.constant 0 : index
    %c0_120 = arith.constant 0 : index
    %c0_121 = arith.constant 0 : index
    %158 = vector.load %arg13[%c0_119, %c0_120, %c0_121] : memref<2x1x64xf32, #tpu.memory_space<vmem>>, vector<1x1x64xf32>
    %159 = vector.shape_cast %158 : vector<1x1x64xf32> to vector<1x64xf32>
    %160 = vector.broadcast %159 : vector<1x64xf32> to vector<16x64xf32>
    %161 = arith.addf %157, %160 : vector<16x64xf32>
    %162 = arith.mulf %161, %161 : vector<16x64xf32>
    %163 = arith.mulf %161, %162 : vector<16x64xf32>
    %cst_122 = arith.constant 4.471500e-02 : f32
    %164 = vector.broadcast %cst_122 : f32 to vector<16x64xf32>
    %165 = arith.mulf %164, %163 : vector<16x64xf32>
    %166 = arith.addf %161, %165 : vector<16x64xf32>
    %cst_123 = arith.constant 0.797884583 : f32
    %167 = vector.broadcast %cst_123 : f32 to vector<16x64xf32>
    %168 = arith.mulf %167, %166 : vector<16x64xf32>
    %169 = math.tanh %168 : vector<16x64xf32>
    %cst_124 = arith.constant 1.000000e+00 : f32
    %170 = vector.broadcast %cst_124 : f32 to vector<16x64xf32>
    %171 = arith.addf %170, %169 : vector<16x64xf32>
    %cst_125 = arith.constant 5.000000e-01 : f32
    %172 = vector.broadcast %cst_125 : f32 to vector<16x64xf32>
    %173 = arith.mulf %172, %171 : vector<16x64xf32>
    %174 = arith.mulf %161, %173 : vector<16x64xf32>
    %c0_126 = arith.constant 0 : index
    %c0_127 = arith.constant 0 : index
    %c0_128 = arith.constant 0 : index
    %175 = vector.load %arg14[%c0_126, %c0_127, %c0_128] : memref<2x64x32xf32, #tpu.memory_space<vmem>>, vector<1x64x32xf32>
    %176 = vector.shape_cast %175 : vector<1x64x32xf32> to vector<64x32xf32>
    %cst_129 = arith.constant dense<0.000000e+00> : vector<16x32xf32>
    %177 = tpu.matmul %174, %176, %cst_129 {dimension_numbers = #tpu.dot_dimension_numbers<[1], [0], [0], [1], [0, 0, 1, 1], [], []>} : vector<16x64xf32>, vector<64x32xf32>, vector<16x32xf32> -> vector<16x32xf32>
    %c0_130 = arith.constant 0 : index
    %c0_131 = arith.constant 0 : index
    %c0_132 = arith.constant 0 : index
    %178 = vector.load %arg15[%c0_130, %c0_131, %c0_132] : memref<2x1x32xf32, #tpu.memory_space<vmem>>, vector<1x1x32xf32>
    %179 = vector.shape_cast %178 : vector<1x1x32xf32> to vector<1x32xf32>
    %180 = vector.broadcast %179 : vector<1x32xf32> to vector<16x32xf32>
    %181 = arith.addf %177, %180 : vector<16x32xf32>
    %182 = arith.addf %154, %181 : vector<16x32xf32>
    %c0_133 = arith.constant 0 : index
    %c0_134 = arith.constant 0 : index
    %c0_135 = arith.constant 0 : index
    %183 = vector.load %arg16[%c0_133, %c0_134, %c0_135] : memref<2x1x32xf32, #tpu.memory_space<vmem>>, vector<1x1x32xf32>
    %184 = vector.shape_cast %183 : vector<1x1x32xf32> to vector<1x32xf32>
    %c0_136 = arith.constant 0 : index
    %c0_137 = arith.constant 0 : index
    %c0_138 = arith.constant 0 : index
    %185 = vector.load %arg17[%c0_136, %c0_137, %c0_138] : memref<2x1x32xf32, #tpu.memory_space<vmem>>, vector<1x1x32xf32>
    %186 = vector.shape_cast %185 : vector<1x1x32xf32> to vector<1x32xf32>
    %cst_139 = arith.constant dense<0.000000e+00> : vector<16xf32>
    %187 = vector.multi_reduction <add>, %182, %cst_139 [1] : vector<16x32xf32> to vector<16xf32>
    %188 = vector.shape_cast %187 : vector<16xf32> to vector<16x1xf32>
    %cst_140 = arith.constant 3.200000e+01 : f32
    %189 = vector.broadcast %cst_140 : f32 to vector<16x1xf32>
    %190 = arith.divf %188, %189 : vector<16x1xf32>
    %191 = vector.broadcast %190 : vector<16x1xf32> to vector<16x32xf32>
    %192 = arith.subf %182, %191 : vector<16x32xf32>
    %193 = arith.mulf %192, %192 : vector<16x32xf32>
    %cst_141 = arith.constant dense<0.000000e+00> : vector<16xf32>
    %194 = vector.multi_reduction <add>, %193, %cst_141 [1] : vector<16x32xf32> to vector<16xf32>
    %195 = vector.shape_cast %194 : vector<16xf32> to vector<16x1xf32>
    %cst_142 = arith.constant 3.200000e+01 : f32
    %196 = vector.broadcast %cst_142 : f32 to vector<16x1xf32>
    %197 = arith.divf %195, %196 : vector<16x1xf32>
    %cst_143 = arith.constant 9.99999996E-13 : f32
    %198 = vector.broadcast %cst_143 : f32 to vector<16x1xf32>
    %199 = arith.addf %197, %198 : vector<16x1xf32>
    %200 = math.rsqrt %199 : vector<16x1xf32>
    %201 = vector.broadcast %200 : vector<16x1xf32> to vector<16x32xf32>
    %202 = arith.mulf %192, %201 : vector<16x32xf32>
    %203 = vector.broadcast %184 : vector<1x32xf32> to vector<16x32xf32>
    %204 = arith.mulf %202, %203 : vector<16x32xf32>
    %205 = vector.broadcast %186 : vector<1x32xf32> to vector<16x32xf32>
    %206 = arith.addf %204, %205 : vector<16x32xf32>
    %cst_144 = arith.constant 0.000000e+00 : f32
    %207 = vector.broadcast %cst_144 : f32 to vector<16x32xf32>
    %c1_145 = arith.constant 1 : index
    %c0_146 = arith.constant 0 : index
    %c0_147 = arith.constant 0 : index
    %c0_148 = arith.constant 0 : index
    %c0_149 = arith.constant 0 : index
    %208 = vector.load %arg6[%c1_145, %c0_146, %c0_147, %c0_148, %c0_149] : memref<2x3x2x32x16xf32, #tpu.memory_space<vmem>>, vector<1x1x1x32x16xf32>
    %209 = vector.shape_cast %208 : vector<1x1x1x32x16xf32> to vector<32x16xf32>
    %cst_150 = arith.constant dense<0.000000e+00> : vector<16x16xf32>
    %210 = tpu.matmul %206, %209, %cst_150 {dimension_numbers = #tpu.dot_dimension_numbers<[1], [0], [0], [1], [0, 0, 1, 1], [], []>} : vector<16x32xf32>, vector<32x16xf32>, vector<16x16xf32> -> vector<16x16xf32>
    %c1_151 = arith.constant 1 : index
    %c0_152 = arith.constant 0 : index
    %c0_153 = arith.constant 0 : index
    %c0_154 = arith.constant 0 : index
    %c0_155 = arith.constant 0 : index
    %211 = vector.load %arg7[%c1_151, %c0_152, %c0_153, %c0_154, %c0_155] : memref<2x3x2x1x16xf32, #tpu.memory_space<vmem>>, vector<1x1x1x1x16xf32>
    %212 = vector.shape_cast %211 : vector<1x1x1x1x16xf32> to vector<1x16xf32>
    %213 = vector.broadcast %212 : vector<1x16xf32> to vector<16x16xf32>
    %214 = arith.addf %210, %213 : vector<16x16xf32>
    %215 = vector.shape_cast %214 : vector<16x16xf32> to vector<2x8x16xf32>
    %c1_156 = arith.constant 1 : index
    %c1_157 = arith.constant 1 : index
    %c0_158 = arith.constant 0 : index
    %c0_159 = arith.constant 0 : index
    %c0_160 = arith.constant 0 : index
    %216 = vector.load %arg6[%c1_156, %c1_157, %c0_158, %c0_159, %c0_160] : memref<2x3x2x32x16xf32, #tpu.memory_space<vmem>>, vector<1x1x1x32x16xf32>
    %217 = vector.shape_cast %216 : vector<1x1x1x32x16xf32> to vector<32x16xf32>
    %cst_161 = arith.constant dense<0.000000e+00> : vector<16x16xf32>
    %218 = tpu.matmul %206, %217, %cst_161 {dimension_numbers = #tpu.dot_dimension_numbers<[1], [0], [0], [1], [0, 0, 1, 1], [], []>} : vector<16x32xf32>, vector<32x16xf32>, vector<16x16xf32> -> vector<16x16xf32>
    %c1_162 = arith.constant 1 : index
    %c1_163 = arith.constant 1 : index
    %c0_164 = arith.constant 0 : index
    %c0_165 = arith.constant 0 : index
    %c0_166 = arith.constant 0 : index
    %219 = vector.load %arg7[%c1_162, %c1_163, %c0_164, %c0_165, %c0_166] : memref<2x3x2x1x16xf32, #tpu.memory_space<vmem>>, vector<1x1x1x1x16xf32>
    %220 = vector.shape_cast %219 : vector<1x1x1x1x16xf32> to vector<1x16xf32>
    %221 = vector.broadcast %220 : vector<1x16xf32> to vector<16x16xf32>
    %222 = arith.addf %218, %221 : vector<16x16xf32>
    %223 = vector.shape_cast %222 : vector<16x16xf32> to vector<2x8x16xf32>
    %c1_167 = arith.constant 1 : index
    %c2_168 = arith.constant 2 : index
    %c0_169 = arith.constant 0 : index
    %c0_170 = arith.constant 0 : index
    %c0_171 = arith.constant 0 : index
    %224 = vector.load %arg6[%c1_167, %c2_168, %c0_169, %c0_170, %c0_171] : memref<2x3x2x32x16xf32, #tpu.memory_space<vmem>>, vector<1x1x1x32x16xf32>
    %225 = vector.shape_cast %224 : vector<1x1x1x32x16xf32> to vector<32x16xf32>
    %cst_172 = arith.constant dense<0.000000e+00> : vector<16x16xf32>
    %226 = tpu.matmul %206, %225, %cst_172 {dimension_numbers = #tpu.dot_dimension_numbers<[1], [0], [0], [1], [0, 0, 1, 1], [], []>} : vector<16x32xf32>, vector<32x16xf32>, vector<16x16xf32> -> vector<16x16xf32>
    %c1_173 = arith.constant 1 : index
    %c2_174 = arith.constant 2 : index
    %c0_175 = arith.constant 0 : index
    %c0_176 = arith.constant 0 : index
    %c0_177 = arith.constant 0 : index
    %227 = vector.load %arg7[%c1_173, %c2_174, %c0_175, %c0_176, %c0_177] : memref<2x3x2x1x16xf32, #tpu.memory_space<vmem>>, vector<1x1x1x1x16xf32>
    %228 = vector.shape_cast %227 : vector<1x1x1x1x16xf32> to vector<1x16xf32>
    %229 = vector.broadcast %228 : vector<1x16xf32> to vector<16x16xf32>
    %230 = arith.addf %226, %229 : vector<16x16xf32>
    %231 = vector.shape_cast %230 : vector<16x16xf32> to vector<2x8x16xf32>
    "tpu.trace_start"() <{level = 10 : i32, message = "bqd,bkd->bqk"}> : () -> ()
    %cst_178 = arith.constant dense<0.000000e+00> : vector<2x8x8xf32>
    %232 = tpu.matmul %215, %223, %cst_178 {dimension_numbers = #tpu.dot_dimension_numbers<[2], [2], [1], [1], [0, 0, 0, 1, 1, 1], [0], [0]>} : vector<2x8x16xf32>, vector<2x8x16xf32>, vector<2x8x8xf32> -> vector<2x8x8xf32>
    "tpu.trace_stop"() : () -> ()
    %233 = vector.broadcast %38 : vector<2x1x8xf32> to vector<2x8x8xf32>
    %234 = arith.addf %232, %233 : vector<2x8x8xf32>
    %cst_179 = arith.constant dense<0xFF800000> : vector<2x8xf32>
    %235 = vector.multi_reduction <maximumf>, %234, %cst_179 [2] : vector<2x8x8xf32> to vector<2x8xf32>
    %236 = vector.shape_cast %235 : vector<2x8xf32> to vector<2x8x1xf32>
    %237 = vector.broadcast %236 : vector<2x8x1xf32> to vector<2x8x8xf32>
    %238 = arith.subf %234, %237 : vector<2x8x8xf32>
    %239 = math.exp %238 : vector<2x8x8xf32>
    %cst_180 = arith.constant dense<0.000000e+00> : vector<2x8xf32>
    %240 = vector.multi_reduction <add>, %239, %cst_180 [2] : vector<2x8x8xf32> to vector<2x8xf32>
    %241 = vector.shape_cast %240 : vector<2x8xf32> to vector<2x8x1xf32>
    %242 = tpu.reciprocal %241 {approx = true} : vector<2x8x1xf32> -> vector<2x8x1xf32>
    %243 = vector.broadcast %242 : vector<2x8x1xf32> to vector<2x8x8xf32>
    %244 = arith.mulf %239, %243 : vector<2x8x8xf32>
    "tpu.trace_start"() <{level = 10 : i32, message = "bqk,bkd->bqd"}> : () -> ()
    %cst_181 = arith.constant dense<0.000000e+00> : vector<2x8x16xf32>
    %245 = tpu.matmul %244, %231, %cst_181 {dimension_numbers = #tpu.dot_dimension_numbers<[2], [1], [1], [2], [0, 0, 0, 1, 1, 2], [0], [0]>} : vector<2x8x8xf32>, vector<2x8x16xf32>, vector<2x8x16xf32> -> vector<2x8x16xf32>
    "tpu.trace_stop"() : () -> ()
    %246 = vector.shape_cast %245 : vector<2x8x16xf32> to vector<16x16xf32>
    %c1_182 = arith.constant 1 : index
    %c0_183 = arith.constant 0 : index
    %c0_184 = arith.constant 0 : index
    %c0_185 = arith.constant 0 : index
    %247 = vector.load %arg8[%c1_182, %c0_183, %c0_184, %c0_185] : memref<2x2x16x32xf32, #tpu.memory_space<vmem>>, vector<1x1x16x32xf32>
    %248 = vector.shape_cast %247 : vector<1x1x16x32xf32> to vector<16x32xf32>
    %cst_186 = arith.constant dense<0.000000e+00> : vector<16x32xf32>
    %249 = tpu.matmul %246, %248, %cst_186 {dimension_numbers = #tpu.dot_dimension_numbers<[1], [0], [0], [1], [0, 0, 1, 1], [], []>} : vector<16x16xf32>, vector<16x32xf32>, vector<16x32xf32> -> vector<16x32xf32>
    %250 = arith.addf %207, %249 : vector<16x32xf32>
    %c1_187 = arith.constant 1 : index
    %c0_188 = arith.constant 0 : index
    %c1_189 = arith.constant 1 : index
    %c0_190 = arith.constant 0 : index
    %c0_191 = arith.constant 0 : index
    %251 = vector.load %arg6[%c1_187, %c0_188, %c1_189, %c0_190, %c0_191] : memref<2x3x2x32x16xf32, #tpu.memory_space<vmem>>, vector<1x1x1x32x16xf32>
    %252 = vector.shape_cast %251 : vector<1x1x1x32x16xf32> to vector<32x16xf32>
    %cst_192 = arith.constant dense<0.000000e+00> : vector<16x16xf32>
    %253 = tpu.matmul %206, %252, %cst_192 {dimension_numbers = #tpu.dot_dimension_numbers<[1], [0], [0], [1], [0, 0, 1, 1], [], []>} : vector<16x32xf32>, vector<32x16xf32>, vector<16x16xf32> -> vector<16x16xf32>
    %c1_193 = arith.constant 1 : index
    %c0_194 = arith.constant 0 : index
    %c1_195 = arith.constant 1 : index
    %c0_196 = arith.constant 0 : index
    %c0_197 = arith.constant 0 : index
    %254 = vector.load %arg7[%c1_193, %c0_194, %c1_195, %c0_196, %c0_197] : memref<2x3x2x1x16xf32, #tpu.memory_space<vmem>>, vector<1x1x1x1x16xf32>
    %255 = vector.shape_cast %254 : vector<1x1x1x1x16xf32> to vector<1x16xf32>
    %256 = vector.broadcast %255 : vector<1x16xf32> to vector<16x16xf32>
    %257 = arith.addf %253, %256 : vector<16x16xf32>
    %258 = vector.shape_cast %257 : vector<16x16xf32> to vector<2x8x16xf32>
    %c1_198 = arith.constant 1 : index
    %c1_199 = arith.constant 1 : index
    %c1_200 = arith.constant 1 : index
    %c0_201 = arith.constant 0 : index
    %c0_202 = arith.constant 0 : index
    %259 = vector.load %arg6[%c1_198, %c1_199, %c1_200, %c0_201, %c0_202] : memref<2x3x2x32x16xf32, #tpu.memory_space<vmem>>, vector<1x1x1x32x16xf32>
    %260 = vector.shape_cast %259 : vector<1x1x1x32x16xf32> to vector<32x16xf32>
    %cst_203 = arith.constant dense<0.000000e+00> : vector<16x16xf32>
    %261 = tpu.matmul %206, %260, %cst_203 {dimension_numbers = #tpu.dot_dimension_numbers<[1], [0], [0], [1], [0, 0, 1, 1], [], []>} : vector<16x32xf32>, vector<32x16xf32>, vector<16x16xf32> -> vector<16x16xf32>
    %c1_204 = arith.constant 1 : index
    %c1_205 = arith.constant 1 : index
    %c1_206 = arith.constant 1 : index
    %c0_207 = arith.constant 0 : index
    %c0_208 = arith.constant 0 : index
    %262 = vector.load %arg7[%c1_204, %c1_205, %c1_206, %c0_207, %c0_208] : memref<2x3x2x1x16xf32, #tpu.memory_space<vmem>>, vector<1x1x1x1x16xf32>
    %263 = vector.shape_cast %262 : vector<1x1x1x1x16xf32> to vector<1x16xf32>
    %264 = vector.broadcast %263 : vector<1x16xf32> to vector<16x16xf32>
    %265 = arith.addf %261, %264 : vector<16x16xf32>
    %266 = vector.shape_cast %265 : vector<16x16xf32> to vector<2x8x16xf32>
    %c1_209 = arith.constant 1 : index
    %c2_210 = arith.constant 2 : index
    %c1_211 = arith.constant 1 : index
    %c0_212 = arith.constant 0 : index
    %c0_213 = arith.constant 0 : index
    %267 = vector.load %arg6[%c1_209, %c2_210, %c1_211, %c0_212, %c0_213] : memref<2x3x2x32x16xf32, #tpu.memory_space<vmem>>, vector<1x1x1x32x16xf32>
    %268 = vector.shape_cast %267 : vector<1x1x1x32x16xf32> to vector<32x16xf32>
    %cst_214 = arith.constant dense<0.000000e+00> : vector<16x16xf32>
    %269 = tpu.matmul %206, %268, %cst_214 {dimension_numbers = #tpu.dot_dimension_numbers<[1], [0], [0], [1], [0, 0, 1, 1], [], []>} : vector<16x32xf32>, vector<32x16xf32>, vector<16x16xf32> -> vector<16x16xf32>
    %c1_215 = arith.constant 1 : index
    %c2_216 = arith.constant 2 : index
    %c1_217 = arith.constant 1 : index
    %c0_218 = arith.constant 0 : index
    %c0_219 = arith.constant 0 : index
    %270 = vector.load %arg7[%c1_215, %c2_216, %c1_217, %c0_218, %c0_219] : memref<2x3x2x1x16xf32, #tpu.memory_space<vmem>>, vector<1x1x1x1x16xf32>
    %271 = vector.shape_cast %270 : vector<1x1x1x1x16xf32> to vector<1x16xf32>
    %272 = vector.broadcast %271 : vector<1x16xf32> to vector<16x16xf32>
    %273 = arith.addf %269, %272 : vector<16x16xf32>
    %274 = vector.shape_cast %273 : vector<16x16xf32> to vector<2x8x16xf32>
    "tpu.trace_start"() <{level = 10 : i32, message = "bqd,bkd->bqk"}> : () -> ()
    %cst_220 = arith.constant dense<0.000000e+00> : vector<2x8x8xf32>
    %275 = tpu.matmul %258, %266, %cst_220 {dimension_numbers = #tpu.dot_dimension_numbers<[2], [2], [1], [1], [0, 0, 0, 1, 1, 1], [0], [0]>} : vector<2x8x16xf32>, vector<2x8x16xf32>, vector<2x8x8xf32> -> vector<2x8x8xf32>
    "tpu.trace_stop"() : () -> ()
    %276 = vector.broadcast %38 : vector<2x1x8xf32> to vector<2x8x8xf32>
    %277 = arith.addf %275, %276 : vector<2x8x8xf32>
    %cst_221 = arith.constant dense<0xFF800000> : vector<2x8xf32>
    %278 = vector.multi_reduction <maximumf>, %277, %cst_221 [2] : vector<2x8x8xf32> to vector<2x8xf32>
    %279 = vector.shape_cast %278 : vector<2x8xf32> to vector<2x8x1xf32>
    %280 = vector.broadcast %279 : vector<2x8x1xf32> to vector<2x8x8xf32>
    %281 = arith.subf %277, %280 : vector<2x8x8xf32>
    %282 = math.exp %281 : vector<2x8x8xf32>
    %cst_222 = arith.constant dense<0.000000e+00> : vector<2x8xf32>
    %283 = vector.multi_reduction <add>, %282, %cst_222 [2] : vector<2x8x8xf32> to vector<2x8xf32>
    %284 = vector.shape_cast %283 : vector<2x8xf32> to vector<2x8x1xf32>
    %285 = tpu.reciprocal %284 {approx = true} : vector<2x8x1xf32> -> vector<2x8x1xf32>
    %286 = vector.broadcast %285 : vector<2x8x1xf32> to vector<2x8x8xf32>
    %287 = arith.mulf %282, %286 : vector<2x8x8xf32>
    "tpu.trace_start"() <{level = 10 : i32, message = "bqk,bkd->bqd"}> : () -> ()
    %cst_223 = arith.constant dense<0.000000e+00> : vector<2x8x16xf32>
    %288 = tpu.matmul %287, %274, %cst_223 {dimension_numbers = #tpu.dot_dimension_numbers<[2], [1], [1], [2], [0, 0, 0, 1, 1, 2], [0], [0]>} : vector<2x8x8xf32>, vector<2x8x16xf32>, vector<2x8x16xf32> -> vector<2x8x16xf32>
    "tpu.trace_stop"() : () -> ()
    %289 = vector.shape_cast %288 : vector<2x8x16xf32> to vector<16x16xf32>
    %c1_224 = arith.constant 1 : index
    %c1_225 = arith.constant 1 : index
    %c0_226 = arith.constant 0 : index
    %c0_227 = arith.constant 0 : index
    %290 = vector.load %arg8[%c1_224, %c1_225, %c0_226, %c0_227] : memref<2x2x16x32xf32, #tpu.memory_space<vmem>>, vector<1x1x16x32xf32>
    %291 = vector.shape_cast %290 : vector<1x1x16x32xf32> to vector<16x32xf32>
    %cst_228 = arith.constant dense<0.000000e+00> : vector<16x32xf32>
    %292 = tpu.matmul %289, %291, %cst_228 {dimension_numbers = #tpu.dot_dimension_numbers<[1], [0], [0], [1], [0, 0, 1, 1], [], []>} : vector<16x16xf32>, vector<16x32xf32>, vector<16x32xf32> -> vector<16x32xf32>
    %293 = arith.addf %250, %292 : vector<16x32xf32>
    %c1_229 = arith.constant 1 : index
    %c0_230 = arith.constant 0 : index
    %c0_231 = arith.constant 0 : index
    %294 = vector.load %arg9[%c1_229, %c0_230, %c0_231] : memref<2x1x32xf32, #tpu.memory_space<vmem>>, vector<1x1x32xf32>
    %295 = vector.shape_cast %294 : vector<1x1x32xf32> to vector<1x32xf32>
    %296 = vector.broadcast %295 : vector<1x32xf32> to vector<16x32xf32>
    %297 = arith.addf %293, %296 : vector<16x32xf32>
    %298 = arith.addf %206, %297 : vector<16x32xf32>
    %c1_232 = arith.constant 1 : index
    %c0_233 = arith.constant 0 : index
    %c0_234 = arith.constant 0 : index
    %299 = vector.load %arg10[%c1_232, %c0_233, %c0_234] : memref<2x1x32xf32, #tpu.memory_space<vmem>>, vector<1x1x32xf32>
    %300 = vector.shape_cast %299 : vector<1x1x32xf32> to vector<1x32xf32>
    %c1_235 = arith.constant 1 : index
    %c0_236 = arith.constant 0 : index
    %c0_237 = arith.constant 0 : index
    %301 = vector.load %arg11[%c1_235, %c0_236, %c0_237] : memref<2x1x32xf32, #tpu.memory_space<vmem>>, vector<1x1x32xf32>
    %302 = vector.shape_cast %301 : vector<1x1x32xf32> to vector<1x32xf32>
    %cst_238 = arith.constant dense<0.000000e+00> : vector<16xf32>
    %303 = vector.multi_reduction <add>, %298, %cst_238 [1] : vector<16x32xf32> to vector<16xf32>
    %304 = vector.shape_cast %303 : vector<16xf32> to vector<16x1xf32>
    %cst_239 = arith.constant 3.200000e+01 : f32
    %305 = vector.broadcast %cst_239 : f32 to vector<16x1xf32>
    %306 = arith.divf %304, %305 : vector<16x1xf32>
    %307 = vector.broadcast %306 : vector<16x1xf32> to vector<16x32xf32>
    %308 = arith.subf %298, %307 : vector<16x32xf32>
    %309 = arith.mulf %308, %308 : vector<16x32xf32>
    %cst_240 = arith.constant dense<0.000000e+00> : vector<16xf32>
    %310 = vector.multi_reduction <add>, %309, %cst_240 [1] : vector<16x32xf32> to vector<16xf32>
    %311 = vector.shape_cast %310 : vector<16xf32> to vector<16x1xf32>
    %cst_241 = arith.constant 3.200000e+01 : f32
    %312 = vector.broadcast %cst_241 : f32 to vector<16x1xf32>
    %313 = arith.divf %311, %312 : vector<16x1xf32>
    %cst_242 = arith.constant 9.99999996E-13 : f32
    %314 = vector.broadcast %cst_242 : f32 to vector<16x1xf32>
    %315 = arith.addf %313, %314 : vector<16x1xf32>
    %316 = math.rsqrt %315 : vector<16x1xf32>
    %317 = vector.broadcast %316 : vector<16x1xf32> to vector<16x32xf32>
    %318 = arith.mulf %308, %317 : vector<16x32xf32>
    %319 = vector.broadcast %300 : vector<1x32xf32> to vector<16x32xf32>
    %320 = arith.mulf %318, %319 : vector<16x32xf32>
    %321 = vector.broadcast %302 : vector<1x32xf32> to vector<16x32xf32>
    %322 = arith.addf %320, %321 : vector<16x32xf32>
    %c1_243 = arith.constant 1 : index
    %c0_244 = arith.constant 0 : index
    %c0_245 = arith.constant 0 : index
    %323 = vector.load %arg12[%c1_243, %c0_244, %c0_245] : memref<2x32x64xf32, #tpu.memory_space<vmem>>, vector<1x32x64xf32>
    %324 = vector.shape_cast %323 : vector<1x32x64xf32> to vector<32x64xf32>
    %cst_246 = arith.constant dense<0.000000e+00> : vector<16x64xf32>
    %325 = tpu.matmul %322, %324, %cst_246 {dimension_numbers = #tpu.dot_dimension_numbers<[1], [0], [0], [1], [0, 0, 1, 1], [], []>} : vector<16x32xf32>, vector<32x64xf32>, vector<16x64xf32> -> vector<16x64xf32>
    %c1_247 = arith.constant 1 : index
    %c0_248 = arith.constant 0 : index
    %c0_249 = arith.constant 0 : index
    %326 = vector.load %arg13[%c1_247, %c0_248, %c0_249] : memref<2x1x64xf32, #tpu.memory_space<vmem>>, vector<1x1x64xf32>
    %327 = vector.shape_cast %326 : vector<1x1x64xf32> to vector<1x64xf32>
    %328 = vector.broadcast %327 : vector<1x64xf32> to vector<16x64xf32>
    %329 = arith.addf %325, %328 : vector<16x64xf32>
    %330 = arith.mulf %329, %329 : vector<16x64xf32>
    %331 = arith.mulf %329, %330 : vector<16x64xf32>
    %cst_250 = arith.constant 4.471500e-02 : f32
    %332 = vector.broadcast %cst_250 : f32 to vector<16x64xf32>
    %333 = arith.mulf %332, %331 : vector<16x64xf32>
    %334 = arith.addf %329, %333 : vector<16x64xf32>
    %cst_251 = arith.constant 0.797884583 : f32
    %335 = vector.broadcast %cst_251 : f32 to vector<16x64xf32>
    %336 = arith.mulf %335, %334 : vector<16x64xf32>
    %337 = math.tanh %336 : vector<16x64xf32>
    %cst_252 = arith.constant 1.000000e+00 : f32
    %338 = vector.broadcast %cst_252 : f32 to vector<16x64xf32>
    %339 = arith.addf %338, %337 : vector<16x64xf32>
    %cst_253 = arith.constant 5.000000e-01 : f32
    %340 = vector.broadcast %cst_253 : f32 to vector<16x64xf32>
    %341 = arith.mulf %340, %339 : vector<16x64xf32>
    %342 = arith.mulf %329, %341 : vector<16x64xf32>
    %c1_254 = arith.constant 1 : index
    %c0_255 = arith.constant 0 : index
    %c0_256 = arith.constant 0 : index
    %343 = vector.load %arg14[%c1_254, %c0_255, %c0_256] : memref<2x64x32xf32, #tpu.memory_space<vmem>>, vector<1x64x32xf32>
    %344 = vector.shape_cast %343 : vector<1x64x32xf32> to vector<64x32xf32>
    %cst_257 = arith.constant dense<0.000000e+00> : vector<16x32xf32>
    %345 = tpu.matmul %342, %344, %cst_257 {dimension_numbers = #tpu.dot_dimension_numbers<[1], [0], [0], [1], [0, 0, 1, 1], [], []>} : vector<16x64xf32>, vector<64x32xf32>, vector<16x32xf32> -> vector<16x32xf32>
    %c1_258 = arith.constant 1 : index
    %c0_259 = arith.constant 0 : index
    %c0_260 = arith.constant 0 : index
    %346 = vector.load %arg15[%c1_258, %c0_259, %c0_260] : memref<2x1x32xf32, #tpu.memory_space<vmem>>, vector<1x1x32xf32>
    %347 = vector.shape_cast %346 : vector<1x1x32xf32> to vector<1x32xf32>
    %348 = vector.broadcast %347 : vector<1x32xf32> to vector<16x32xf32>
    %349 = arith.addf %345, %348 : vector<16x32xf32>
    %350 = arith.addf %322, %349 : vector<16x32xf32>
    %c1_261 = arith.constant 1 : index
    %c0_262 = arith.constant 0 : index
    %c0_263 = arith.constant 0 : index
    %351 = vector.load %arg16[%c1_261, %c0_262, %c0_263] : memref<2x1x32xf32, #tpu.memory_space<vmem>>, vector<1x1x32xf32>
    %352 = vector.shape_cast %351 : vector<1x1x32xf32> to vector<1x32xf32>
    %c1_264 = arith.constant 1 : index
    %c0_265 = arith.constant 0 : index
    %c0_266 = arith.constant 0 : index
    %353 = vector.load %arg17[%c1_264, %c0_265, %c0_266] : memref<2x1x32xf32, #tpu.memory_space<vmem>>, vector<1x1x32xf32>
    %354 = vector.shape_cast %353 : vector<1x1x32xf32> to vector<1x32xf32>
    %cst_267 = arith.constant dense<0.000000e+00> : vector<16xf32>
    %355 = vector.multi_reduction <add>, %350, %cst_267 [1] : vector<16x32xf32> to vector<16xf32>
    %356 = vector.shape_cast %355 : vector<16xf32> to vector<16x1xf32>
    %cst_268 = arith.constant 3.200000e+01 : f32
    %357 = vector.broadcast %cst_268 : f32 to vector<16x1xf32>
    %358 = arith.divf %356, %357 : vector<16x1xf32>
    %359 = vector.broadcast %358 : vector<16x1xf32> to vector<16x32xf32>
    %360 = arith.subf %350, %359 : vector<16x32xf32>
    %361 = arith.mulf %360, %360 : vector<16x32xf32>
    %cst_269 = arith.constant dense<0.000000e+00> : vector<16xf32>
    %362 = vector.multi_reduction <add>, %361, %cst_269 [1] : vector<16x32xf32> to vector<16xf32>
    %363 = vector.shape_cast %362 : vector<16xf32> to vector<16x1xf32>
    %cst_270 = arith.constant 3.200000e+01 : f32
    %364 = vector.broadcast %cst_270 : f32 to vector<16x1xf32>
    %365 = arith.divf %363, %364 : vector<16x1xf32>
    %cst_271 = arith.constant 9.99999996E-13 : f32
    %366 = vector.broadcast %cst_271 : f32 to vector<16x1xf32>
    %367 = arith.addf %365, %366 : vector<16x1xf32>
    %368 = math.rsqrt %367 : vector<16x1xf32>
    %369 = vector.broadcast %368 : vector<16x1xf32> to vector<16x32xf32>
    %370 = arith.mulf %360, %369 : vector<16x32xf32>
    %371 = vector.broadcast %352 : vector<1x32xf32> to vector<16x32xf32>
    %372 = arith.mulf %370, %371 : vector<16x32xf32>
    %373 = vector.broadcast %354 : vector<1x32xf32> to vector<16x32xf32>
    %374 = arith.addf %372, %373 : vector<16x32xf32>
    %375 = vector.shape_cast %374 : vector<16x32xf32> to vector<2x8x32xf32>
    %376 = vector.extract_strided_slice %375 {offsets = [0, 0, 0], sizes = [2, 1, 32], strides = [1, 1, 1]} : vector<2x8x32xf32> to vector<2x1x32xf32>
    %377 = vector.shape_cast %376 : vector<2x1x32xf32> to vector<2x32xf32>
    %c0_272 = arith.constant 0 : index
    %c0_273 = arith.constant 0 : index
    %378 = vector.load %arg18[%c0_272, %c0_273] : memref<32x32xf32, #tpu.memory_space<vmem>>, vector<32x32xf32>
    %cst_274 = arith.constant dense<0.000000e+00> : vector<2x32xf32>
    %379 = tpu.matmul %377, %378, %cst_274 {dimension_numbers = #tpu.dot_dimension_numbers<[1], [0], [0], [1], [0, 0, 1, 1], [], []>} : vector<2x32xf32>, vector<32x32xf32>, vector<2x32xf32> -> vector<2x32xf32>
    %c0_275 = arith.constant 0 : index
    %c0_276 = arith.constant 0 : index
    %380 = vector.load %arg19[%c0_275, %c0_276] : memref<1x32xf32, #tpu.memory_space<vmem>>, vector<1x32xf32>
    %381 = vector.broadcast %380 : vector<1x32xf32> to vector<2x32xf32>
    %382 = arith.addf %379, %381 : vector<2x32xf32>
    %383 = math.tanh %382 : vector<2x32xf32>
    %c0_277 = arith.constant 0 : index
    %c0_278 = arith.constant 0 : index
    %384 = vector.load %arg20[%c0_277, %c0_278] : memref<32x128xf32, #tpu.memory_space<vmem>>, vector<32x128xf32>
    %cst_279 = arith.constant dense<0.000000e+00> : vector<2x128xf32>
    %385 = tpu.matmul %383, %384, %cst_279 {dimension_numbers = #tpu.dot_dimension_numbers<[1], [0], [0], [1], [0, 0, 1, 1], [], []>} : vector<2x32xf32>, vector<32x128xf32>, vector<2x128xf32> -> vector<2x128xf32>
    %c0_280 = arith.constant 0 : index
    %c0_281 = arith.constant 0 : index
    %386 = vector.load %arg21[%c0_280, %c0_281] : memref<1x128xf32, #tpu.memory_space<vmem>>, vector<1x128xf32>
    %387 = vector.broadcast %386 : vector<1x128xf32> to vector<2x128xf32>
    %388 = arith.addf %385, %387 : vector<2x128xf32>
    %389 = arith.negf %388 : vector<2x128xf32>
    %390 = math.exp %389 : vector<2x128xf32>
    %cst_282 = arith.constant 1.000000e+00 : f32
    %391 = vector.broadcast %cst_282 : f32 to vector<2x128xf32>
    %392 = arith.addf %391, %390 : vector<2x128xf32>
    %393 = arith.divf %391, %392 : vector<2x128xf32>
    %c0_283 = arith.constant 0 : index
    %c0_284 = arith.constant 0 : index
    %394 = vector.load %arg22[%c0_283, %c0_284] : memref<2x128xf32, #tpu.memory_space<vmem>>, vector<2x128xf32>
    tpu.vector_store %arg22[%c0_283, %c0_284], %393 {strides = array<i32>} : memref<2x128xf32, #tpu.memory_space<vmem>>, vector<2x128xf32>,
    return
  }
}

</mosaic_0001>

<llo_original>
// kernel: bert_forward.1
$region0: #{bert_forward.1}
  #allocation0 [shape = 'u32[]', space=smem, size = 0x4, offset = 0x4, fixed_abs, tag = 'smem constant byte address 0x4 - core index']
  #allocation1 [shape = 'u32[144,128]{1,0:T(1,128)}', space=vmem, size = 0x12000, scoped, tag = 'internal scratch']
  %s0 = inlined_call_operand.vmem [shape: s32[16,1], index: 0, kind: input, shape index: {}]
  %s1 = inlined_call_operand.vmem [shape: s32[2,8], index: 1, kind: input, shape index: {}]
  %s2 = inlined_call_operand.vmem [shape: f32[128,32], index: 2, kind: input, shape index: {}]
  %s3 = inlined_call_operand.vmem [shape: f32[16,32], index: 3, kind: input, shape index: {}]
  %s4 = inlined_call_operand.vmem [shape: f32[1,32], index: 4, kind: input, shape index: {}]
  %s5 = inlined_call_operand.vmem [shape: f32[1,32], index: 5, kind: input, shape index: {}]
  %s6 = inlined_call_operand.vmem [shape: f32[2,3,2,32,16], index: 6, kind: input, shape index: {}]
  %s7 = inlined_call_operand.vmem [shape: f32[2,3,2,1,16], index: 7, kind: input, shape index: {}]
  %s8 = inlined_call_operand.vmem [shape: f32[2,2,16,32], index: 8, kind: input, shape index: {}]
  %s9 = inlined_call_operand.vmem [shape: f32[2,1,32], index: 9, kind: input, shape index: {}]
  %s10 = inlined_call_operand.vmem [shape: f32[2,1,32], index: 10, kind: input, shape index: {}]
  %s11 = inlined_call_operand.vmem [shape: f32[2,1,32], index: 11, kind: input, shape index: {}]
  %s12 = inlined_call_operand.vmem [shape: f32[2,32,64], index: 12, kind: input, shape index: {}]
  %s13 = inlined_call_operand.vmem [shape: f32[2,1,64], index: 13, kind: input, shape index: {}]
  %s14 = inlined_call_operand.vmem [shape: f32[2,64,32], index: 14, kind: input, shape index: {}]
  %s15 = inlined_call_operand.vmem [shape: f32[2,1,32], index: 15, kind: input, shape index: {}]
  %s16 = inlined_call_operand.vmem [shape: f32[2,1,32], index: 16, kind: input, shape index: {}]
  %s17 = inlined_call_operand.vmem [shape: f32[2,1,32], index: 17, kind: input, shape index: {}]
  %s18 = inlined_call_operand.vmem [shape: f32[32,32], index: 18, kind: input, shape index: {}]
  %s19 = inlined_call_operand.vmem [shape: f32[1,32], index: 19, kind: input, shape index: {}]
  %s20 = inlined_call_operand.vmem [shape: f32[32,128], index: 20, kind: input, shape index: {}]
  %s21 = inlined_call_operand.vmem [shape: f32[1,128], index: 21, kind: input, shape index: {}]
  %s22 = inlined_call_operand.hbm [shape: f32[2,128], index: 22, kind: output, shape index: {}]
  %s23 = sld [smem:[#allocation0]]
  $region98: #{bert_forward.1} parent=0
    _
  %s25 = ssub.s32 1, %s23
  %s26 = scalar_select 0, %s25, %s23
  $region1: #{bert_forward.1} parent=0
    #allocation2 [shape = 'u8[1024]{0}', space=vmem, size = 0x400, scoped, tag = 'output window, operand 0, single buffered']
    #allocation3 [shape = 's32[1]{0}', space=sflag, size = 0x4, scoped, tag = 'scoped memory for bert_forward.1']
    %27 = vsyncpa [#allocation3], 0
    // Predicated region
    $region2: #{bert_forward.1} parent=1 // pred_check
      _
    $region3: #{bert_forward.1} parent=1 // pred_check_branch
      %29 = sbr.rel (0) target = $region5
    $region4: #{bert_forward.1} parent=1 // pred_region
      _
    $region5: #{bert_forward.1} parent=1 // pred_fallthru
      _
    // Predicated region
    $region6: #{bert_forward.1} parent=1 // pred_check
      _
    $region7: #{bert_forward.1} parent=1 // pred_check_branch
      %31 = sbr.rel (0) target = $region9
    $region8: #{bert_forward.1} parent=1 // pred_region
      _
    $region9: #{bert_forward.1} parent=1 // pred_fallthru
      _
    // Predicated region
    $region10: #{bert_forward.1} parent=1 // pred_check
      _
    $region11: #{bert_forward.1} parent=1 // pred_check_branch
      %33 = sbr.rel (0) target = $region13
    $region12: #{bert_forward.1} parent=1 // pred_region
      _
    $region13: #{bert_forward.1} parent=1 // pred_fallthru
      _
    // Predicated region
    $region14: #{bert_forward.1} parent=1 // pred_check
      _
    $region15: #{bert_forward.1} parent=1 // pred_check_branch
      %35 = sbr.rel (0) target = $region17
    $region16: #{bert_forward.1} parent=1 // pred_region
      _
    $region17: #{bert_forward.1} parent=1 // pred_fallthru
      _
    // Predicated region
    $region18: #{bert_forward.1} parent=1 // pred_check
      _
    $region19: #{bert_forward.1} parent=1 // pred_check_branch
      %37 = sbr.rel (0) target = $region21
    $region20: #{bert_forward.1} parent=1 // pred_region
      _
    $region21: #{bert_forward.1} parent=1 // pred_fallthru
      _
    // Predicated region
    $region22: #{bert_forward.1} parent=1 // pred_check
      _
    $region23: #{bert_forward.1} parent=1 // pred_check_branch
      %39 = sbr.rel (0) target = $region25
    $region24: #{bert_forward.1} parent=1 // pred_region
      _
    $region25: #{bert_forward.1} parent=1 // pred_fallthru
      _
    // Predicated region
    $region26: #{bert_forward.1} parent=1 // pred_check
      _
    $region27: #{bert_forward.1} parent=1 // pred_check_branch
      %41 = sbr.rel (0) target = $region29
    $region28: #{bert_forward.1} parent=1 // pred_region
      _
    $region29: #{bert_forward.1} parent=1 // pred_fallthru
      _
    // Predicated region
    $region30: #{bert_forward.1} parent=1 // pred_check
      _
    $region31: #{bert_forward.1} parent=1 // pred_check_branch
      %43 = sbr.rel (0) target = $region33
    $region32: #{bert_forward.1} parent=1 // pred_region
      _
    $region33: #{bert_forward.1} parent=1 // pred_fallthru
      _
    // Predicated region
    $region34: #{bert_forward.1} parent=1 // pred_check
      _
    $region35: #{bert_forward.1} parent=1 // pred_check_branch
      %45 = sbr.rel (0) target = $region37
    $region36: #{bert_forward.1} parent=1 // pred_region
      _
    $region37: #{bert_forward.1} parent=1 // pred_fallthru
      _
    // Predicated region
    $region38: #{bert_forward.1} parent=1 // pred_check
      _
    $region39: #{bert_forward.1} parent=1 // pred_check_branch
      %47 = sbr.rel (0) target = $region41
    $region40: #{bert_forward.1} parent=1 // pred_region
      _
    $region41: #{bert_forward.1} parent=1 // pred_fallthru
      _
    // Predicated region
    $region42: #{bert_forward.1} parent=1 // pred_check
      _
    $region43: #{bert_forward.1} parent=1 // pred_check_branch
      %49 = sbr.rel (0) target = $region45
    $region44: #{bert_forward.1} parent=1 // pred_region
      _
    $region45: #{bert_forward.1} parent=1 // pred_fallthru
      _
    // Predicated region
    $region46: #{bert_forward.1} parent=1 // pred_check
      _
    $region47: #{bert_forward.1} parent=1 // pred_check_branch
      %51 = sbr.rel (0) target = $region49
    $region48: #{bert_forward.1} parent=1 // pred_region
      _
    $region49: #{bert_forward.1} parent=1 // pred_fallthru
      _
    // Predicated region
    $region50: #{bert_forward.1} parent=1 // pred_check
      _
    $region51: #{bert_forward.1} parent=1 // pred_check_branch
      %53 = sbr.rel (0) target = $region53
    $region52: #{bert_forward.1} parent=1 // pred_region
      _
    $region53: #{bert_forward.1} parent=1 // pred_fallthru
      _
    // Predicated region
    $region54: #{bert_forward.1} parent=1 // pred_check
      _
    $region55: #{bert_forward.1} parent=1 // pred_check_branch
      %55 = sbr.rel (0) target = $region57
    $region56: #{bert_forward.1} parent=1 // pred_region
      _
    $region57: #{bert_forward.1} parent=1 // pred_fallthru
      _
    // Predicated region
    $region58: #{bert_forward.1} parent=1 // pred_check
      _
    $region59: #{bert_forward.1} parent=1 // pred_check_branch
      %57 = sbr.rel (0) target = $region61
    $region60: #{bert_forward.1} parent=1 // pred_region
      _
    $region61: #{bert_forward.1} parent=1 // pred_fallthru
      _
    // Predicated region
    $region62: #{bert_forward.1} parent=1 // pred_check
      _
    $region63: #{bert_forward.1} parent=1 // pred_check_branch
      %59 = sbr.rel (0) target = $region65
    $region64: #{bert_forward.1} parent=1 // pred_region
      _
    $region65: #{bert_forward.1} parent=1 // pred_fallthru
      _
    // Predicated region
    $region66: #{bert_forward.1} parent=1 // pred_check
      _
    $region67: #{bert_forward.1} parent=1 // pred_check_branch
      %61 = sbr.rel (0) target = $region69
    $region68: #{bert_forward.1} parent=1 // pred_region
      _
    $region69: #{bert_forward.1} parent=1 // pred_fallthru
      _
    // Predicated region
    $region70: #{bert_forward.1} parent=1 // pred_check
      _
    $region71: #{bert_forward.1} parent=1 // pred_check_branch
      %63 = sbr.rel (0) target = $region73
    $region72: #{bert_forward.1} parent=1 // pred_region
      _
    $region73: #{bert_forward.1} parent=1 // pred_fallthru
      _
    // Predicated region
    $region74: #{bert_forward.1} parent=1 // pred_check
      _
    $region75: #{bert_forward.1} parent=1 // pred_check_branch
      %65 = sbr.rel (0) target = $region77
    $region76: #{bert_forward.1} parent=1 // pred_region
      _
    $region77: #{bert_forward.1} parent=1 // pred_fallthru
      _
    // Predicated region
    $region78: #{bert_forward.1} parent=1 // pred_check
      _
    $region79: #{bert_forward.1} parent=1 // pred_check_branch
      %67 = sbr.rel (0) target = $region81
    $region80: #{bert_forward.1} parent=1 // pred_region
      _
    $region81: #{bert_forward.1} parent=1 // pred_fallthru
      _
    // Predicated region
    $region82: #{bert_forward.1} parent=1 // pred_check
      _
    $region83: #{bert_forward.1} parent=1 // pred_check_branch
      %69 = sbr.rel (0) target = $region85
    $region84: #{bert_forward.1} parent=1 // pred_region
      _
    $region85: #{bert_forward.1} parent=1 // pred_fallthru
      _
    // Predicated region
    $region86: #{bert_forward.1} parent=1 // pred_check
      _
    $region87: #{bert_forward.1} parent=1 // pred_check_branch
      %71 = sbr.rel (0) target = $region89
    $region88: #{bert_forward.1} parent=1 // pred_region
      _
    $region89: #{bert_forward.1} parent=1 // pred_fallthru
      _
    %v72 = vld [vmem:[%s0] sm:$0xff]
    %v73 = vld [vmem:[%s0 + $0x8] sm:$0xff]
    %v74 = vlaneseq
    %v75 = vand.u32 %v74, 127
    %76 = vset.pattern.permute.xlu0 0
    %77 = vperm.xlu0 %76, %v72
    %v78 = vpop.permute.xlu0 %77
    %79 = vset.pattern.permute.xlu0 0
    %80 = vperm.xlu0 %79, %v73
    %v81 = vpop.permute.xlu0 %80
    %vm82 = vcmp.eq.s32.totalorder %v78, %v75
    %vm83 = vcmp.eq.s32.totalorder %v81, %v75
    %v84 = vsel %vm82, 1, 0
    %v85 = vsel %vm83, 1, 0
    %v86 = vcvt.s32.f32 %v84
    %v87 = vcvt.s32.f32 %v85
    %v88 = vld [vmem:[%s2] sm:$0xff]
    %v89 = vld [vmem:[%s2 + $0x8] sm:$0xff]
    %v90 = vld [vmem:[%s2 + $0x10] sm:$0xff]
    %v91 = vld [vmem:[%s2 + $0x18] sm:$0xff]
    %v92 = vld [vmem:[%s2 + $0x20] sm:$0xff]
    %v93 = vld [vmem:[%s2 + $0x28] sm:$0xff]
    %v94 = vld [vmem:[%s2 + $0x30] sm:$0xff]
    %v95 = vld [vmem:[%s2 + $0x38] sm:$0xff]
    %v96 = vld [vmem:[%s2 + $0x40] sm:$0xff]
    %v97 = vld [vmem:[%s2 + $0x48] sm:$0xff]
    %v98 = vld [vmem:[%s2 + $0x50] sm:$0xff]
    %v99 = vld [vmem:[%s2 + $0x58] sm:$0xff]
    %v100 = vld [vmem:[%s2 + $0x60] sm:$0xff]
    %v101 = vld [vmem:[%s2 + $0x68] sm:$0xff]
    %v102 = vld [vmem:[%s2 + $0x70] sm:$0xff]
    %v103 = vld [vmem:[%s2 + $0x78] sm:$0xff]
    %v104 = vld [vmem:[%s3] sm:$0xff]
    %v105 = vld [vmem:[%s3 + $0x8] sm:$0xff]
    %106 = vmatprep.subr.mxu0 0.0
    %107 = vmatpush1.msra.mxu0 %v88
    %108 = vmatprep.subr.mxu0 0.0
    %109 = vmatpush1.msra.mxu0 %v89
    %110 = vmatprep.subr.mxu0 0.0
    %111 = vmatpush1.msra.mxu0 %v90
    %112 = vmatprep.subr.mxu0 0.0
    %113 = vmatpush1.msra.mxu0 %v91
    %114 = vmatprep.subr.mxu0 0.0
    %115 = vmatpush1.msra.mxu0 %v92
    %116 = vmatprep.subr.mxu0 0.0
    %117 = vmatpush1.msra.mxu0 %v93
    %118 = vmatprep.subr.mxu0 0.0
    %119 = vmatpush1.msra.mxu0 %v94
    %120 = vmatprep.subr.mxu0 0.0
    %121 = vmatpush1.msra.mxu0 %v95
    %122 = vmatprep.subr.mxu0 0.0
    %123 = vmatpush1.msra.mxu0 %v96
    %124 = vmatprep.subr.mxu0 0.0
    %125 = vmatpush1.msra.mxu0 %v97
    %126 = vmatprep.subr.mxu0 0.0
    %127 = vmatpush1.msra.mxu0 %v98
    %128 = vmatprep.subr.mxu0 0.0
    %129 = vmatpush1.msra.mxu0 %v99
    %130 = vmatprep.subr.mxu0 0.0
    %131 = vmatpush1.msra.mxu0 %v100
    %132 = vmatprep.subr.mxu0 0.0
    %133 = vmatpush1.msra.mxu0 %v101
    %134 = vmatprep.subr.mxu0 0.0
    %135 = vmatpush1.msra.mxu0 %v102
    %136 = vmatprep.subr.mxu0 0.0
    %137 = vmatpush1.msra.mxu0 %v103
    %138 = vmatprep.subr.mxu0 0.0
    %139 = vmatpush1.msra.mxu0 0.0
    %140 = vmatprep.subr.mxu0 0.0
    %141 = vmatpush1.msra.mxu0 0.0
    %142 = vmatprep.subr.mxu0 0.0
    %143 = vmatpush1.msra.mxu0 0.0
    %144 = vmatprep.subr.mxu0 0.0
    %145 = vmatpush1.msra.mxu0 0.0
    %146 = vmatprep.subr.mxu0 0.0
    %147 = vmatpush1.msra.mxu0 0.0
    %148 = vmatprep.subr.mxu0 0.0
    %149 = vmatpush1.msra.mxu0 0.0
    %150 = vmatprep.subr.mxu0 0.0
    %151 = vmatpush1.msra.mxu0 0.0
    %152 = vmatprep.subr.mxu0 0.0
    %153 = vmatpush1.msra.mxu0 0.0
    %154 = vmatprep.subr.mxu0 0.0
    %155 = vmatpush1.msra.mxu0 0.0
    %156 = vmatprep.subr.mxu0 0.0
    %157 = vmatpush1.msra.mxu0 0.0
    %158 = vmatprep.subr.mxu0 0.0
    %159 = vmatpush1.msra.mxu0 0.0
    %160 = vmatprep.subr.mxu0 0.0
    %161 = vmatpush1.msra.mxu0 0.0
    %162 = vmatprep.subr.mxu0 0.0
    %163 = vmatpush1.msra.mxu0 0.0
    %164 = vmatprep.subr.mxu0 0.0
    %165 = vmatpush1.msra.mxu0 0.0
    %166 = vmatprep.subr.mxu0 0.0
    %167 = vmatpush1.msra.mxu0 0.0
    %168 = vmatprep.subr.mxu0 0.0
    %169 = vmatpush1.msra.mxu0 0.0
    %170 = vmatprep.mubr.f32.mxu0 0.0
    %171 = vmatmul.mubr.f32.gmra.mrb[0].mxu0 %v86
    %v172 = vpop.f32.mrb[0].mxu0
    %v173 = vadd.f32 %v104, %v172
    %v174 = vpop.f32.mrb[0].mxu0
    %175 = vmatprep.mubr.f32.mxu0 0.0
    %176 = vmatmul.mubr.f32.gmra.mrb[0].mxu0 %v87
    %v177 = vpop.f32.mrb[0].mxu0
    %v178 = vadd.f32 %v105, %v177
    %v179 = vpop.f32.mrb[0].mxu0
    %180 = vdwg.mxu0
    %v181 = vld [vmem:[%s4] sm:$0x1]
    %v182 = vld [vmem:[%s5] sm:$0x1]
    %vm183 = vcmask 261120
    %v184 = vsel %vm183, %v173, 0.0
    %185 = vadd.xlane.f32.xlu0 %v184
    %v186 = vpop.xlane.xlu0 %185
    %v187 = vsel %vm183, %v178, 0.0
    %188 = vadd.xlane.f32.xlu0 %v187
    %v189 = vpop.xlane.xlu0 %188
    %v190 = vrcp.pop 32.0
    %v191 = vmul.f32 %v186, %v190
    %v192 = vmul.f32 %v189, %v190
    %v193 = vsub.f32 %v173, %v191
    %v194 = vsub.f32 %v178, %v192
    %v195 = vmul.f32 %v193, %v193
    %v196 = vmul.f32 %v194, %v194
    %v197 = vsel %vm183, %v195, 0.0
    %198 = vadd.xlane.f32.xlu0 %v197
    %v199 = vpop.xlane.xlu0 %198
    %v200 = vsel %vm183, %v196, 0.0
    %201 = vadd.xlane.f32.xlu0 %v200
    %v202 = vpop.xlane.xlu0 %201
    %v203 = vmul.f32 %v199, %v190
    %v204 = vmul.f32 %v202, %v190
    %v205 = vadd.f32 %v203, 1e-12
    %v206 = vadd.f32 %v204, 1e-12
    %v207 = vrsqrt.pop %v205
    %v208 = vrsqrt.pop %v206
    %v209 = vmul.f32 %v193, %v207
    %v210 = vmul.f32 %v194, %v208
    %v212 = vlaneseq
    %v213 = vshrl.u32 %v212, 7
    %v214 = vsub.s32 0, %v213
    %v215 = vrot.slane %v181, %v214
    %v217 = vmul.f32 %v209, %v215
    %v218 = vmul.f32 %v210, %v215
    %v220 = vlaneseq
    %v221 = vshrl.u32 %v220, 7
    %v222 = vsub.s32 0, %v221
    %v223 = vrot.slane %v182, %v222
    %v225 = vadd.f32 %v217, %v223
    %v226 = vadd.f32 %v218, %v223
    %v227 = vld [vmem:[%s1] sm:$0x3]
    %v228 = vcvt.s32.f32 %v227
    %v229 = vsub.f32 1.0, %v228
    %v230 = vmul.f32 %v229, -1e+09
    %v233 = vunpack.c.l.s4 1966171168
    %v234 = vunpack.c.0.s8 %v233
    %v235 = vlaneseq
    %v236 = vshrl.u32 %v235, 7
    %v237 = vsub.s32 %v234, %v236
    %v238 = vrot.slane %v230, %v237
    %v239 = vcombine.high %v238, %v238
    %v241 = vunpack.c.l.s4 1966171168
    %v242 = vunpack.c.0.s8 %v241
    %v243 = vlaneseq
    %v244 = vshrl.u32 %v243, 7
    %v245 = vsub.s32 %v242, %v244
    %v246 = vrot.slane %v238, %v245
    %v248 = vunpack.c.l.s4 1966171168
    %v249 = vunpack.c.0.s8 %v248
    %v250 = vlaneseq
    %v251 = vshrl.u32 %v250, 7
    %v252 = vsub.s32 %v249, %v251
    %v253 = vrot.slane %v239, %v252
    %v254 = vld [vmem:[%s6] sm:$0xff]
    %v255 = vld [vmem:[%s6 + $0x8] sm:$0xff]
    %v256 = vld [vmem:[%s6 + $0x10] sm:$0xff]
    %v257 = vld [vmem:[%s6 + $0x18] sm:$0xff]
    %v258 = vld [vmem:[%s7] sm:$0x1]
    %v260 = vlaneseq
    %v261 = vshrl.u32 %v260, 7
    %v262 = vsub.s32 0, %v261
    %v263 = vrot.slane %v258, %v262
    %v266 = vsel %vm183, %v225, 0
    %v269 = vsel %vm183, %v226, 0
    %271 = vmatprep.subr.mxu0 0.0
    %272 = vmatpush1.msra.mxu0 %v254
    %273 = vmatprep.subr.mxu0 0.0
    %274 = vmatpush1.msra.mxu0 %v255
    %275 = vmatprep.subr.mxu0 0.0
    %276 = vmatpush1.msra.mxu0 %v256
    %277 = vmatprep.subr.mxu0 0.0
    %278 = vmatpush1.msra.mxu0 %v257
    %279 = vmatprep.subr.mxu0 0.0
    %280 = vmatpush1.msra.mxu0 0.0
    %281 = vmatprep.subr.mxu0 0.0
    %282 = vmatpush1.msra.mxu0 0.0
    %283 = vmatprep.subr.mxu0 0.0
    %284 = vmatpush1.msra.mxu0 0.0
    %285 = vmatprep.subr.mxu0 0.0
    %286 = vmatpush1.msra.mxu0 0.0
    %287 = vmatprep.subr.mxu0 0.0
    %288 = vmatpush1.msra.mxu0 0.0
    %289 = vmatprep.subr.mxu0 0.0
    %290 = vmatpush1.msra.mxu0 0.0
    %291 = vmatprep.subr.mxu0 0.0
    %292 = vmatpush1.msra.mxu0 0.0
    %293 = vmatprep.subr.mxu0 0.0
    %294 = vmatpush1.msra.mxu0 0.0
    %295 = vmatprep.subr.mxu0 0.0
    %296 = vmatpush1.msra.mxu0 0.0
    %297 = vmatprep.subr.mxu0 0.0
    %298 = vmatpush1.msra.mxu0 0.0
    %299 = vmatprep.subr.mxu0 0.0
    %300 = vmatpush1.msra.mxu0 0.0
    %301 = vmatprep.subr.mxu0 0.0
    %302 = vmatpush1.msra.mxu0 0.0
    %303 = vmatprep.subr.mxu0 0.0
    %304 = vmatpush1.msra.mxu0 0.0
    %305 = vmatprep.subr.mxu0 0.0
    %306 = vmatpush1.msra.mxu0 0.0
    %307 = vmatprep.subr.mxu0 0.0
    %308 = vmatpush1.msra.mxu0 0.0
    %309 = vmatprep.subr.mxu0 0.0
    %310 = vmatpush1.msra.mxu0 0.0
    %311 = vmatprep.subr.mxu0 0.0
    %312 = vmatpush1.msra.mxu0 0.0
    %313 = vmatprep.subr.mxu0 0.0
    %314 = vmatpush1.msra.mxu0 0.0
    %315 = vmatprep.subr.mxu0 0.0
    %316 = vmatpush1.msra.mxu0 0.0
    %317 = vmatprep.subr.mxu0 0.0
    %318 = vmatpush1.msra.mxu0 0.0
    %319 = vmatprep.subr.mxu0 0.0
    %320 = vmatpush1.msra.mxu0 0.0
    %321 = vmatprep.subr.mxu0 0.0
    %322 = vmatpush1.msra.mxu0 0.0
    %323 = vmatprep.subr.mxu0 0.0
    %324 = vmatpush1.msra.mxu0 0.0
    %325 = vmatprep.subr.mxu0 0.0
    %326 = vmatpush1.msra.mxu0 0.0
    %327 = vmatprep.subr.mxu0 0.0
    %328 = vmatpush1.msra.mxu0 0.0
    %329 = vmatprep.subr.mxu0 0.0
    %330 = vmatpush1.msra.mxu0 0.0
    %331 = vmatprep.subr.mxu0 0.0
    %332 = vmatpush1.msra.mxu0 0.0
    %333 = vmatprep.subr.mxu0 0.0
    %334 = vmatpush1.msra.mxu0 0.0
    %335 = vmatprep.mubr.f32.mxu0 0.0
    %336 = vmatmul.mubr.f32.gmra.mrb[0].mxu0 %v266
    %v337 = vpop.f32.mrb[0].mxu0
    %v338 = vadd.f32 %v263, %v337
    %v339 = vpop.f32.mrb[0].mxu0
    %340 = vmatprep.mubr.f32.mxu0 0.0
    %341 = vmatmul.mubr.f32.gmra.mrb[0].mxu0 %v269
    %v342 = vpop.f32.mrb[0].mxu0
    %v343 = vadd.f32 %v263, %v342
    %v344 = vpop.f32.mrb[0].mxu0
    %345 = vdwg.mxu0
    %s346 = scalar_lea.vmem %s6, 64
    %v347 = vld [vmem:[%s346] sm:$0xff]
    %v348 = vld [vmem:[%s346 + $0x8] sm:$0xff]
    %v349 = vld [vmem:[%s346 + $0x10] sm:$0xff]
    %v350 = vld [vmem:[%s346 + $0x18] sm:$0xff]
    %s351 = scalar_lea.vmem %s7, 2
    %v352 = vld [vmem:[%s351] sm:$0x1]
    %v354 = vlaneseq
    %v355 = vshrl.u32 %v354, 7
    %v356 = vsub.s32 0, %v355
    %v357 = vrot.slane %v352, %v356
    %359 = vmatprep.subr.mxu0 0.0
    %360 = vmatpush1.msra.mxu0 %v347
    %361 = vmatprep.subr.mxu0 0.0
    %362 = vmatpush1.msra.mxu0 %v348
    %363 = vmatprep.subr.mxu0 0.0
    %364 = vmatpush1.msra.mxu0 %v349
    %365 = vmatprep.subr.mxu0 0.0
    %366 = vmatpush1.msra.mxu0 %v350
    %367 = vmatprep.subr.mxu0 0.0
    %368 = vmatpush1.msra.mxu0 0.0
    %369 = vmatprep.subr.mxu0 0.0
    %370 = vmatpush1.msra.mxu0 0.0
    %371 = vmatprep.subr.mxu0 0.0
    %372 = vmatpush1.msra.mxu0 0.0
    %373 = vmatprep.subr.mxu0 0.0
    %374 = vmatpush1.msra.mxu0 0.0
    %375 = vmatprep.subr.mxu0 0.0
    %376 = vmatpush1.msra.mxu0 0.0
    %377 = vmatprep.subr.mxu0 0.0
    %378 = vmatpush1.msra.mxu0 0.0
    %379 = vmatprep.subr.mxu0 0.0
    %380 = vmatpush1.msra.mxu0 0.0
    %381 = vmatprep.subr.mxu0 0.0
    %382 = vmatpush1.msra.mxu0 0.0
    %383 = vmatprep.subr.mxu0 0.0
    %384 = vmatpush1.msra.mxu0 0.0
    %385 = vmatprep.subr.mxu0 0.0
    %386 = vmatpush1.msra.mxu0 0.0
    %387 = vmatprep.subr.mxu0 0.0
    %388 = vmatpush1.msra.mxu0 0.0
    %389 = vmatprep.subr.mxu0 0.0
    %390 = vmatpush1.msra.mxu0 0.0
    %391 = vmatprep.subr.mxu0 0.0
    %392 = vmatpush1.msra.mxu0 0.0
    %393 = vmatprep.subr.mxu0 0.0
    %394 = vmatpush1.msra.mxu0 0.0
    %395 = vmatprep.subr.mxu0 0.0
    %396 = vmatpush1.msra.mxu0 0.0
    %397 = vmatprep.subr.mxu0 0.0
    %398 = vmatpush1.msra.mxu0 0.0
    %399 = vmatprep.subr.mxu0 0.0
    %400 = vmatpush1.msra.mxu0 0.0
    %401 = vmatprep.subr.mxu0 0.0
    %402 = vmatpush1.msra.mxu0 0.0
    %403 = vmatprep.subr.mxu0 0.0
    %404 = vmatpush1.msra.mxu0 0.0
    %405 = vmatprep.subr.mxu0 0.0
    %406 = vmatpush1.msra.mxu0 0.0
    %407 = vmatprep.subr.mxu0 0.0
    %408 = vmatpush1.msra.mxu0 0.0
    %409 = vmatprep.subr.mxu0 0.0
    %410 = vmatpush1.msra.mxu0 0.0
    %411 = vmatprep.subr.mxu0 0.0
    %412 = vmatpush1.msra.mxu0 0.0
    %413 = vmatprep.subr.mxu0 0.0
    %414 = vmatpush1.msra.mxu0 0.0
    %415 = vmatprep.subr.mxu0 0.0
    %416 = vmatpush1.msra.mxu0 0.0
    %417 = vmatprep.subr.mxu0 0.0
    %418 = vmatpush1.msra.mxu0 0.0
    %419 = vmatprep.subr.mxu0 0.0
    %420 = vmatpush1.msra.mxu0 0.0
    %421 = vmatprep.subr.mxu0 0.0
    %422 = vmatpush1.msra.mxu0 0.0
    %423 = vmatprep.mubr.f32.mxu0 0.0
    %424 = vmatmul.mubr.f32.gmra.mrb[0].mxu0 %v266
    %v425 = vpop.f32.mrb[0].mxu0
    %v426 = vadd.f32 %v357, %v425
    %v427 = vpop.f32.mrb[0].mxu0
    %428 = vmatprep.mubr.f32.mxu0 0.0
    %429 = vmatmul.mubr.f32.gmra.mrb[0].mxu0 %v269
    %v430 = vpop.f32.mrb[0].mxu0
    %v431 = vadd.f32 %v357, %v430
    %v432 = vpop.f32.mrb[0].mxu0
    %433 = vdwg.mxu0
    %s434 = scalar_lea.vmem %s6, 128
    %v435 = vld [vmem:[%s434] sm:$0xff]
    %v436 = vld [vmem:[%s434 + $0x8] sm:$0xff]
    %v437 = vld [vmem:[%s434 + $0x10] sm:$0xff]
    %v438 = vld [vmem:[%s434 + $0x18] sm:$0xff]
    %s439 = scalar_lea.vmem %s7, 4
    %v440 = vld [vmem:[%s439] sm:$0x1]
    %v442 = vlaneseq
    %v443 = vshrl.u32 %v442, 7
    %v444 = vsub.s32 0, %v443
    %v445 = vrot.slane %v440, %v444
    %447 = vmatprep.subr.mxu0 0.0
    %448 = vmatpush1.msra.mxu0 %v435
    %449 = vmatprep.subr.mxu0 0.0
    %450 = vmatpush1.msra.mxu0 %v436
    %451 = vmatprep.subr.mxu0 0.0
    %452 = vmatpush1.msra.mxu0 %v437
    %453 = vmatprep.subr.mxu0 0.0
    %454 = vmatpush1.msra.mxu0 %v438
    %455 = vmatprep.subr.mxu0 0.0
    %456 = vmatpush1.msra.mxu0 0.0
    %457 = vmatprep.subr.mxu0 0.0
    %458 = vmatpush1.msra.mxu0 0.0
    %459 = vmatprep.subr.mxu0 0.0
    %460 = vmatpush1.msra.mxu0 0.0
    %461 = vmatprep.subr.mxu0 0.0
    %462 = vmatpush1.msra.mxu0 0.0
    %463 = vmatprep.subr.mxu0 0.0
    %464 = vmatpush1.msra.mxu0 0.0
    %465 = vmatprep.subr.mxu0 0.0
    %466 = vmatpush1.msra.mxu0 0.0
    %467 = vmatprep.subr.mxu0 0.0
    %468 = vmatpush1.msra.mxu0 0.0
    %469 = vmatprep.subr.mxu0 0.0
    %470 = vmatpush1.msra.mxu0 0.0
    %471 = vmatprep.subr.mxu0 0.0
    %472 = vmatpush1.msra.mxu0 0.0
    %473 = vmatprep.subr.mxu0 0.0
    %474 = vmatpush1.msra.mxu0 0.0
    %475 = vmatprep.subr.mxu0 0.0
    %476 = vmatpush1.msra.mxu0 0.0
    %477 = vmatprep.subr.mxu0 0.0
    %478 = vmatpush1.msra.mxu0 0.0
    %479 = vmatprep.subr.mxu0 0.0
    %480 = vmatpush1.msra.mxu0 0.0
    %481 = vmatprep.subr.mxu0 0.0
    %482 = vmatpush1.msra.mxu0 0.0
    %483 = vmatprep.subr.mxu0 0.0
    %484 = vmatpush1.msra.mxu0 0.0
    %485 = vmatprep.subr.mxu0 0.0
    %486 = vmatpush1.msra.mxu0 0.0
    %487 = vmatprep.subr.mxu0 0.0
    %488 = vmatpush1.msra.mxu0 0.0
    %489 = vmatprep.subr.mxu0 0.0
    %490 = vmatpush1.msra.mxu0 0.0
    %491 = vmatprep.subr.mxu0 0.0
    %492 = vmatpush1.msra.mxu0 0.0
    %493 = vmatprep.subr.mxu0 0.0
    %494 = vmatpush1.msra.mxu0 0.0
    %495 = vmatprep.subr.mxu0 0.0
    %496 = vmatpush1.msra.mxu0 0.0
    %497 = vmatprep.subr.mxu0 0.0
    %498 = vmatpush1.msra.mxu0 0.0
    %499 = vmatprep.subr.mxu0 0.0
    %500 = vmatpush1.msra.mxu0 0.0
    %501 = vmatprep.subr.mxu0 0.0
    %502 = vmatpush1.msra.mxu0 0.0
    %503 = vmatprep.subr.mxu0 0.0
    %504 = vmatpush1.msra.mxu0 0.0
    %505 = vmatprep.subr.mxu0 0.0
    %506 = vmatpush1.msra.mxu0 0.0
    %507 = vmatprep.subr.mxu0 0.0
    %508 = vmatpush1.msra.mxu0 0.0
    %509 = vmatprep.subr.mxu0 0.0
    %510 = vmatpush1.msra.mxu0 0.0
    %511 = vmatprep.mubr.f32.mxu0 0.0
    %512 = vmatmul.mubr.f32.gmra.mrb[0].mxu0 %v266
    %v513 = vpop.f32.mrb[0].mxu0
    %v514 = vadd.f32 %v445, %v513
    %v515 = vpop.f32.mrb[0].mxu0
    %516 = vmatprep.mubr.f32.mxu0 0.0
    %517 = vmatmul.mubr.f32.gmra.mrb[0].mxu0 %v269
    %v518 = vpop.f32.mrb[0].mxu0
    %v519 = vadd.f32 %v445, %v518
    %v520 = vpop.f32.mrb[0].mxu0
    %521 = vdwg.mxu0
    %v522 = vlaneseq
    %v523 = vshrl.u32 %v522, 7
    %v524 = vsub.s32 0, %v523
    %v525 = vrot.slane %v246, %v524
    %v526 = vlaneseq
    %v527 = vshrl.u32 %v526, 7
    %v528 = vsub.s32 0, %v527
    %v529 = vrot.slane %v253, %v528
    %vm532 = vcmask 130048
    %v534 = vsel %vm532, %v338, 0
    %v537 = vsel %vm532, %v426, 0
    %539 = vmatprep.subr.mxu0 0.0
    %540 = vmatpush1.xpose.msra.mxu0 %v537
    %541 = vmatprep.subr.mxu0 0.0
    %542 = vmatpush1.xpose.msra.mxu0 0.0
    %543 = vmatprep.subr.mxu0 0.0
    %544 = vmatpush1.xpose.msra.mxu0 0.0
    %545 = vmatprep.subr.mxu0 0.0
    %546 = vmatpush1.xpose.msra.mxu0 0.0
    %547 = vmatprep.subr.mxu0 0.0
    %548 = vmatpush1.xpose.msra.mxu0 0.0
    %549 = vmatprep.subr.mxu0 0.0
    %550 = vmatpush1.xpose.msra.mxu0 0.0
    %551 = vmatprep.subr.mxu0 0.0
    %552 = vmatpush1.xpose.msra.mxu0 0.0
    %553 = vmatprep.subr.mxu0 0.0
    %554 = vmatpush1.xpose.msra.mxu0 0.0
    %555 = vmatprep.subr.mxu0 0.0
    %556 = vmatpush1.xpose.msra.mxu0 0.0
    %557 = vmatprep.subr.mxu0 0.0
    %558 = vmatpush1.xpose.msra.mxu0 0.0
    %559 = vmatprep.subr.mxu0 0.0
    %560 = vmatpush1.xpose.msra.mxu0 0.0
    %561 = vmatprep.subr.mxu0 0.0
    %562 = vmatpush1.xpose.msra.mxu0 0.0
    %563 = vmatprep.subr.mxu0 0.0
    %564 = vmatpush1.xpose.msra.mxu0 0.0
    %565 = vmatprep.subr.mxu0 0.0
    %566 = vmatpush1.xpose.msra.mxu0 0.0
    %567 = vmatprep.subr.mxu0 0.0
    %568 = vmatpush1.xpose.msra.mxu0 0.0
    %569 = vmatprep.subr.mxu0 0.0
    %570 = vmatpush1.xpose.msra.mxu0 0.0
    %571 = vmatprep.subr.mxu0 0.0
    %572 = vmatpush1.xpose.msra.mxu0 0.0
    %573 = vmatprep.subr.mxu0 0.0
    %574 = vmatpush1.xpose.msra.mxu0 0.0
    %575 = vmatprep.subr.mxu0 0.0
    %576 = vmatpush1.xpose.msra.mxu0 0.0
    %577 = vmatprep.subr.mxu0 0.0
    %578 = vmatpush1.xpose.msra.mxu0 0.0
    %579 = vmatprep.subr.mxu0 0.0
    %580 = vmatpush1.xpose.msra.mxu0 0.0
    %581 = vmatprep.subr.mxu0 0.0
    %582 = vmatpush1.xpose.msra.mxu0 0.0
    %583 = vmatprep.subr.mxu0 0.0
    %584 = vmatpush1.xpose.msra.mxu0 0.0
    %585 = vmatprep.subr.mxu0 0.0
    %586 = vmatpush1.xpose.msra.mxu0 0.0
    %587 = vmatprep.subr.mxu0 0.0
    %588 = vmatpush1.xpose.msra.mxu0 0.0
    %589 = vmatprep.subr.mxu0 0.0
    %590 = vmatpush1.xpose.msra.mxu0 0.0
    %591 = vmatprep.subr.mxu0 0.0
    %592 = vmatpush1.xpose.msra.mxu0 0.0
    %593 = vmatprep.subr.mxu0 0.0
    %594 = vmatpush1.xpose.msra.mxu0 0.0
    %595 = vmatprep.subr.mxu0 0.0
    %596 = vmatpush1.xpose.msra.mxu0 0.0
    %597 = vmatprep.subr.mxu0 0.0
    %598 = vmatpush1.xpose.msra.mxu0 0.0
    %599 = vmatprep.subr.mxu0 0.0
    %600 = vmatpush1.xpose.msra.mxu0 0.0
    %601 = vmatprep.subr.mxu0 0.0
    %602 = vmatpush1.xpose.msra.mxu0 0.0
    %603 = vmatprep.mubr.f32.mxu0 0.0
    %604 = vmatmul.mubr.f32.gmra.mrb[0].mxu0 %v534
    %v605 = vpop.f32.mrb[0].mxu0
    %v606 = vadd.f32 %v525, %v605
    %v607 = vpop.f32.mrb[0].mxu0
    %608 = vdwg.mxu0
    %v610 = vsel %vm532, %v343, 0
    %v613 = vsel %vm532, %v431, 0
    %615 = vmatprep.subr.mxu0 0.0
    %616 = vmatpush1.xpose.msra.mxu0 %v613
    %617 = vmatprep.subr.mxu0 0.0
    %618 = vmatpush1.xpose.msra.mxu0 0.0
    %619 = vmatprep.subr.mxu0 0.0
    %620 = vmatpush1.xpose.msra.mxu0 0.0
    %621 = vmatprep.subr.mxu0 0.0
    %622 = vmatpush1.xpose.msra.mxu0 0.0
    %623 = vmatprep.subr.mxu0 0.0
    %624 = vmatpush1.xpose.msra.mxu0 0.0
    %625 = vmatprep.subr.mxu0 0.0
    %626 = vmatpush1.xpose.msra.mxu0 0.0
    %627 = vmatprep.subr.mxu0 0.0
    %628 = vmatpush1.xpose.msra.mxu0 0.0
    %629 = vmatprep.subr.mxu0 0.0
    %630 = vmatpush1.xpose.msra.mxu0 0.0
    %631 = vmatprep.subr.mxu0 0.0
    %632 = vmatpush1.xpose.msra.mxu0 0.0
    %633 = vmatprep.subr.mxu0 0.0
    %634 = vmatpush1.xpose.msra.mxu0 0.0
    %635 = vmatprep.subr.mxu0 0.0
    %636 = vmatpush1.xpose.msra.mxu0 0.0
    %637 = vmatprep.subr.mxu0 0.0
    %638 = vmatpush1.xpose.msra.mxu0 0.0
    %639 = vmatprep.subr.mxu0 0.0
    %640 = vmatpush1.xpose.msra.mxu0 0.0
    %641 = vmatprep.subr.mxu0 0.0
    %642 = vmatpush1.xpose.msra.mxu0 0.0
    %643 = vmatprep.subr.mxu0 0.0
    %644 = vmatpush1.xpose.msra.mxu0 0.0
    %645 = vmatprep.subr.mxu0 0.0
    %646 = vmatpush1.xpose.msra.mxu0 0.0
    %647 = vmatprep.subr.mxu0 0.0
    %648 = vmatpush1.xpose.msra.mxu0 0.0
    %649 = vmatprep.subr.mxu0 0.0
    %650 = vmatpush1.xpose.msra.mxu0 0.0
    %651 = vmatprep.subr.mxu0 0.0
    %652 = vmatpush1.xpose.msra.mxu0 0.0
    %653 = vmatprep.subr.mxu0 0.0
    %654 = vmatpush1.xpose.msra.mxu0 0.0
    %655 = vmatprep.subr.mxu0 0.0
    %656 = vmatpush1.xpose.msra.mxu0 0.0
    %657 = vmatprep.subr.mxu0 0.0
    %658 = vmatpush1.xpose.msra.mxu0 0.0
    %659 = vmatprep.subr.mxu0 0.0
    %660 = vmatpush1.xpose.msra.mxu0 0.0
    %661 = vmatprep.subr.mxu0 0.0
    %662 = vmatpush1.xpose.msra.mxu0 0.0
    %663 = vmatprep.subr.mxu0 0.0
    %664 = vmatpush1.xpose.msra.mxu0 0.0
    %665 = vmatprep.subr.mxu0 0.0
    %666 = vmatpush1.xpose.msra.mxu0 0.0
    %667 = vmatprep.subr.mxu0 0.0
    %668 = vmatpush1.xpose.msra.mxu0 0.0
    %669 = vmatprep.subr.mxu0 0.0
    %670 = vmatpush1.xpose.msra.mxu0 0.0
    %671 = vmatprep.subr.mxu0 0.0
    %672 = vmatpush1.xpose.msra.mxu0 0.0
    %673 = vmatprep.subr.mxu0 0.0
    %674 = vmatpush1.xpose.msra.mxu0 0.0
    %675 = vmatprep.subr.mxu0 0.0
    %676 = vmatpush1.xpose.msra.mxu0 0.0
    %677 = vmatprep.subr.mxu0 0.0
    %678 = vmatpush1.xpose.msra.mxu0 0.0
    %679 = vmatprep.mubr.f32.mxu0 0.0
    %680 = vmatmul.mubr.f32.gmra.mrb[0].mxu0 %v610
    %v681 = vpop.f32.mrb[0].mxu0
    %v682 = vadd.f32 %v529, %v681
    %v683 = vpop.f32.mrb[0].mxu0
    %684 = vdwg.mxu0
    %vm685 = vcmask 64512
    %v686 = vsel %vm685, %v606, -inf
    %687 = vmax.xlane.f32.xlu0 %v686
    %v688 = vpop.xlane.xlu0 %687
    %v689 = vsel %vm685, %v682, -inf
    %690 = vmax.xlane.f32.xlu0 %v689
    %v691 = vpop.xlane.xlu0 %690
    %v692 = vsub.f32 %v606, %v688
    %v693 = vsub.f32 %v682, %v691
    %v694 = vmul.f32 %v692, 1.442695
    %v695 = vpow.pop %v694
    %v696 = vmul.f32 %v693, 1.442695
    %v697 = vpow.pop %v696
    %v698 = vsel %vm685, %v695, 0.0
    %699 = vadd.xlane.f32.xlu0 %v698
    %v700 = vpop.xlane.xlu0 %699
    %v701 = vsel %vm685, %v697, 0.0
    %702 = vadd.xlane.f32.xlu0 %v701
    %v703 = vpop.xlane.xlu0 %702
    %v704 = vrcp.pop %v700
    %v705 = vrcp.pop %v703
    %v706 = vmul.f32 %v695, %v704
    %v707 = vmul.f32 %v697, %v705
    %v709 = vsel %vm685, %v706, 0
    %711 = vmatprep.subr.mxu0 0.0
    %712 = vmatpush1.msra.mxu0 %v514
    %713 = vmatprep.subr.mxu0 0.0
    %714 = vmatpush1.msra.mxu0 0.0
    %715 = vmatprep.subr.mxu0 0.0
    %716 = vmatpush1.msra.mxu0 0.0
    %717 = vmatprep.subr.mxu0 0.0
    %718 = vmatpush1.msra.mxu0 0.0
    %719 = vmatprep.subr.mxu0 0.0
    %720 = vmatpush1.msra.mxu0 0.0
    %721 = vmatprep.subr.mxu0 0.0
    %722 = vmatpush1.msra.mxu0 0.0
    %723 = vmatprep.subr.mxu0 0.0
    %724 = vmatpush1.msra.mxu0 0.0
    %725 = vmatprep.subr.mxu0 0.0
    %726 = vmatpush1.msra.mxu0 0.0
    %727 = vmatprep.subr.mxu0 0.0
    %728 = vmatpush1.msra.mxu0 0.0
    %729 = vmatprep.subr.mxu0 0.0
    %730 = vmatpush1.msra.mxu0 0.0
    %731 = vmatprep.subr.mxu0 0.0
    %732 = vmatpush1.msra.mxu0 0.0
    %733 = vmatprep.subr.mxu0 0.0
    %734 = vmatpush1.msra.mxu0 0.0
    %735 = vmatprep.subr.mxu0 0.0
    %736 = vmatpush1.msra.mxu0 0.0
    %737 = vmatprep.subr.mxu0 0.0
    %738 = vmatpush1.msra.mxu0 0.0
    %739 = vmatprep.subr.mxu0 0.0
    %740 = vmatpush1.msra.mxu0 0.0
    %741 = vmatprep.subr.mxu0 0.0
    %742 = vmatpush1.msra.mxu0 0.0
    %743 = vmatprep.subr.mxu0 0.0
    %744 = vmatpush1.msra.mxu0 0.0
    %745 = vmatprep.subr.mxu0 0.0
    %746 = vmatpush1.msra.mxu0 0.0
    %747 = vmatprep.subr.mxu0 0.0
    %748 = vmatpush1.msra.mxu0 0.0
    %749 = vmatprep.subr.mxu0 0.0
    %750 = vmatpush1.msra.mxu0 0.0
    %751 = vmatprep.subr.mxu0 0.0
    %752 = vmatpush1.msra.mxu0 0.0
    %753 = vmatprep.subr.mxu0 0.0
    %754 = vmatpush1.msra.mxu0 0.0
    %755 = vmatprep.subr.mxu0 0.0
    %756 = vmatpush1.msra.mxu0 0.0
    %757 = vmatprep.subr.mxu0 0.0
    %758 = vmatpush1.msra.mxu0 0.0
    %759 = vmatprep.subr.mxu0 0.0
    %760 = vmatpush1.msra.mxu0 0.0
    %761 = vmatprep.subr.mxu0 0.0
    %762 = vmatpush1.msra.mxu0 0.0
    %763 = vmatprep.subr.mxu0 0.0
    %764 = vmatpush1.msra.mxu0 0.0
    %765 = vmatprep.subr.mxu0 0.0
    %766 = vmatpush1.msra.mxu0 0.0
    %767 = vmatprep.subr.mxu0 0.0
    %768 = vmatpush1.msra.mxu0 0.0
    %769 = vmatprep.subr.mxu0 0.0
    %770 = vmatpush1.msra.mxu0 0.0
    %771 = vmatprep.subr.mxu0 0.0
    %772 = vmatpush1.msra.mxu0 0.0
    %773 = vmatprep.subr.mxu0 0.0
    %774 = vmatpush1.msra.mxu0 0.0
    %775 = vmatprep.mubr.f32.mxu0 0.0
    %776 = vmatmul.mubr.f32.gmra.mrb[0].mxu0 %v709
    %v777 = vpop.f32.mrb[0].mxu0
    %v778 = vadd.f32 0.0, %v777
    %v779 = vpop.f32.mrb[0].mxu0
    %780 = vdwg.mxu0
    %v782 = vsel %vm685, %v707, 0
    %784 = vmatprep.subr.mxu0 0.0
    %785 = vmatpush1.msra.mxu0 %v519
    %786 = vmatprep.subr.mxu0 0.0
    %787 = vmatpush1.msra.mxu0 0.0
    %788 = vmatprep.subr.mxu0 0.0
    %789 = vmatpush1.msra.mxu0 0.0
    %790 = vmatprep.subr.mxu0 0.0
    %791 = vmatpush1.msra.mxu0 0.0
    %792 = vmatprep.subr.mxu0 0.0
    %793 = vmatpush1.msra.mxu0 0.0
    %794 = vmatprep.subr.mxu0 0.0
    %795 = vmatpush1.msra.mxu0 0.0
    %796 = vmatprep.subr.mxu0 0.0
    %797 = vmatpush1.msra.mxu0 0.0
    %798 = vmatprep.subr.mxu0 0.0
    %799 = vmatpush1.msra.mxu0 0.0
    %800 = vmatprep.subr.mxu0 0.0
    %801 = vmatpush1.msra.mxu0 0.0
    %802 = vmatprep.subr.mxu0 0.0
    %803 = vmatpush1.msra.mxu0 0.0
    %804 = vmatprep.subr.mxu0 0.0
    %805 = vmatpush1.msra.mxu0 0.0
    %806 = vmatprep.subr.mxu0 0.0
    %807 = vmatpush1.msra.mxu0 0.0
    %808 = vmatprep.subr.mxu0 0.0
    %809 = vmatpush1.msra.mxu0 0.0
    %810 = vmatprep.subr.mxu0 0.0
    %811 = vmatpush1.msra.mxu0 0.0
    %812 = vmatprep.subr.mxu0 0.0
    %813 = vmatpush1.msra.mxu0 0.0
    %814 = vmatprep.subr.mxu0 0.0
    %815 = vmatpush1.msra.mxu0 0.0
    %816 = vmatprep.subr.mxu0 0.0
    %817 = vmatpush1.msra.mxu0 0.0
    %818 = vmatprep.subr.mxu0 0.0
    %819 = vmatpush1.msra.mxu0 0.0
    %820 = vmatprep.subr.mxu0 0.0
    %821 = vmatpush1.msra.mxu0 0.0
    %822 = vmatprep.subr.mxu0 0.0
    %823 = vmatpush1.msra.mxu0 0.0
    %824 = vmatprep.subr.mxu0 0.0
    %825 = vmatpush1.msra.mxu0 0.0
    %826 = vmatprep.subr.mxu0 0.0
    %827 = vmatpush1.msra.mxu0 0.0
    %828 = vmatprep.subr.mxu0 0.0
    %829 = vmatpush1.msra.mxu0 0.0
    %830 = vmatprep.subr.mxu0 0.0
    %831 = vmatpush1.msra.mxu0 0.0
    %832 = vmatprep.subr.mxu0 0.0
    %833 = vmatpush1.msra.mxu0 0.0
    %834 = vmatprep.subr.mxu0 0.0
    %835 = vmatpush1.msra.mxu0 0.0
    %836 = vmatprep.subr.mxu0 0.0
    %837 = vmatpush1.msra.mxu0 0.0
    %838 = vmatprep.subr.mxu0 0.0
    %839 = vmatpush1.msra.mxu0 0.0
    %840 = vmatprep.subr.mxu0 0.0
    %841 = vmatpush1.msra.mxu0 0.0
    %842 = vmatprep.subr.mxu0 0.0
    %843 = vmatpush1.msra.mxu0 0.0
    %844 = vmatprep.subr.mxu0 0.0
    %845 = vmatpush1.msra.mxu0 0.0
    %846 = vmatprep.subr.mxu0 0.0
    %847 = vmatpush1.msra.mxu0 0.0
    %848 = vmatprep.mubr.f32.mxu0 0.0
    %849 = vmatmul.mubr.f32.gmra.mrb[0].mxu0 %v782
    %v850 = vpop.f32.mrb[0].mxu0
    %v851 = vadd.f32 0.0, %v850
    %v852 = vpop.f32.mrb[0].mxu0
    %853 = vdwg.mxu0
    %v854 = vld [vmem:[%s8] sm:$0xff]
    %v855 = vld [vmem:[%s8 + $0x8] sm:$0xff]
    %s856 = scalar_lea.vmem %s6, 32
    %v857 = vld [vmem:[%s856] sm:$0xff]
    %v858 = vld [vmem:[%s856 + $0x8] sm:$0xff]
    %v859 = vld [vmem:[%s856 + $0x10] sm:$0xff]
    %v860 = vld [vmem:[%s856 + $0x18] sm:$0xff]
    %s861 = scalar_lea.vmem %s7, 1
    %v862 = vld [vmem:[%s861] sm:$0x1]
    %v864 = vlaneseq
    %v865 = vshrl.u32 %v864, 7
    %v866 = vsub.s32 0, %v865
    %v867 = vrot.slane %v862, %v866
    %869 = vmatprep.subr.mxu0 0.0
    %870 = vmatpush1.msra.mxu0 %v857
    %871 = vmatprep.subr.mxu0 0.0
    %872 = vmatpush1.msra.mxu0 %v858
    %873 = vmatprep.subr.mxu0 0.0
    %874 = vmatpush1.msra.mxu0 %v859
    %875 = vmatprep.subr.mxu0 0.0
    %876 = vmatpush1.msra.mxu0 %v860
    %877 = vmatprep.subr.mxu0 0.0
    %878 = vmatpush1.msra.mxu0 0.0
    %879 = vmatprep.subr.mxu0 0.0
    %880 = vmatpush1.msra.mxu0 0.0
    %881 = vmatprep.subr.mxu0 0.0
    %882 = vmatpush1.msra.mxu0 0.0
    %883 = vmatprep.subr.mxu0 0.0
    %884 = vmatpush1.msra.mxu0 0.0
    %885 = vmatprep.subr.mxu0 0.0
    %886 = vmatpush1.msra.mxu0 0.0
    %887 = vmatprep.subr.mxu0 0.0
    %888 = vmatpush1.msra.mxu0 0.0
    %889 = vmatprep.subr.mxu0 0.0
    %890 = vmatpush1.msra.mxu0 0.0
    %891 = vmatprep.subr.mxu0 0.0
    %892 = vmatpush1.msra.mxu0 0.0
    %893 = vmatprep.subr.mxu0 0.0
    %894 = vmatpush1.msra.mxu0 0.0
    %895 = vmatprep.subr.mxu0 0.0
    %896 = vmatpush1.msra.mxu0 0.0
    %897 = vmatprep.subr.mxu0 0.0
    %898 = vmatpush1.msra.mxu0 0.0
    %899 = vmatprep.subr.mxu0 0.0
    %900 = vmatpush1.msra.mxu0 0.0
    %901 = vmatprep.subr.mxu0 0.0
    %902 = vmatpush1.msra.mxu0 0.0
    %903 = vmatprep.subr.mxu0 0.0
    %904 = vmatpush1.msra.mxu0 0.0
    %905 = vmatprep.subr.mxu0 0.0
    %906 = vmatpush1.msra.mxu0 0.0
    %907 = vmatprep.subr.mxu0 0.0
    %908 = vmatpush1.msra.mxu0 0.0
    %909 = vmatprep.subr.mxu0 0.0
    %910 = vmatpush1.msra.mxu0 0.0
    %911 = vmatprep.subr.mxu0 0.0
    %912 = vmatpush1.msra.mxu0 0.0
    %913 = vmatprep.subr.mxu0 0.0
    %914 = vmatpush1.msra.mxu0 0.0
    %915 = vmatprep.subr.mxu0 0.0
    %916 = vmatpush1.msra.mxu0 0.0
    %917 = vmatprep.subr.mxu0 0.0
    %918 = vmatpush1.msra.mxu0 0.0
    %919 = vmatprep.subr.mxu0 0.0
    %920 = vmatpush1.msra.mxu0 0.0
    %921 = vmatprep.subr.mxu0 0.0
    %922 = vmatpush1.msra.mxu0 0.0
    %923 = vmatprep.subr.mxu0 0.0
    %924 = vmatpush1.msra.mxu0 0.0
    %925 = vmatprep.subr.mxu0 0.0
    %926 = vmatpush1.msra.mxu0 0.0
    %927 = vmatprep.subr.mxu0 0.0
    %928 = vmatpush1.msra.mxu0 0.0
    %929 = vmatprep.subr.mxu0 0.0
    %930 = vmatpush1.msra.mxu0 0.0
    %931 = vmatprep.subr.mxu0 0.0
    %932 = vmatpush1.msra.mxu0 0.0
    %933 = vmatprep.mubr.f32.mxu0 0.0
    %934 = vmatmul.mubr.f32.gmra.mrb[0].mxu0 %v266
    %v935 = vpop.f32.mrb[0].mxu0
    %v936 = vadd.f32 %v867, %v935
    %v937 = vpop.f32.mrb[0].mxu0
    %938 = vmatprep.mubr.f32.mxu0 0.0
    %939 = vmatmul.mubr.f32.gmra.mrb[0].mxu0 %v269
    %v940 = vpop.f32.mrb[0].mxu0
    %v941 = vadd.f32 %v867, %v940
    %v942 = vpop.f32.mrb[0].mxu0
    %943 = vdwg.mxu0
    %s944 = scalar_lea.vmem %s6, 96
    %v945 = vld [vmem:[%s944] sm:$0xff]
    %v946 = vld [vmem:[%s944 + $0x8] sm:$0xff]
    %v947 = vld [vmem:[%s944 + $0x10] sm:$0xff]
    %v948 = vld [vmem:[%s944 + $0x18] sm:$0xff]
    %s949 = scalar_lea.vmem %s7, 3
    %v950 = vld [vmem:[%s949] sm:$0x1]
    %v952 = vlaneseq
    %v953 = vshrl.u32 %v952, 7
    %v954 = vsub.s32 0, %v953
    %v955 = vrot.slane %v950, %v954
    %957 = vmatprep.subr.mxu0 0.0
    %958 = vmatpush1.msra.mxu0 %v945
    %959 = vmatprep.subr.mxu0 0.0
    %960 = vmatpush1.msra.mxu0 %v946
    %961 = vmatprep.subr.mxu0 0.0
    %962 = vmatpush1.msra.mxu0 %v947
    %963 = vmatprep.subr.mxu0 0.0
    %964 = vmatpush1.msra.mxu0 %v948
    %965 = vmatprep.subr.mxu0 0.0
    %966 = vmatpush1.msra.mxu0 0.0
    %967 = vmatprep.subr.mxu0 0.0
    %968 = vmatpush1.msra.mxu0 0.0
    %969 = vmatprep.subr.mxu0 0.0
    %970 = vmatpush1.msra.mxu0 0.0
    %971 = vmatprep.subr.mxu0 0.0
    %972 = vmatpush1.msra.mxu0 0.0
    %973 = vmatprep.subr.mxu0 0.0
    %974 = vmatpush1.msra.mxu0 0.0
    %975 = vmatprep.subr.mxu0 0.0
    %976 = vmatpush1.msra.mxu0 0.0
    %977 = vmatprep.subr.mxu0 0.0
    %978 = vmatpush1.msra.mxu0 0.0
    %979 = vmatprep.subr.mxu0 0.0
    %980 = vmatpush1.msra.mxu0 0.0
    %981 = vmatprep.subr.mxu0 0.0
    %982 = vmatpush1.msra.mxu0 0.0
    %983 = vmatprep.subr.mxu0 0.0
    %984 = vmatpush1.msra.mxu0 0.0
    %985 = vmatprep.subr.mxu0 0.0
    %986 = vmatpush1.msra.mxu0 0.0
    %987 = vmatprep.subr.mxu0 0.0
    %988 = vmatpush1.msra.mxu0 0.0
    %989 = vmatprep.subr.mxu0 0.0
    %990 = vmatpush1.msra.mxu0 0.0
    %991 = vmatprep.subr.mxu0 0.0
    %992 = vmatpush1.msra.mxu0 0.0
    %993 = vmatprep.subr.mxu0 0.0
    %994 = vmatpush1.msra.mxu0 0.0
    %995 = vmatprep.subr.mxu0 0.0
    %996 = vmatpush1.msra.mxu0 0.0
    %997 = vmatprep.subr.mxu0 0.0
    %998 = vmatpush1.msra.mxu0 0.0
    %999 = vmatprep.subr.mxu0 0.0
    %1000 = vmatpush1.msra.mxu0 0.0
    %1001 = vmatprep.subr.mxu0 0.0
    %1002 = vmatpush1.msra.mxu0 0.0
    %1003 = vmatprep.subr.mxu0 0.0
    %1004 = vmatpush1.msra.mxu0 0.0
    %1005 = vmatprep.subr.mxu0 0.0
    %1006 = vmatpush1.msra.mxu0 0.0
    %1007 = vmatprep.subr.mxu0 0.0
    %1008 = vmatpush1.msra.mxu0 0.0
    %1009 = vmatprep.subr.mxu0 0.0
    %1010 = vmatpush1.msra.mxu0 0.0
    %1011 = vmatprep.subr.mxu0 0.0
    %1012 = vmatpush1.msra.mxu0 0.0
    %1013 = vmatprep.subr.mxu0 0.0
    %1014 = vmatpush1.msra.mxu0 0.0
    %1015 = vmatprep.subr.mxu0 0.0
    %1016 = vmatpush1.msra.mxu0 0.0
    %1017 = vmatprep.subr.mxu0 0.0
    %1018 = vmatpush1.msra.mxu0 0.0
    %1019 = vmatprep.subr.mxu0 0.0
    %1020 = vmatpush1.msra.mxu0 0.0
    %1021 = vmatprep.mubr.f32.mxu0 0.0
    %1022 = vmatmul.mubr.f32.gmra.mrb[0].mxu0 %v266
    %v1023 = vpop.f32.mrb[0].mxu0
    %v1024 = vadd.f32 %v955, %v1023
    %v1025 = vpop.f32.mrb[0].mxu0
    %1026 = vmatprep.mubr.f32.mxu0 0.0
    %1027 = vmatmul.mubr.f32.gmra.mrb[0].mxu0 %v269
    %v1028 = vpop.f32.mrb[0].mxu0
    %v1029 = vadd.f32 %v955, %v1028
    %v1030 = vpop.f32.mrb[0].mxu0
    %1031 = vdwg.mxu0
    %s1032 = scalar_lea.vmem %s6, 160
    %v1033 = vld [vmem:[%s1032] sm:$0xff]
    %v1034 = vld [vmem:[%s1032 + $0x8] sm:$0xff]
    %v1035 = vld [vmem:[%s1032 + $0x10] sm:$0xff]
    %v1036 = vld [vmem:[%s1032 + $0x18] sm:$0xff]
    %s1037 = scalar_lea.vmem %s7, 5
    %v1038 = vld [vmem:[%s1037] sm:$0x1]
    %v1040 = vlaneseq
    %v1041 = vshrl.u32 %v1040, 7
    %v1042 = vsub.s32 0, %v1041
    %v1043 = vrot.slane %v1038, %v1042
    %1045 = vmatprep.subr.mxu0 0.0
    %1046 = vmatpush1.msra.mxu0 %v1033
    %1047 = vmatprep.subr.mxu0 0.0
    %1048 = vmatpush1.msra.mxu0 %v1034
    %1049 = vmatprep.subr.mxu0 0.0
    %1050 = vmatpush1.msra.mxu0 %v1035
    %1051 = vmatprep.subr.mxu0 0.0
    %1052 = vmatpush1.msra.mxu0 %v1036
    %1053 = vmatprep.subr.mxu0 0.0
    %1054 = vmatpush1.msra.mxu0 0.0
    %1055 = vmatprep.subr.mxu0 0.0
    %1056 = vmatpush1.msra.mxu0 0.0
    %1057 = vmatprep.subr.mxu0 0.0
    %1058 = vmatpush1.msra.mxu0 0.0
    %1059 = vmatprep.subr.mxu0 0.0
    %1060 = vmatpush1.msra.mxu0 0.0
    %1061 = vmatprep.subr.mxu0 0.0
    %1062 = vmatpush1.msra.mxu0 0.0
    %1063 = vmatprep.subr.mxu0 0.0
    %1064 = vmatpush1.msra.mxu0 0.0
    %1065 = vmatprep.subr.mxu0 0.0
    %1066 = vmatpush1.msra.mxu0 0.0
    %1067 = vmatprep.subr.mxu0 0.0
    %1068 = vmatpush1.msra.mxu0 0.0
    %1069 = vmatprep.subr.mxu0 0.0
    %1070 = vmatpush1.msra.mxu0 0.0
    %1071 = vmatprep.subr.mxu0 0.0
    %1072 = vmatpush1.msra.mxu0 0.0
    %1073 = vmatprep.subr.mxu0 0.0
    %1074 = vmatpush1.msra.mxu0 0.0
    %1075 = vmatprep.subr.mxu0 0.0
    %1076 = vmatpush1.msra.mxu0 0.0
    %1077 = vmatprep.subr.mxu0 0.0
    %1078 = vmatpush1.msra.mxu0 0.0
    %1079 = vmatprep.subr.mxu0 0.0
    %1080 = vmatpush1.msra.mxu0 0.0
    %1081 = vmatprep.subr.mxu0 0.0
    %1082 = vmatpush1.msra.mxu0 0.0
    %1083 = vmatprep.subr.mxu0 0.0
    %1084 = vmatpush1.msra.mxu0 0.0
    %1085 = vmatprep.subr.mxu0 0.0
    %1086 = vmatpush1.msra.mxu0 0.0
    %1087 = vmatprep.subr.mxu0 0.0
    %1088 = vmatpush1.msra.mxu0 0.0
    %1089 = vmatprep.subr.mxu0 0.0
    %1090 = vmatpush1.msra.mxu0 0.0
    %1091 = vmatprep.subr.mxu0 0.0
    %1092 = vmatpush1.msra.mxu0 0.0
    %1093 = vmatprep.subr.mxu0 0.0
    %1094 = vmatpush1.msra.mxu0 0.0
    %1095 = vmatprep.subr.mxu0 0.0
    %1096 = vmatpush1.msra.mxu0 0.0
    %1097 = vmatprep.subr.mxu0 0.0
    %1098 = vmatpush1.msra.mxu0 0.0
    %1099 = vmatprep.subr.mxu0 0.0
    %1100 = vmatpush1.msra.mxu0 0.0
    %1101 = vmatprep.subr.mxu0 0.0
    %1102 = vmatpush1.msra.mxu0 0.0
    %1103 = vmatprep.subr.mxu0 0.0
    %1104 = vmatpush1.msra.mxu0 0.0
    %1105 = vmatprep.subr.mxu0 0.0
    %1106 = vmatpush1.msra.mxu0 0.0
    %1107 = vmatprep.subr.mxu0 0.0
    %1108 = vmatpush1.msra.mxu0 0.0
    %1109 = vmatprep.mubr.f32.mxu0 0.0
    %1110 = vmatmul.mubr.f32.gmra.mrb[0].mxu0 %v266
    %v1111 = vpop.f32.mrb[0].mxu0
    %v1112 = vadd.f32 %v1043, %v1111
    %v1113 = vpop.f32.mrb[0].mxu0
    %1114 = vmatprep.mubr.f32.mxu0 0.0
    %1115 = vmatmul.mubr.f32.gmra.mrb[0].mxu0 %v269
    %v1116 = vpop.f32.mrb[0].mxu0
    %v1117 = vadd.f32 %v1043, %v1116
    %v1118 = vpop.f32.mrb[0].mxu0
    %1119 = vdwg.mxu0
    %v1121 = vsel %vm532, %v936, 0
    %v1124 = vsel %vm532, %v1024, 0
    %1126 = vmatprep.subr.mxu0 0.0
    %1127 = vmatpush1.xpose.msra.mxu0 %v1124
    %1128 = vmatprep.subr.mxu0 0.0
    %1129 = vmatpush1.xpose.msra.mxu0 0.0
    %1130 = vmatprep.subr.mxu0 0.0
    %1131 = vmatpush1.xpose.msra.mxu0 0.0
    %1132 = vmatprep.subr.mxu0 0.0
    %1133 = vmatpush1.xpose.msra.mxu0 0.0
    %1134 = vmatprep.subr.mxu0 0.0
    %1135 = vmatpush1.xpose.msra.mxu0 0.0
    %1136 = vmatprep.subr.mxu0 0.0
    %1137 = vmatpush1.xpose.msra.mxu0 0.0
    %1138 = vmatprep.subr.mxu0 0.0
    %1139 = vmatpush1.xpose.msra.mxu0 0.0
    %1140 = vmatprep.subr.mxu0 0.0
    %1141 = vmatpush1.xpose.msra.mxu0 0.0
    %1142 = vmatprep.subr.mxu0 0.0
    %1143 = vmatpush1.xpose.msra.mxu0 0.0
    %1144 = vmatprep.subr.mxu0 0.0
    %1145 = vmatpush1.xpose.msra.mxu0 0.0
    %1146 = vmatprep.subr.mxu0 0.0
    %1147 = vmatpush1.xpose.msra.mxu0 0.0
    %1148 = vmatprep.subr.mxu0 0.0
    %1149 = vmatpush1.xpose.msra.mxu0 0.0
    %1150 = vmatprep.subr.mxu0 0.0
    %1151 = vmatpush1.xpose.msra.mxu0 0.0
    %1152 = vmatprep.subr.mxu0 0.0
    %1153 = vmatpush1.xpose.msra.mxu0 0.0
    %1154 = vmatprep.subr.mxu0 0.0
    %1155 = vmatpush1.xpose.msra.mxu0 0.0
    %1156 = vmatprep.subr.mxu0 0.0
    %1157 = vmatpush1.xpose.msra.mxu0 0.0
    %1158 = vmatprep.subr.mxu0 0.0
    %1159 = vmatpush1.xpose.msra.mxu0 0.0
    %1160 = vmatprep.subr.mxu0 0.0
    %1161 = vmatpush1.xpose.msra.mxu0 0.0
    %1162 = vmatprep.subr.mxu0 0.0
    %1163 = vmatpush1.xpose.msra.mxu0 0.0
    %1164 = vmatprep.subr.mxu0 0.0
    %1165 = vmatpush1.xpose.msra.mxu0 0.0
    %1166 = vmatprep.subr.mxu0 0.0
    %1167 = vmatpush1.xpose.msra.mxu0 0.0
    %1168 = vmatprep.subr.mxu0 0.0
    %1169 = vmatpush1.xpose.msra.mxu0 0.0
    %1170 = vmatprep.subr.mxu0 0.0
    %1171 = vmatpush1.xpose.msra.mxu0 0.0
    %1172 = vmatprep.subr.mxu0 0.0
    %1173 = vmatpush1.xpose.msra.mxu0 0.0
    %1174 = vmatprep.subr.mxu0 0.0
    %1175 = vmatpush1.xpose.msra.mxu0 0.0
    %1176 = vmatprep.subr.mxu0 0.0
    %1177 = vmatpush1.xpose.msra.mxu0 0.0
    %1178 = vmatprep.subr.mxu0 0.0
    %1179 = vmatpush1.xpose.msra.mxu0 0.0
    %1180 = vmatprep.subr.mxu0 0.0
    %1181 = vmatpush1.xpose.msra.mxu0 0.0
    %1182 = vmatprep.subr.mxu0 0.0
    %1183 = vmatpush1.xpose.msra.mxu0 0.0
    %1184 = vmatprep.subr.mxu0 0.0
    %1185 = vmatpush1.xpose.msra.mxu0 0.0
    %1186 = vmatprep.subr.mxu0 0.0
    %1187 = vmatpush1.xpose.msra.mxu0 0.0
    %1188 = vmatprep.subr.mxu0 0.0
    %1189 = vmatpush1.xpose.msra.mxu0 0.0
    %1190 = vmatprep.mubr.f32.mxu0 0.0
    %1191 = vmatmul.mubr.f32.gmra.mrb[0].mxu0 %v1121
    %v1192 = vpop.f32.mrb[0].mxu0
    %v1193 = vadd.f32 %v525, %v1192
    %v1194 = vpop.f32.mrb[0].mxu0
    %1195 = vdwg.mxu0
    %v1197 = vsel %vm532, %v941, 0
    %v1200 = vsel %vm532, %v1029, 0
    %1202 = vmatprep.subr.mxu0 0.0
    %1203 = vmatpush1.xpose.msra.mxu0 %v1200
    %1204 = vmatprep.subr.mxu0 0.0
    %1205 = vmatpush1.xpose.msra.mxu0 0.0
    %1206 = vmatprep.subr.mxu0 0.0
    %1207 = vmatpush1.xpose.msra.mxu0 0.0
    %1208 = vmatprep.subr.mxu0 0.0
    %1209 = vmatpush1.xpose.msra.mxu0 0.0
    %1210 = vmatprep.subr.mxu0 0.0
    %1211 = vmatpush1.xpose.msra.mxu0 0.0
    %1212 = vmatprep.subr.mxu0 0.0
    %1213 = vmatpush1.xpose.msra.mxu0 0.0
    %1214 = vmatprep.subr.mxu0 0.0
    %1215 = vmatpush1.xpose.msra.mxu0 0.0
    %1216 = vmatprep.subr.mxu0 0.0
    %1217 = vmatpush1.xpose.msra.mxu0 0.0
    %1218 = vmatprep.subr.mxu0 0.0
    %1219 = vmatpush1.xpose.msra.mxu0 0.0
    %1220 = vmatprep.subr.mxu0 0.0
    %1221 = vmatpush1.xpose.msra.mxu0 0.0
    %1222 = vmatprep.subr.mxu0 0.0
    %1223 = vmatpush1.xpose.msra.mxu0 0.0
    %1224 = vmatprep.subr.mxu0 0.0
    %1225 = vmatpush1.xpose.msra.mxu0 0.0
    %1226 = vmatprep.subr.mxu0 0.0
    %1227 = vmatpush1.xpose.msra.mxu0 0.0
    %1228 = vmatprep.subr.mxu0 0.0
    %1229 = vmatpush1.xpose.msra.mxu0 0.0
    %1230 = vmatprep.subr.mxu0 0.0
    %1231 = vmatpush1.xpose.msra.mxu0 0.0
    %1232 = vmatprep.subr.mxu0 0.0
    %1233 = vmatpush1.xpose.msra.mxu0 0.0
    %1234 = vmatprep.subr.mxu0 0.0
    %1235 = vmatpush1.xpose.msra.mxu0 0.0
    %1236 = vmatprep.subr.mxu0 0.0
    %1237 = vmatpush1.xpose.msra.mxu0 0.0
    %1238 = vmatprep.subr.mxu0 0.0
    %1239 = vmatpush1.xpose.msra.mxu0 0.0
    %1240 = vmatprep.subr.mxu0 0.0
    %1241 = vmatpush1.xpose.msra.mxu0 0.0
    %1242 = vmatprep.subr.mxu0 0.0
    %1243 = vmatpush1.xpose.msra.mxu0 0.0
    %1244 = vmatprep.subr.mxu0 0.0
    %1245 = vmatpush1.xpose.msra.mxu0 0.0
    %1246 = vmatprep.subr.mxu0 0.0
    %1247 = vmatpush1.xpose.msra.mxu0 0.0
    %1248 = vmatprep.subr.mxu0 0.0
    %1249 = vmatpush1.xpose.msra.mxu0 0.0
    %1250 = vmatprep.subr.mxu0 0.0
    %1251 = vmatpush1.xpose.msra.mxu0 0.0
    %1252 = vmatprep.subr.mxu0 0.0
    %1253 = vmatpush1.xpose.msra.mxu0 0.0
    %1254 = vmatprep.subr.mxu0 0.0
    %1255 = vmatpush1.xpose.msra.mxu0 0.0
    %1256 = vmatprep.subr.mxu0 0.0
    %1257 = vmatpush1.xpose.msra.mxu0 0.0
    %1258 = vmatprep.subr.mxu0 0.0
    %1259 = vmatpush1.xpose.msra.mxu0 0.0
    %1260 = vmatprep.subr.mxu0 0.0
    %1261 = vmatpush1.xpose.msra.mxu0 0.0
    %1262 = vmatprep.subr.mxu0 0.0
    %1263 = vmatpush1.xpose.msra.mxu0 0.0
    %1264 = vmatprep.subr.mxu0 0.0
    %1265 = vmatpush1.xpose.msra.mxu0 0.0
    %1266 = vmatprep.mubr.f32.mxu0 0.0
    %1267 = vmatmul.mubr.f32.gmra.mrb[0].mxu0 %v1197
    %v1268 = vpop.f32.mrb[0].mxu0
    %v1269 = vadd.f32 %v529, %v1268
    %v1270 = vpop.f32.mrb[0].mxu0
    %1271 = vdwg.mxu0
    %v1272 = vsel %vm685, %v1193, -inf
    %1273 = vmax.xlane.f32.xlu0 %v1272
    %v1274 = vpop.xlane.xlu0 %1273
    %v1275 = vsel %vm685, %v1269, -inf
    %1276 = vmax.xlane.f32.xlu0 %v1275
    %v1277 = vpop.xlane.xlu0 %1276
    %v1278 = vsub.f32 %v1193, %v1274
    %v1279 = vsub.f32 %v1269, %v1277
    %v1280 = vmul.f32 %v1278, 1.442695
    %v1281 = vpow.pop %v1280
    %v1282 = vmul.f32 %v1279, 1.442695
    %v1283 = vpow.pop %v1282
    %v1284 = vsel %vm685, %v1281, 0.0
    %1285 = vadd.xlane.f32.xlu0 %v1284
    %v1286 = vpop.xlane.xlu0 %1285
    %v1287 = vsel %vm685, %v1283, 0.0
    %1288 = vadd.xlane.f32.xlu0 %v1287
    %v1289 = vpop.xlane.xlu0 %1288
    %v1290 = vrcp.pop %v1286
    %v1291 = vrcp.pop %v1289
    %v1292 = vmul.f32 %v1281, %v1290
    %v1293 = vmul.f32 %v1283, %v1291
    %v1295 = vsel %vm685, %v1292, 0
    %1297 = vmatprep.subr.mxu0 0.0
    %1298 = vmatpush1.msra.mxu0 %v1112
    %1299 = vmatprep.subr.mxu0 0.0
    %1300 = vmatpush1.msra.mxu0 0.0
    %1301 = vmatprep.subr.mxu0 0.0
    %1302 = vmatpush1.msra.mxu0 0.0
    %1303 = vmatprep.subr.mxu0 0.0
    %1304 = vmatpush1.msra.mxu0 0.0
    %1305 = vmatprep.subr.mxu0 0.0
    %1306 = vmatpush1.msra.mxu0 0.0
    %1307 = vmatprep.subr.mxu0 0.0
    %1308 = vmatpush1.msra.mxu0 0.0
    %1309 = vmatprep.subr.mxu0 0.0
    %1310 = vmatpush1.msra.mxu0 0.0
    %1311 = vmatprep.subr.mxu0 0.0
    %1312 = vmatpush1.msra.mxu0 0.0
    %1313 = vmatprep.subr.mxu0 0.0
    %1314 = vmatpush1.msra.mxu0 0.0
    %1315 = vmatprep.subr.mxu0 0.0
    %1316 = vmatpush1.msra.mxu0 0.0
    %1317 = vmatprep.subr.mxu0 0.0
    %1318 = vmatpush1.msra.mxu0 0.0
    %1319 = vmatprep.subr.mxu0 0.0
    %1320 = vmatpush1.msra.mxu0 0.0
    %1321 = vmatprep.subr.mxu0 0.0
    %1322 = vmatpush1.msra.mxu0 0.0
    %1323 = vmatprep.subr.mxu0 0.0
    %1324 = vmatpush1.msra.mxu0 0.0
    %1325 = vmatprep.subr.mxu0 0.0
    %1326 = vmatpush1.msra.mxu0 0.0
    %1327 = vmatprep.subr.mxu0 0.0
    %1328 = vmatpush1.msra.mxu0 0.0
    %1329 = vmatprep.subr.mxu0 0.0
    %1330 = vmatpush1.msra.mxu0 0.0
    %1331 = vmatprep.subr.mxu0 0.0
    %1332 = vmatpush1.msra.mxu0 0.0
    %1333 = vmatprep.subr.mxu0 0.0
    %1334 = vmatpush1.msra.mxu0 0.0
    %1335 = vmatprep.subr.mxu0 0.0
    %1336 = vmatpush1.msra.mxu0 0.0
    %1337 = vmatprep.subr.mxu0 0.0
    %1338 = vmatpush1.msra.mxu0 0.0
    %1339 = vmatprep.subr.mxu0 0.0
    %1340 = vmatpush1.msra.mxu0 0.0
    %1341 = vmatprep.subr.mxu0 0.0
    %1342 = vmatpush1.msra.mxu0 0.0
    %1343 = vmatprep.subr.mxu0 0.0
    %1344 = vmatpush1.msra.mxu0 0.0
    %1345 = vmatprep.subr.mxu0 0.0
    %1346 = vmatpush1.msra.mxu0 0.0
    %1347 = vmatprep.subr.mxu0 0.0
    %1348 = vmatpush1.msra.mxu0 0.0
    %1349 = vmatprep.subr.mxu0 0.0
    %1350 = vmatpush1.msra.mxu0 0.0
    %1351 = vmatprep.subr.mxu0 0.0
    %1352 = vmatpush1.msra.mxu0 0.0
    %1353 = vmatprep.subr.mxu0 0.0
    %1354 = vmatpush1.msra.mxu0 0.0
    %1355 = vmatprep.subr.mxu0 0.0
    %1356 = vmatpush1.msra.mxu0 0.0
    %1357 = vmatprep.subr.mxu0 0.0
    %1358 = vmatpush1.msra.mxu0 0.0
    %1359 = vmatprep.subr.mxu0 0.0
    %1360 = vmatpush1.msra.mxu0 0.0
    %1361 = vmatprep.mubr.f32.mxu0 0.0
    %1362 = vmatmul.mubr.f32.gmra.mrb[0].mxu0 %v1295
    %v1363 = vpop.f32.mrb[0].mxu0
    %v1364 = vadd.f32 0.0, %v1363
    %v1365 = vpop.f32.mrb[0].mxu0
    %1366 = vdwg.mxu0
    %v1368 = vsel %vm685, %v1293, 0
    %1370 = vmatprep.subr.mxu0 0.0
    %1371 = vmatpush1.msra.mxu0 %v1117
    %1372 = vmatprep.subr.mxu0 0.0
    %1373 = vmatpush1.msra.mxu0 0.0
    %1374 = vmatprep.subr.mxu0 0.0
    %1375 = vmatpush1.msra.mxu0 0.0
    %1376 = vmatprep.subr.mxu0 0.0
    %1377 = vmatpush1.msra.mxu0 0.0
    %1378 = vmatprep.subr.mxu0 0.0
    %1379 = vmatpush1.msra.mxu0 0.0
    %1380 = vmatprep.subr.mxu0 0.0
    %1381 = vmatpush1.msra.mxu0 0.0
    %1382 = vmatprep.subr.mxu0 0.0
    %1383 = vmatpush1.msra.mxu0 0.0
    %1384 = vmatprep.subr.mxu0 0.0
    %1385 = vmatpush1.msra.mxu0 0.0
    %1386 = vmatprep.subr.mxu0 0.0
    %1387 = vmatpush1.msra.mxu0 0.0
    %1388 = vmatprep.subr.mxu0 0.0
    %1389 = vmatpush1.msra.mxu0 0.0
    %1390 = vmatprep.subr.mxu0 0.0
    %1391 = vmatpush1.msra.mxu0 0.0
    %1392 = vmatprep.subr.mxu0 0.0
    %1393 = vmatpush1.msra.mxu0 0.0
    %1394 = vmatprep.subr.mxu0 0.0
    %1395 = vmatpush1.msra.mxu0 0.0
    %1396 = vmatprep.subr.mxu0 0.0
    %1397 = vmatpush1.msra.mxu0 0.0
    %1398 = vmatprep.subr.mxu0 0.0
    %1399 = vmatpush1.msra.mxu0 0.0
    %1400 = vmatprep.subr.mxu0 0.0
    %1401 = vmatpush1.msra.mxu0 0.0
    %1402 = vmatprep.subr.mxu0 0.0
    %1403 = vmatpush1.msra.mxu0 0.0
    %1404 = vmatprep.subr.mxu0 0.0
    %1405 = vmatpush1.msra.mxu0 0.0
    %1406 = vmatprep.subr.mxu0 0.0
    %1407 = vmatpush1.msra.mxu0 0.0
    %1408 = vmatprep.subr.mxu0 0.0
    %1409 = vmatpush1.msra.mxu0 0.0
    %1410 = vmatprep.subr.mxu0 0.0
    %1411 = vmatpush1.msra.mxu0 0.0
    %1412 = vmatprep.subr.mxu0 0.0
    %1413 = vmatpush1.msra.mxu0 0.0
    %1414 = vmatprep.subr.mxu0 0.0
    %1415 = vmatpush1.msra.mxu0 0.0
    %1416 = vmatprep.subr.mxu0 0.0
    %1417 = vmatpush1.msra.mxu0 0.0
    %1418 = vmatprep.subr.mxu0 0.0
    %1419 = vmatpush1.msra.mxu0 0.0
    %1420 = vmatprep.subr.mxu0 0.0
    %1421 = vmatpush1.msra.mxu0 0.0
    %1422 = vmatprep.subr.mxu0 0.0
    %1423 = vmatpush1.msra.mxu0 0.0
    %1424 = vmatprep.subr.mxu0 0.0
    %1425 = vmatpush1.msra.mxu0 0.0
    %1426 = vmatprep.subr.mxu0 0.0
    %1427 = vmatpush1.msra.mxu0 0.0
    %1428 = vmatprep.subr.mxu0 0.0
    %1429 = vmatpush1.msra.mxu0 0.0
    %1430 = vmatprep.subr.mxu0 0.0
    %1431 = vmatpush1.msra.mxu0 0.0
    %1432 = vmatprep.subr.mxu0 0.0
    %1433 = vmatpush1.msra.mxu0 0.0
    %1434 = vmatprep.mubr.f32.mxu0 0.0
    %1435 = vmatmul.mubr.f32.gmra.mrb[0].mxu0 %v1368
    %v1436 = vpop.f32.mrb[0].mxu0
    %v1437 = vadd.f32 0.0, %v1436
    %v1438 = vpop.f32.mrb[0].mxu0
    %1439 = vdwg.mxu0
    %s1440 = scalar_lea.vmem %s8, 16
    %v1441 = vld [vmem:[%s1440] sm:$0xff]
    %v1442 = vld [vmem:[%s1440 + $0x8] sm:$0xff]
    %v1444 = vsel %vm532, %v1364, 0
    %v1447 = vsel %vm532, %v1437, 0
    %1449 = vmatprep.subr.mxu0 0.0
    %1450 = vmatpush1.msra.mxu0 %v1441
    %1451 = vmatprep.subr.mxu0 0.0
    %1452 = vmatpush1.msra.mxu0 %v1442
    %1453 = vmatprep.subr.mxu0 0.0
    %1454 = vmatpush1.msra.mxu0 0.0
    %1455 = vmatprep.subr.mxu0 0.0
    %1456 = vmatpush1.msra.mxu0 0.0
    %1457 = vmatprep.subr.mxu0 0.0
    %1458 = vmatpush1.msra.mxu0 0.0
    %1459 = vmatprep.subr.mxu0 0.0
    %1460 = vmatpush1.msra.mxu0 0.0
    %1461 = vmatprep.subr.mxu0 0.0
    %1462 = vmatpush1.msra.mxu0 0.0
    %1463 = vmatprep.subr.mxu0 0.0
    %1464 = vmatpush1.msra.mxu0 0.0
    %1465 = vmatprep.subr.mxu0 0.0
    %1466 = vmatpush1.msra.mxu0 0.0
    %1467 = vmatprep.subr.mxu0 0.0
    %1468 = vmatpush1.msra.mxu0 0.0
    %1469 = vmatprep.subr.mxu0 0.0
    %1470 = vmatpush1.msra.mxu0 0.0
    %1471 = vmatprep.subr.mxu0 0.0
    %1472 = vmatpush1.msra.mxu0 0.0
    %1473 = vmatprep.subr.mxu0 0.0
    %1474 = vmatpush1.msra.mxu0 0.0
    %1475 = vmatprep.subr.mxu0 0.0
    %1476 = vmatpush1.msra.mxu0 0.0
    %1477 = vmatprep.subr.mxu0 0.0
    %1478 = vmatpush1.msra.mxu0 0.0
    %1479 = vmatprep.subr.mxu0 0.0
    %1480 = vmatpush1.msra.mxu0 0.0
    %1481 = vmatprep.subr.mxu0 0.0
    %1482 = vmatpush1.msra.mxu0 0.0
    %1483 = vmatprep.subr.mxu0 0.0
    %1484 = vmatpush1.msra.mxu0 0.0
    %1485 = vmatprep.subr.mxu0 0.0
    %1486 = vmatpush1.msra.mxu0 0.0
    %1487 = vmatprep.subr.mxu0 0.0
    %1488 = vmatpush1.msra.mxu0 0.0
    %1489 = vmatprep.subr.mxu0 0.0
    %1490 = vmatpush1.msra.mxu0 0.0
    %1491 = vmatprep.subr.mxu0 0.0
    %1492 = vmatpush1.msra.mxu0 0.0
    %1493 = vmatprep.subr.mxu0 0.0
    %1494 = vmatpush1.msra.mxu0 0.0
    %1495 = vmatprep.subr.mxu0 0.0
    %1496 = vmatpush1.msra.mxu0 0.0
    %1497 = vmatprep.subr.mxu0 0.0
    %1498 = vmatpush1.msra.mxu0 0.0
    %1499 = vmatprep.subr.mxu0 0.0
    %1500 = vmatpush1.msra.mxu0 0.0
    %1501 = vmatprep.subr.mxu0 0.0
    %1502 = vmatpush1.msra.mxu0 0.0
    %1503 = vmatprep.subr.mxu0 0.0
    %1504 = vmatpush1.msra.mxu0 0.0
    %1505 = vmatprep.subr.mxu0 0.0
    %1506 = vmatpush1.msra.mxu0 0.0
    %1507 = vmatprep.subr.mxu0 0.0
    %1508 = vmatpush1.msra.mxu0 0.0
    %1509 = vmatprep.subr.mxu0 0.0
    %1510 = vmatpush1.msra.mxu0 0.0
    %1511 = vmatprep.subr.mxu0 0.0
    %1512 = vmatpush1.msra.mxu0 0.0
    %1513 = vmatprep.mubr.f32.mxu0 0.0
    %1514 = vmatmul.mubr.f32.gmra.mrb[0].mxu0 %v1444
    %v1515 = vpop.f32.mrb[0].mxu0
    %v1516 = vadd.f32 0.0, %v1515
    %v1517 = vpop.f32.mrb[0].mxu0
    %1518 = vmatprep.mubr.f32.mxu0 0.0
    %1519 = vmatmul.mubr.f32.gmra.mrb[0].mxu0 %v1447
    %v1520 = vpop.f32.mrb[0].mxu0
    %v1521 = vadd.f32 0.0, %v1520
    %v1522 = vpop.f32.mrb[0].mxu0
    %1523 = vdwg.mxu0
    %v1525 = vsel %vm532, %v778, 0
    %v1528 = vsel %vm532, %v851, 0
    %1530 = vmatprep.subr.mxu0 0.0
    %1531 = vmatpush1.msra.mxu0 %v854
    %1532 = vmatprep.subr.mxu0 0.0
    %1533 = vmatpush1.msra.mxu0 %v855
    %1534 = vmatprep.subr.mxu0 0.0
    %1535 = vmatpush1.msra.mxu0 0.0
    %1536 = vmatprep.subr.mxu0 0.0
    %1537 = vmatpush1.msra.mxu0 0.0
    %1538 = vmatprep.subr.mxu0 0.0
    %1539 = vmatpush1.msra.mxu0 0.0
    %1540 = vmatprep.subr.mxu0 0.0
    %1541 = vmatpush1.msra.mxu0 0.0
    %1542 = vmatprep.subr.mxu0 0.0
    %1543 = vmatpush1.msra.mxu0 0.0
    %1544 = vmatprep.subr.mxu0 0.0
    %1545 = vmatpush1.msra.mxu0 0.0
    %1546 = vmatprep.subr.mxu0 0.0
    %1547 = vmatpush1.msra.mxu0 0.0
    %1548 = vmatprep.subr.mxu0 0.0
    %1549 = vmatpush1.msra.mxu0 0.0
    %1550 = vmatprep.subr.mxu0 0.0
    %1551 = vmatpush1.msra.mxu0 0.0
    %1552 = vmatprep.subr.mxu0 0.0
    %1553 = vmatpush1.msra.mxu0 0.0
    %1554 = vmatprep.subr.mxu0 0.0
    %1555 = vmatpush1.msra.mxu0 0.0
    %1556 = vmatprep.subr.mxu0 0.0
    %1557 = vmatpush1.msra.mxu0 0.0
    %1558 = vmatprep.subr.mxu0 0.0
    %1559 = vmatpush1.msra.mxu0 0.0
    %1560 = vmatprep.subr.mxu0 0.0
    %1561 = vmatpush1.msra.mxu0 0.0
    %1562 = vmatprep.subr.mxu0 0.0
    %1563 = vmatpush1.msra.mxu0 0.0
    %1564 = vmatprep.subr.mxu0 0.0
    %1565 = vmatpush1.msra.mxu0 0.0
    %1566 = vmatprep.subr.mxu0 0.0
    %1567 = vmatpush1.msra.mxu0 0.0
    %1568 = vmatprep.subr.mxu0 0.0
    %1569 = vmatpush1.msra.mxu0 0.0
    %1570 = vmatprep.subr.mxu0 0.0
    %1571 = vmatpush1.msra.mxu0 0.0
    %1572 = vmatprep.subr.mxu0 0.0
    %1573 = vmatpush1.msra.mxu0 0.0
    %1574 = vmatprep.subr.mxu0 0.0
    %1575 = vmatpush1.msra.mxu0 0.0
    %1576 = vmatprep.subr.mxu0 0.0
    %1577 = vmatpush1.msra.mxu0 0.0
    %1578 = vmatprep.subr.mxu0 0.0
    %1579 = vmatpush1.msra.mxu0 0.0
    %1580 = vmatprep.subr.mxu0 0.0
    %1581 = vmatpush1.msra.mxu0 0.0
    %1582 = vmatprep.subr.mxu0 0.0
    %1583 = vmatpush1.msra.mxu0 0.0
    %1584 = vmatprep.subr.mxu0 0.0
    %1585 = vmatpush1.msra.mxu0 0.0
    %1586 = vmatprep.subr.mxu0 0.0
    %1587 = vmatpush1.msra.mxu0 0.0
    %1588 = vmatprep.subr.mxu0 0.0
    %1589 = vmatpush1.msra.mxu0 0.0
    %1590 = vmatprep.subr.mxu0 0.0
    %1591 = vmatpush1.msra.mxu0 0.0
    %1592 = vmatprep.subr.mxu0 0.0
    %1593 = vmatpush1.msra.mxu0 0.0
    %1594 = vmatprep.mubr.f32.mxu0 0.0
    %1595 = vmatmul.mubr.f32.gmra.mrb[0].mxu0 %v1525
    %v1596 = vpop.f32.mrb[0].mxu0
    %v1597 = vadd.f32 %v1516, %v1596
    %v1598 = vpop.f32.mrb[0].mxu0
    %1599 = vmatprep.mubr.f32.mxu0 0.0
    %1600 = vmatmul.mubr.f32.gmra.mrb[0].mxu0 %v1528
    %v1601 = vpop.f32.mrb[0].mxu0
    %v1602 = vadd.f32 %v1521, %v1601
    %v1603 = vpop.f32.mrb[0].mxu0
    %1604 = vdwg.mxu0
    %v1605 = vld [vmem:[%s9] sm:$0x1]
    %v1607 = vlaneseq
    %v1608 = vshrl.u32 %v1607, 7
    %v1609 = vsub.s32 0, %v1608
    %v1610 = vrot.slane %v1605, %v1609
    %v1612 = vadd.f32 %v1597, %v1610
    %v1613 = vadd.f32 %v1602, %v1610
    %v1614 = vadd.f32 %v225, %v1612
    %v1615 = vadd.f32 %v226, %v1613
    %v1616 = vld [vmem:[%s10] sm:$0x1]
    %v1617 = vld [vmem:[%s11] sm:$0x1]
    %v1618 = vsel %vm183, %v1614, 0.0
    %1619 = vadd.xlane.f32.xlu0 %v1618
    %v1620 = vpop.xlane.xlu0 %1619
    %v1621 = vsel %vm183, %v1615, 0.0
    %1622 = vadd.xlane.f32.xlu0 %v1621
    %v1623 = vpop.xlane.xlu0 %1622
    %v1624 = vmul.f32 %v1620, %v190
    %v1625 = vmul.f32 %v1623, %v190
    %v1626 = vsub.f32 %v1614, %v1624
    %v1627 = vsub.f32 %v1615, %v1625
    %v1628 = vmul.f32 %v1626, %v1626
    %v1629 = vmul.f32 %v1627, %v1627
    %v1630 = vsel %vm183, %v1628, 0.0
    %1631 = vadd.xlane.f32.xlu0 %v1630
    %v1632 = vpop.xlane.xlu0 %1631
    %v1633 = vsel %vm183, %v1629, 0.0
    %1634 = vadd.xlane.f32.xlu0 %v1633
    %v1635 = vpop.xlane.xlu0 %1634
    %v1636 = vmul.f32 %v1632, %v190
    %v1637 = vmul.f32 %v1635, %v190
    %v1638 = vadd.f32 %v1636, 1e-12
    %v1639 = vadd.f32 %v1637, 1e-12
    %v1640 = vrsqrt.pop %v1638
    %v1641 = vrsqrt.pop %v1639
    %v1642 = vmul.f32 %v1626, %v1640
    %v1643 = vmul.f32 %v1627, %v1641
    %v1645 = vlaneseq
    %v1646 = vshrl.u32 %v1645, 7
    %v1647 = vsub.s32 0, %v1646
    %v1648 = vrot.slane %v1616, %v1647
    %v1650 = vmul.f32 %v1642, %v1648
    %v1651 = vmul.f32 %v1643, %v1648
    %v1653 = vlaneseq
    %v1654 = vshrl.u32 %v1653, 7
    %v1655 = vsub.s32 0, %v1654
    %v1656 = vrot.slane %v1617, %v1655
    %v1658 = vadd.f32 %v1650, %v1656
    %v1659 = vadd.f32 %v1651, %v1656
    %v1660 = vld [vmem:[%s12] sm:$0xff]
    %v1661 = vld [vmem:[%s12 + $0x8] sm:$0xff]
    %v1662 = vld [vmem:[%s12 + $0x10] sm:$0xff]
    %v1663 = vld [vmem:[%s12 + $0x18] sm:$0xff]
    %v1664 = vld [vmem:[%s13] sm:$0x1]
    %v1666 = vlaneseq
    %v1667 = vshrl.u32 %v1666, 7
    %v1668 = vsub.s32 0, %v1667
    %v1669 = vrot.slane %v1664, %v1668
    %v1672 = vsel %vm183, %v1658, 0
    %v1675 = vsel %vm183, %v1659, 0
    %1677 = vmatprep.subr.mxu0 0.0
    %1678 = vmatpush1.msra.mxu0 %v1660
    %1679 = vmatprep.subr.mxu0 0.0
    %1680 = vmatpush1.msra.mxu0 %v1661
    %1681 = vmatprep.subr.mxu0 0.0
    %1682 = vmatpush1.msra.mxu0 %v1662
    %1683 = vmatprep.subr.mxu0 0.0
    %1684 = vmatpush1.msra.mxu0 %v1663
    %1685 = vmatprep.subr.mxu0 0.0
    %1686 = vmatpush1.msra.mxu0 0.0
    %1687 = vmatprep.subr.mxu0 0.0
    %1688 = vmatpush1.msra.mxu0 0.0
    %1689 = vmatprep.subr.mxu0 0.0
    %1690 = vmatpush1.msra.mxu0 0.0
    %1691 = vmatprep.subr.mxu0 0.0
    %1692 = vmatpush1.msra.mxu0 0.0
    %1693 = vmatprep.subr.mxu0 0.0
    %1694 = vmatpush1.msra.mxu0 0.0
    %1695 = vmatprep.subr.mxu0 0.0
    %1696 = vmatpush1.msra.mxu0 0.0
    %1697 = vmatprep.subr.mxu0 0.0
    %1698 = vmatpush1.msra.mxu0 0.0
    %1699 = vmatprep.subr.mxu0 0.0
    %1700 = vmatpush1.msra.mxu0 0.0
    %1701 = vmatprep.subr.mxu0 0.0
    %1702 = vmatpush1.msra.mxu0 0.0
    %1703 = vmatprep.subr.mxu0 0.0
    %1704 = vmatpush1.msra.mxu0 0.0
    %1705 = vmatprep.subr.mxu0 0.0
    %1706 = vmatpush1.msra.mxu0 0.0
    %1707 = vmatprep.subr.mxu0 0.0
    %1708 = vmatpush1.msra.mxu0 0.0
    %1709 = vmatprep.subr.mxu0 0.0
    %1710 = vmatpush1.msra.mxu0 0.0
    %1711 = vmatprep.subr.mxu0 0.0
    %1712 = vmatpush1.msra.mxu0 0.0
    %1713 = vmatprep.subr.mxu0 0.0
    %1714 = vmatpush1.msra.mxu0 0.0
    %1715 = vmatprep.subr.mxu0 0.0
    %1716 = vmatpush1.msra.mxu0 0.0
    %1717 = vmatprep.subr.mxu0 0.0
    %1718 = vmatpush1.msra.mxu0 0.0
    %1719 = vmatprep.subr.mxu0 0.0
    %1720 = vmatpush1.msra.mxu0 0.0
    %1721 = vmatprep.subr.mxu0 0.0
    %1722 = vmatpush1.msra.mxu0 0.0
    %1723 = vmatprep.subr.mxu0 0.0
    %1724 = vmatpush1.msra.mxu0 0.0
    %1725 = vmatprep.subr.mxu0 0.0
    %1726 = vmatpush1.msra.mxu0 0.0
    %1727 = vmatprep.subr.mxu0 0.0
    %1728 = vmatpush1.msra.mxu0 0.0
    %1729 = vmatprep.subr.mxu0 0.0
    %1730 = vmatpush1.msra.mxu0 0.0
    %1731 = vmatprep.subr.mxu0 0.0
    %1732 = vmatpush1.msra.mxu0 0.0
    %1733 = vmatprep.subr.mxu0 0.0
    %1734 = vmatpush1.msra.mxu0 0.0
    %1735 = vmatprep.subr.mxu0 0.0
    %1736 = vmatpush1.msra.mxu0 0.0
    %1737 = vmatprep.subr.mxu0 0.0
    %1738 = vmatpush1.msra.mxu0 0.0
    %1739 = vmatprep.subr.mxu0 0.0
    %1740 = vmatpush1.msra.mxu0 0.0
    %1741 = vmatprep.mubr.f32.mxu0 0.0
    %1742 = vmatmul.mubr.f32.gmra.mrb[0].mxu0 %v1672
    %v1743 = vpop.f32.mrb[0].mxu0
    %v1744 = vadd.f32 %v1669, %v1743
    %v1745 = vpop.f32.mrb[0].mxu0
    %1746 = vmatprep.mubr.f32.mxu0 0.0
    %1747 = vmatmul.mubr.f32.gmra.mrb[0].mxu0 %v1675
    %v1748 = vpop.f32.mrb[0].mxu0
    %v1749 = vadd.f32 %v1669, %v1748
    %v1750 = vpop.f32.mrb[0].mxu0
    %1751 = vdwg.mxu0
    %v1752 = vmul.f32 %v1744, %v1744
    %v1753 = vmul.f32 %v1749, %v1749
    %v1754 = vmul.f32 %v1744, %v1752
    %v1755 = vmul.f32 %v1749, %v1753
    %v1756 = vmul.f32 %v1754, 0.044715
    %v1757 = vmul.f32 %v1755, 0.044715
    %v1758 = vadd.f32 %v1744, %v1756
    %v1759 = vadd.f32 %v1749, %v1757
    %v1760 = vmul.f32 %v1758, 0.7978846
    %v1761 = vmul.f32 %v1759, 0.7978846
    %v1762 = vtanh.pop %v1760
    %v1763 = vtanh.pop %v1761
    %v1764 = vadd.f32 %v1762, 1.0
    %v1765 = vadd.f32 %v1763, 1.0
    %v1766 = vmul.f32 %v1764, 0.5
    %v1767 = vmul.f32 %v1765, 0.5
    %v1768 = vmul.f32 %v1744, %v1766
    %v1769 = vmul.f32 %v1749, %v1767
    %v1770 = vld [vmem:[%s14] sm:$0xff]
    %v1771 = vld [vmem:[%s14 + $0x8] sm:$0xff]
    %v1772 = vld [vmem:[%s14 + $0x10] sm:$0xff]
    %v1773 = vld [vmem:[%s14 + $0x18] sm:$0xff]
    %v1774 = vld [vmem:[%s14 + $0x20] sm:$0xff]
    %v1775 = vld [vmem:[%s14 + $0x28] sm:$0xff]
    %v1776 = vld [vmem:[%s14 + $0x30] sm:$0xff]
    %v1777 = vld [vmem:[%s14 + $0x38] sm:$0xff]
    %v1778 = vld [vmem:[%s15] sm:$0x1]
    %v1780 = vlaneseq
    %v1781 = vshrl.u32 %v1780, 7
    %v1782 = vsub.s32 0, %v1781
    %v1783 = vrot.slane %v1778, %v1782
    %vm1785 = vcmask 523264
    %v1787 = vsel %vm1785, %v1768, 0
    %v1790 = vsel %vm1785, %v1769, 0
    %1792 = vmatprep.subr.mxu0 0.0
    %1793 = vmatpush1.msra.mxu0 %v1770
    %1794 = vmatprep.subr.mxu0 0.0
    %1795 = vmatpush1.msra.mxu0 %v1771
    %1796 = vmatprep.subr.mxu0 0.0
    %1797 = vmatpush1.msra.mxu0 %v1772
    %1798 = vmatprep.subr.mxu0 0.0
    %1799 = vmatpush1.msra.mxu0 %v1773
    %1800 = vmatprep.subr.mxu0 0.0
    %1801 = vmatpush1.msra.mxu0 %v1774
    %1802 = vmatprep.subr.mxu0 0.0
    %1803 = vmatpush1.msra.mxu0 %v1775
    %1804 = vmatprep.subr.mxu0 0.0
    %1805 = vmatpush1.msra.mxu0 %v1776
    %1806 = vmatprep.subr.mxu0 0.0
    %1807 = vmatpush1.msra.mxu0 %v1777
    %1808 = vmatprep.subr.mxu0 0.0
    %1809 = vmatpush1.msra.mxu0 0.0
    %1810 = vmatprep.subr.mxu0 0.0
    %1811 = vmatpush1.msra.mxu0 0.0
    %1812 = vmatprep.subr.mxu0 0.0
    %1813 = vmatpush1.msra.mxu0 0.0
    %1814 = vmatprep.subr.mxu0 0.0
    %1815 = vmatpush1.msra.mxu0 0.0
    %1816 = vmatprep.subr.mxu0 0.0
    %1817 = vmatpush1.msra.mxu0 0.0
    %1818 = vmatprep.subr.mxu0 0.0
    %1819 = vmatpush1.msra.mxu0 0.0
    %1820 = vmatprep.subr.mxu0 0.0
    %1821 = vmatpush1.msra.mxu0 0.0
    %1822 = vmatprep.subr.mxu0 0.0
    %1823 = vmatpush1.msra.mxu0 0.0
    %1824 = vmatprep.subr.mxu0 0.0
    %1825 = vmatpush1.msra.mxu0 0.0
    %1826 = vmatprep.subr.mxu0 0.0
    %1827 = vmatpush1.msra.mxu0 0.0
    %1828 = vmatprep.subr.mxu0 0.0
    %1829 = vmatpush1.msra.mxu0 0.0
    %1830 = vmatprep.subr.mxu0 0.0
    %1831 = vmatpush1.msra.mxu0 0.0
    %1832 = vmatprep.subr.mxu0 0.0
    %1833 = vmatpush1.msra.mxu0 0.0
    %1834 = vmatprep.subr.mxu0 0.0
    %1835 = vmatpush1.msra.mxu0 0.0
    %1836 = vmatprep.subr.mxu0 0.0
    %1837 = vmatpush1.msra.mxu0 0.0
    %1838 = vmatprep.subr.mxu0 0.0
    %1839 = vmatpush1.msra.mxu0 0.0
    %1840 = vmatprep.subr.mxu0 0.0
    %1841 = vmatpush1.msra.mxu0 0.0
    %1842 = vmatprep.subr.mxu0 0.0
    %1843 = vmatpush1.msra.mxu0 0.0
    %1844 = vmatprep.subr.mxu0 0.0
    %1845 = vmatpush1.msra.mxu0 0.0
    %1846 = vmatprep.subr.mxu0 0.0
    %1847 = vmatpush1.msra.mxu0 0.0
    %1848 = vmatprep.subr.mxu0 0.0
    %1849 = vmatpush1.msra.mxu0 0.0
    %1850 = vmatprep.subr.mxu0 0.0
    %1851 = vmatpush1.msra.mxu0 0.0
    %1852 = vmatprep.subr.mxu0 0.0
    %1853 = vmatpush1.msra.mxu0 0.0
    %1854 = vmatprep.subr.mxu0 0.0
    %1855 = vmatpush1.msra.mxu0 0.0
    %1856 = vmatprep.mubr.f32.mxu0 0.0
    %1857 = vmatmul.mubr.f32.gmra.mrb[0].mxu0 %v1787
    %v1858 = vpop.f32.mrb[0].mxu0
    %v1859 = vadd.f32 %v1783, %v1858
    %v1860 = vpop.f32.mrb[0].mxu0
    %1861 = vmatprep.mubr.f32.mxu0 0.0
    %1862 = vmatmul.mubr.f32.gmra.mrb[0].mxu0 %v1790
    %v1863 = vpop.f32.mrb[0].mxu0
    %v1864 = vadd.f32 %v1783, %v1863
    %v1865 = vpop.f32.mrb[0].mxu0
    %1866 = vdwg.mxu0
    %v1867 = vadd.f32 %v1658, %v1859
    %v1868 = vadd.f32 %v1659, %v1864
    %v1869 = vld [vmem:[%s16] sm:$0x1]
    %v1870 = vld [vmem:[%s17] sm:$0x1]
    %v1871 = vsel %vm183, %v1867, 0.0
    %1872 = vadd.xlane.f32.xlu0 %v1871
    %v1873 = vpop.xlane.xlu0 %1872
    %v1874 = vsel %vm183, %v1868, 0.0
    %1875 = vadd.xlane.f32.xlu0 %v1874
    %v1876 = vpop.xlane.xlu0 %1875
    %v1877 = vmul.f32 %v1873, %v190
    %v1878 = vmul.f32 %v1876, %v190
    %v1879 = vsub.f32 %v1867, %v1877
    %v1880 = vsub.f32 %v1868, %v1878
    %v1881 = vmul.f32 %v1879, %v1879
    %v1882 = vmul.f32 %v1880, %v1880
    %v1883 = vsel %vm183, %v1881, 0.0
    %1884 = vadd.xlane.f32.xlu0 %v1883
    %v1885 = vpop.xlane.xlu0 %1884
    %v1886 = vsel %vm183, %v1882, 0.0
    %1887 = vadd.xlane.f32.xlu0 %v1886
    %v1888 = vpop.xlane.xlu0 %1887
    %v1889 = vmul.f32 %v1885, %v190
    %v1890 = vmul.f32 %v1888, %v190
    %v1891 = vadd.f32 %v1889, 1e-12
    %v1892 = vadd.f32 %v1890, 1e-12
    %v1893 = vrsqrt.pop %v1891
    %v1894 = vrsqrt.pop %v1892
    %v1895 = vmul.f32 %v1879, %v1893
    %v1896 = vmul.f32 %v1880, %v1894
    %v1898 = vlaneseq
    %v1899 = vshrl.u32 %v1898, 7
    %v1900 = vsub.s32 0, %v1899
    %v1901 = vrot.slane %v1869, %v1900
    %v1903 = vmul.f32 %v1895, %v1901
    %v1904 = vmul.f32 %v1896, %v1901
    %v1906 = vlaneseq
    %v1907 = vshrl.u32 %v1906, 7
    %v1908 = vsub.s32 0, %v1907
    %v1909 = vrot.slane %v1870, %v1908
    %v1911 = vadd.f32 %v1903, %v1909
    %v1912 = vadd.f32 %v1904, %v1909
    %s1913 = scalar_lea.vmem %s6, 192
    %v1914 = vld [vmem:[%s1913] sm:$0xff]
    %v1915 = vld [vmem:[%s1913 + $0x8] sm:$0xff]
    %v1916 = vld [vmem:[%s1913 + $0x10] sm:$0xff]
    %v1917 = vld [vmem:[%s1913 + $0x18] sm:$0xff]
    %s1918 = scalar_lea.vmem %s7, 6
    %v1919 = vld [vmem:[%s1918] sm:$0x1]
    %v1921 = vlaneseq
    %v1922 = vshrl.u32 %v1921, 7
    %v1923 = vsub.s32 0, %v1922
    %v1924 = vrot.slane %v1919, %v1923
    %v1927 = vsel %vm183, %v1911, 0
    %v1930 = vsel %vm183, %v1912, 0
    %1932 = vmatprep.subr.mxu0 0.0
    %1933 = vmatpush1.msra.mxu0 %v1914
    %1934 = vmatprep.subr.mxu0 0.0
    %1935 = vmatpush1.msra.mxu0 %v1915
    %1936 = vmatprep.subr.mxu0 0.0
    %1937 = vmatpush1.msra.mxu0 %v1916
    %1938 = vmatprep.subr.mxu0 0.0
    %1939 = vmatpush1.msra.mxu0 %v1917
    %1940 = vmatprep.subr.mxu0 0.0
    %1941 = vmatpush1.msra.mxu0 0.0
    %1942 = vmatprep.subr.mxu0 0.0
    %1943 = vmatpush1.msra.mxu0 0.0
    %1944 = vmatprep.subr.mxu0 0.0
    %1945 = vmatpush1.msra.mxu0 0.0
    %1946 = vmatprep.subr.mxu0 0.0
    %1947 = vmatpush1.msra.mxu0 0.0
    %1948 = vmatprep.subr.mxu0 0.0
    %1949 = vmatpush1.msra.mxu0 0.0
    %1950 = vmatprep.subr.mxu0 0.0
    %1951 = vmatpush1.msra.mxu0 0.0
    %1952 = vmatprep.subr.mxu0 0.0
    %1953 = vmatpush1.msra.mxu0 0.0
    %1954 = vmatprep.subr.mxu0 0.0
    %1955 = vmatpush1.msra.mxu0 0.0
    %1956 = vmatprep.subr.mxu0 0.0
    %1957 = vmatpush1.msra.mxu0 0.0
    %1958 = vmatprep.subr.mxu0 0.0
    %1959 = vmatpush1.msra.mxu0 0.0
    %1960 = vmatprep.subr.mxu0 0.0
    %1961 = vmatpush1.msra.mxu0 0.0
    %1962 = vmatprep.subr.mxu0 0.0
    %1963 = vmatpush1.msra.mxu0 0.0
    %1964 = vmatprep.subr.mxu0 0.0
    %1965 = vmatpush1.msra.mxu0 0.0
    %1966 = vmatprep.subr.mxu0 0.0
    %1967 = vmatpush1.msra.mxu0 0.0
    %1968 = vmatprep.subr.mxu0 0.0
    %1969 = vmatpush1.msra.mxu0 0.0
    %1970 = vmatprep.subr.mxu0 0.0
    %1971 = vmatpush1.msra.mxu0 0.0
    %1972 = vmatprep.subr.mxu0 0.0
    %1973 = vmatpush1.msra.mxu0 0.0
    %1974 = vmatprep.subr.mxu0 0.0
    %1975 = vmatpush1.msra.mxu0 0.0
    %1976 = vmatprep.subr.mxu0 0.0
    %1977 = vmatpush1.msra.mxu0 0.0
    %1978 = vmatprep.subr.mxu0 0.0
    %1979 = vmatpush1.msra.mxu0 0.0
    %1980 = vmatprep.subr.mxu0 0.0
    %1981 = vmatpush1.msra.mxu0 0.0
    %1982 = vmatprep.subr.mxu0 0.0
    %1983 = vmatpush1.msra.mxu0 0.0
    %1984 = vmatprep.subr.mxu0 0.0
    %1985 = vmatpush1.msra.mxu0 0.0
    %1986 = vmatprep.subr.mxu0 0.0
    %1987 = vmatpush1.msra.mxu0 0.0
    %1988 = vmatprep.subr.mxu0 0.0
    %1989 = vmatpush1.msra.mxu0 0.0
    %1990 = vmatprep.subr.mxu0 0.0
    %1991 = vmatpush1.msra.mxu0 0.0
    %1992 = vmatprep.subr.mxu0 0.0
    %1993 = vmatpush1.msra.mxu0 0.0
    %1994 = vmatprep.subr.mxu0 0.0
    %1995 = vmatpush1.msra.mxu0 0.0
    %1996 = vmatprep.mubr.f32.mxu0 0.0
    %1997 = vmatmul.mubr.f32.gmra.mrb[0].mxu0 %v1927
    %v1998 = vpop.f32.mrb[0].mxu0
    %v1999 = vadd.f32 %v1924, %v1998
    %v2000 = vpop.f32.mrb[0].mxu0
    %2001 = vmatprep.mubr.f32.mxu0 0.0
    %2002 = vmatmul.mubr.f32.gmra.mrb[0].mxu0 %v1930
    %v2003 = vpop.f32.mrb[0].mxu0
    %v2004 = vadd.f32 %v1924, %v2003
    %v2005 = vpop.f32.mrb[0].mxu0
    %2006 = vdwg.mxu0
    %s2007 = scalar_lea.vmem %s6, 256
    %v2008 = vld [vmem:[%s2007] sm:$0xff]
    %v2009 = vld [vmem:[%s2007 + $0x8] sm:$0xff]
    %v2010 = vld [vmem:[%s2007 + $0x10] sm:$0xff]
    %v2011 = vld [vmem:[%s2007 + $0x18] sm:$0xff]
    %s2012 = scalar_lea.vmem %s7, 8
    %v2013 = vld [vmem:[%s2012] sm:$0x1]
    %v2015 = vlaneseq
    %v2016 = vshrl.u32 %v2015, 7
    %v2017 = vsub.s32 0, %v2016
    %v2018 = vrot.slane %v2013, %v2017
    %2020 = vmatprep.subr.mxu0 0.0
    %2021 = vmatpush1.msra.mxu0 %v2008
    %2022 = vmatprep.subr.mxu0 0.0
    %2023 = vmatpush1.msra.mxu0 %v2009
    %2024 = vmatprep.subr.mxu0 0.0
    %2025 = vmatpush1.msra.mxu0 %v2010
    %2026 = vmatprep.subr.mxu0 0.0
    %2027 = vmatpush1.msra.mxu0 %v2011
    %2028 = vmatprep.subr.mxu0 0.0
    %2029 = vmatpush1.msra.mxu0 0.0
    %2030 = vmatprep.subr.mxu0 0.0
    %2031 = vmatpush1.msra.mxu0 0.0
    %2032 = vmatprep.subr.mxu0 0.0
    %2033 = vmatpush1.msra.mxu0 0.0
    %2034 = vmatprep.subr.mxu0 0.0
    %2035 = vmatpush1.msra.mxu0 0.0
    %2036 = vmatprep.subr.mxu0 0.0
    %2037 = vmatpush1.msra.mxu0 0.0
    %2038 = vmatprep.subr.mxu0 0.0
    %2039 = vmatpush1.msra.mxu0 0.0
    %2040 = vmatprep.subr.mxu0 0.0
    %2041 = vmatpush1.msra.mxu0 0.0
    %2042 = vmatprep.subr.mxu0 0.0
    %2043 = vmatpush1.msra.mxu0 0.0
    %2044 = vmatprep.subr.mxu0 0.0
    %2045 = vmatpush1.msra.mxu0 0.0
    %2046 = vmatprep.subr.mxu0 0.0
    %2047 = vmatpush1.msra.mxu0 0.0
    %2048 = vmatprep.subr.mxu0 0.0
    %2049 = vmatpush1.msra.mxu0 0.0
    %2050 = vmatprep.subr.mxu0 0.0
    %2051 = vmatpush1.msra.mxu0 0.0
    %2052 = vmatprep.subr.mxu0 0.0
    %2053 = vmatpush1.msra.mxu0 0.0
    %2054 = vmatprep.subr.mxu0 0.0
    %2055 = vmatpush1.msra.mxu0 0.0
    %2056 = vmatprep.subr.mxu0 0.0
    %2057 = vmatpush1.msra.mxu0 0.0
    %2058 = vmatprep.subr.mxu0 0.0
    %2059 = vmatpush1.msra.mxu0 0.0
    %2060 = vmatprep.subr.mxu0 0.0
    %2061 = vmatpush1.msra.mxu0 0.0
    %2062 = vmatprep.subr.mxu0 0.0
    %2063 = vmatpush1.msra.mxu0 0.0
    %2064 = vmatprep.subr.mxu0 0.0
    %2065 = vmatpush1.msra.mxu0 0.0
    %2066 = vmatprep.subr.mxu0 0.0
    %2067 = vmatpush1.msra.mxu0 0.0
    %2068 = vmatprep.subr.mxu0 0.0
    %2069 = vmatpush1.msra.mxu0 0.0
    %2070 = vmatprep.subr.mxu0 0.0
    %2071 = vmatpush1.msra.mxu0 0.0
    %2072 = vmatprep.subr.mxu0 0.0
    %2073 = vmatpush1.msra.mxu0 0.0
    %2074 = vmatprep.subr.mxu0 0.0
    %2075 = vmatpush1.msra.mxu0 0.0
    %2076 = vmatprep.subr.mxu0 0.0
    %2077 = vmatpush1.msra.mxu0 0.0
    %2078 = vmatprep.subr.mxu0 0.0
    %2079 = vmatpush1.msra.mxu0 0.0
    %2080 = vmatprep.subr.mxu0 0.0
    %2081 = vmatpush1.msra.mxu0 0.0
    %2082 = vmatprep.subr.mxu0 0.0
    %2083 = vmatpush1.msra.mxu0 0.0
    %2084 = vmatprep.mubr.f32.mxu0 0.0
    %2085 = vmatmul.mubr.f32.gmra.mrb[0].mxu0 %v1927
    %v2086 = vpop.f32.mrb[0].mxu0
    %v2087 = vadd.f32 %v2018, %v2086
    %v2088 = vpop.f32.mrb[0].mxu0
    %2089 = vmatprep.mubr.f32.mxu0 0.0
    %2090 = vmatmul.mubr.f32.gmra.mrb[0].mxu0 %v1930
    %v2091 = vpop.f32.mrb[0].mxu0
    %v2092 = vadd.f32 %v2018, %v2091
    %v2093 = vpop.f32.mrb[0].mxu0
    %2094 = vdwg.mxu0
    %s2095 = scalar_lea.vmem %s6, 320
    %v2096 = vld [vmem:[%s2095] sm:$0xff]
    %v2097 = vld [vmem:[%s2095 + $0x8] sm:$0xff]
    %v2098 = vld [vmem:[%s2095 + $0x10] sm:$0xff]
    %v2099 = vld [vmem:[%s2095 + $0x18] sm:$0xff]
    %s2100 = scalar_lea.vmem %s7, 10
    %v2101 = vld [vmem:[%s2100] sm:$0x1]
    %v2103 = vlaneseq
    %v2104 = vshrl.u32 %v2103, 7
    %v2105 = vsub.s32 0, %v2104
    %v2106 = vrot.slane %v2101, %v2105
    %2108 = vmatprep.subr.mxu0 0.0
    %2109 = vmatpush1.msra.mxu0 %v2096
    %2110 = vmatprep.subr.mxu0 0.0
    %2111 = vmatpush1.msra.mxu0 %v2097
    %2112 = vmatprep.subr.mxu0 0.0
    %2113 = vmatpush1.msra.mxu0 %v2098
    %2114 = vmatprep.subr.mxu0 0.0
    %2115 = vmatpush1.msra.mxu0 %v2099
    %2116 = vmatprep.subr.mxu0 0.0
    %2117 = vmatpush1.msra.mxu0 0.0
    %2118 = vmatprep.subr.mxu0 0.0
    %2119 = vmatpush1.msra.mxu0 0.0
    %2120 = vmatprep.subr.mxu0 0.0
    %2121 = vmatpush1.msra.mxu0 0.0
    %2122 = vmatprep.subr.mxu0 0.0
    %2123 = vmatpush1.msra.mxu0 0.0
    %2124 = vmatprep.subr.mxu0 0.0
    %2125 = vmatpush1.msra.mxu0 0.0
    %2126 = vmatprep.subr.mxu0 0.0
    %2127 = vmatpush1.msra.mxu0 0.0
    %2128 = vmatprep.subr.mxu0 0.0
    %2129 = vmatpush1.msra.mxu0 0.0
    %2130 = vmatprep.subr.mxu0 0.0
    %2131 = vmatpush1.msra.mxu0 0.0
    %2132 = vmatprep.subr.mxu0 0.0
    %2133 = vmatpush1.msra.mxu0 0.0
    %2134 = vmatprep.subr.mxu0 0.0
    %2135 = vmatpush1.msra.mxu0 0.0
    %2136 = vmatprep.subr.mxu0 0.0
    %2137 = vmatpush1.msra.mxu0 0.0
    %2138 = vmatprep.subr.mxu0 0.0
    %2139 = vmatpush1.msra.mxu0 0.0
    %2140 = vmatprep.subr.mxu0 0.0
    %2141 = vmatpush1.msra.mxu0 0.0
    %2142 = vmatprep.subr.mxu0 0.0
    %2143 = vmatpush1.msra.mxu0 0.0
    %2144 = vmatprep.subr.mxu0 0.0
    %2145 = vmatpush1.msra.mxu0 0.0
    %2146 = vmatprep.subr.mxu0 0.0
    %2147 = vmatpush1.msra.mxu0 0.0
    %2148 = vmatprep.subr.mxu0 0.0
    %2149 = vmatpush1.msra.mxu0 0.0
    %2150 = vmatprep.subr.mxu0 0.0
    %2151 = vmatpush1.msra.mxu0 0.0
    %2152 = vmatprep.subr.mxu0 0.0
    %2153 = vmatpush1.msra.mxu0 0.0
    %2154 = vmatprep.subr.mxu0 0.0
    %2155 = vmatpush1.msra.mxu0 0.0
    %2156 = vmatprep.subr.mxu0 0.0
    %2157 = vmatpush1.msra.mxu0 0.0
    %2158 = vmatprep.subr.mxu0 0.0
    %2159 = vmatpush1.msra.mxu0 0.0
    %2160 = vmatprep.subr.mxu0 0.0
    %2161 = vmatpush1.msra.mxu0 0.0
    %2162 = vmatprep.subr.mxu0 0.0
    %2163 = vmatpush1.msra.mxu0 0.0
    %2164 = vmatprep.subr.mxu0 0.0
    %2165 = vmatpush1.msra.mxu0 0.0
    %2166 = vmatprep.subr.mxu0 0.0
    %2167 = vmatpush1.msra.mxu0 0.0
    %2168 = vmatprep.subr.mxu0 0.0
    %2169 = vmatpush1.msra.mxu0 0.0
    %2170 = vmatprep.subr.mxu0 0.0
    %2171 = vmatpush1.msra.mxu0 0.0
    %2172 = vmatprep.mubr.f32.mxu0 0.0
    %2173 = vmatmul.mubr.f32.gmra.mrb[0].mxu0 %v1927
    %v2174 = vpop.f32.mrb[0].mxu0
    %v2175 = vadd.f32 %v2106, %v2174
    %v2176 = vpop.f32.mrb[0].mxu0
    %2177 = vmatprep.mubr.f32.mxu0 0.0
    %2178 = vmatmul.mubr.f32.gmra.mrb[0].mxu0 %v1930
    %v2179 = vpop.f32.mrb[0].mxu0
    %v2180 = vadd.f32 %v2106, %v2179
    %v2181 = vpop.f32.mrb[0].mxu0
    %2182 = vdwg.mxu0
    %v2184 = vsel %vm532, %v1999, 0
    %v2187 = vsel %vm532, %v2087, 0
    %2189 = vmatprep.subr.mxu0 0.0
    %2190 = vmatpush1.xpose.msra.mxu0 %v2187
    %2191 = vmatprep.subr.mxu0 0.0
    %2192 = vmatpush1.xpose.msra.mxu0 0.0
    %2193 = vmatprep.subr.mxu0 0.0
    %2194 = vmatpush1.xpose.msra.mxu0 0.0
    %2195 = vmatprep.subr.mxu0 0.0
    %2196 = vmatpush1.xpose.msra.mxu0 0.0
    %2197 = vmatprep.subr.mxu0 0.0
    %2198 = vmatpush1.xpose.msra.mxu0 0.0
    %2199 = vmatprep.subr.mxu0 0.0
    %2200 = vmatpush1.xpose.msra.mxu0 0.0
    %2201 = vmatprep.subr.mxu0 0.0
    %2202 = vmatpush1.xpose.msra.mxu0 0.0
    %2203 = vmatprep.subr.mxu0 0.0
    %2204 = vmatpush1.xpose.msra.mxu0 0.0
    %2205 = vmatprep.subr.mxu0 0.0
    %2206 = vmatpush1.xpose.msra.mxu0 0.0
    %2207 = vmatprep.subr.mxu0 0.0
    %2208 = vmatpush1.xpose.msra.mxu0 0.0
    %2209 = vmatprep.subr.mxu0 0.0
    %2210 = vmatpush1.xpose.msra.mxu0 0.0
    %2211 = vmatprep.subr.mxu0 0.0
    %2212 = vmatpush1.xpose.msra.mxu0 0.0
    %2213 = vmatprep.subr.mxu0 0.0
    %2214 = vmatpush1.xpose.msra.mxu0 0.0
    %2215 = vmatprep.subr.mxu0 0.0
    %2216 = vmatpush1.xpose.msra.mxu0 0.0
    %2217 = vmatprep.subr.mxu0 0.0
    %2218 = vmatpush1.xpose.msra.mxu0 0.0
    %2219 = vmatprep.subr.mxu0 0.0
    %2220 = vmatpush1.xpose.msra.mxu0 0.0
    %2221 = vmatprep.subr.mxu0 0.0
    %2222 = vmatpush1.xpose.msra.mxu0 0.0
    %2223 = vmatprep.subr.mxu0 0.0
    %2224 = vmatpush1.xpose.msra.mxu0 0.0
    %2225 = vmatprep.subr.mxu0 0.0
    %2226 = vmatpush1.xpose.msra.mxu0 0.0
    %2227 = vmatprep.subr.mxu0 0.0
    %2228 = vmatpush1.xpose.msra.mxu0 0.0
    %2229 = vmatprep.subr.mxu0 0.0
    %2230 = vmatpush1.xpose.msra.mxu0 0.0
    %2231 = vmatprep.subr.mxu0 0.0
    %2232 = vmatpush1.xpose.msra.mxu0 0.0
    %2233 = vmatprep.subr.mxu0 0.0
    %2234 = vmatpush1.xpose.msra.mxu0 0.0
    %2235 = vmatprep.subr.mxu0 0.0
    %2236 = vmatpush1.xpose.msra.mxu0 0.0
    %2237 = vmatprep.subr.mxu0 0.0
    %2238 = vmatpush1.xpose.msra.mxu0 0.0
    %2239 = vmatprep.subr.mxu0 0.0
    %2240 = vmatpush1.xpose.msra.mxu0 0.0
    %2241 = vmatprep.subr.mxu0 0.0
    %2242 = vmatpush1.xpose.msra.mxu0 0.0
    %2243 = vmatprep.subr.mxu0 0.0
    %2244 = vmatpush1.xpose.msra.mxu0 0.0
    %2245 = vmatprep.subr.mxu0 0.0
    %2246 = vmatpush1.xpose.msra.mxu0 0.0
    %2247 = vmatprep.subr.mxu0 0.0
    %2248 = vmatpush1.xpose.msra.mxu0 0.0
    %2249 = vmatprep.subr.mxu0 0.0
    %2250 = vmatpush1.xpose.msra.mxu0 0.0
    %2251 = vmatprep.subr.mxu0 0.0
    %2252 = vmatpush1.xpose.msra.mxu0 0.0
    %2253 = vmatprep.mubr.f32.mxu0 0.0
    %2254 = vmatmul.mubr.f32.gmra.mrb[0].mxu0 %v2184
    %v2255 = vpop.f32.mrb[0].mxu0
    %v2256 = vadd.f32 %v525, %v2255
    %v2257 = vpop.f32.mrb[0].mxu0
    %2258 = vdwg.mxu0
    %v2260 = vsel %vm532, %v2004, 0
    %v2263 = vsel %vm532, %v2092, 0
    %2265 = vmatprep.subr.mxu0 0.0
    %2266 = vmatpush1.xpose.msra.mxu0 %v2263
    %2267 = vmatprep.subr.mxu0 0.0
    %2268 = vmatpush1.xpose.msra.mxu0 0.0
    %2269 = vmatprep.subr.mxu0 0.0
    %2270 = vmatpush1.xpose.msra.mxu0 0.0
    %2271 = vmatprep.subr.mxu0 0.0
    %2272 = vmatpush1.xpose.msra.mxu0 0.0
    %2273 = vmatprep.subr.mxu0 0.0
    %2274 = vmatpush1.xpose.msra.mxu0 0.0
    %2275 = vmatprep.subr.mxu0 0.0
    %2276 = vmatpush1.xpose.msra.mxu0 0.0
    %2277 = vmatprep.subr.mxu0 0.0
    %2278 = vmatpush1.xpose.msra.mxu0 0.0
    %2279 = vmatprep.subr.mxu0 0.0
    %2280 = vmatpush1.xpose.msra.mxu0 0.0
    %2281 = vmatprep.subr.mxu0 0.0
    %2282 = vmatpush1.xpose.msra.mxu0 0.0
    %2283 = vmatprep.subr.mxu0 0.0
    %2284 = vmatpush1.xpose.msra.mxu0 0.0
    %2285 = vmatprep.subr.mxu0 0.0
    %2286 = vmatpush1.xpose.msra.mxu0 0.0
    %2287 = vmatprep.subr.mxu0 0.0
    %2288 = vmatpush1.xpose.msra.mxu0 0.0
    %2289 = vmatprep.subr.mxu0 0.0
    %2290 = vmatpush1.xpose.msra.mxu0 0.0
    %2291 = vmatprep.subr.mxu0 0.0
    %2292 = vmatpush1.xpose.msra.mxu0 0.0
    %2293 = vmatprep.subr.mxu0 0.0
    %2294 = vmatpush1.xpose.msra.mxu0 0.0
    %2295 = vmatprep.subr.mxu0 0.0
    %2296 = vmatpush1.xpose.msra.mxu0 0.0
    %2297 = vmatprep.subr.mxu0 0.0
    %2298 = vmatpush1.xpose.msra.mxu0 0.0
    %2299 = vmatprep.subr.mxu0 0.0
    %2300 = vmatpush1.xpose.msra.mxu0 0.0
    %2301 = vmatprep.subr.mxu0 0.0
    %2302 = vmatpush1.xpose.msra.mxu0 0.0
    %2303 = vmatprep.subr.mxu0 0.0
    %2304 = vmatpush1.xpose.msra.mxu0 0.0
    %2305 = vmatprep.subr.mxu0 0.0
    %2306 = vmatpush1.xpose.msra.mxu0 0.0
    %2307 = vmatprep.subr.mxu0 0.0
    %2308 = vmatpush1.xpose.msra.mxu0 0.0
    %2309 = vmatprep.subr.mxu0 0.0
    %2310 = vmatpush1.xpose.msra.mxu0 0.0
    %2311 = vmatprep.subr.mxu0 0.0
    %2312 = vmatpush1.xpose.msra.mxu0 0.0
    %2313 = vmatprep.subr.mxu0 0.0
    %2314 = vmatpush1.xpose.msra.mxu0 0.0
    %2315 = vmatprep.subr.mxu0 0.0
    %2316 = vmatpush1.xpose.msra.mxu0 0.0
    %2317 = vmatprep.subr.mxu0 0.0
    %2318 = vmatpush1.xpose.msra.mxu0 0.0
    %2319 = vmatprep.subr.mxu0 0.0
    %2320 = vmatpush1.xpose.msra.mxu0 0.0
    %2321 = vmatprep.subr.mxu0 0.0
    %2322 = vmatpush1.xpose.msra.mxu0 0.0
    %2323 = vmatprep.subr.mxu0 0.0
    %2324 = vmatpush1.xpose.msra.mxu0 0.0
    %2325 = vmatprep.subr.mxu0 0.0
    %2326 = vmatpush1.xpose.msra.mxu0 0.0
    %2327 = vmatprep.subr.mxu0 0.0
    %2328 = vmatpush1.xpose.msra.mxu0 0.0
    %2329 = vmatprep.mubr.f32.mxu0 0.0
    %2330 = vmatmul.mubr.f32.gmra.mrb[0].mxu0 %v2260
    %v2331 = vpop.f32.mrb[0].mxu0
    %v2332 = vadd.f32 %v529, %v2331
    %v2333 = vpop.f32.mrb[0].mxu0
    %2334 = vdwg.mxu0
    %v2335 = vsel %vm685, %v2256, -inf
    %2336 = vmax.xlane.f32.xlu0 %v2335
    %v2337 = vpop.xlane.xlu0 %2336
    %v2338 = vsel %vm685, %v2332, -inf
    %2339 = vmax.xlane.f32.xlu0 %v2338
    %v2340 = vpop.xlane.xlu0 %2339
    %v2341 = vsub.f32 %v2256, %v2337
    %v2342 = vsub.f32 %v2332, %v2340
    %v2343 = vmul.f32 %v2341, 1.442695
    %v2344 = vpow.pop %v2343
    %v2345 = vmul.f32 %v2342, 1.442695
    %v2346 = vpow.pop %v2345
    %v2347 = vsel %vm685, %v2344, 0.0
    %2348 = vadd.xlane.f32.xlu0 %v2347
    %v2349 = vpop.xlane.xlu0 %2348
    %v2350 = vsel %vm685, %v2346, 0.0
    %2351 = vadd.xlane.f32.xlu0 %v2350
    %v2352 = vpop.xlane.xlu0 %2351
    %v2353 = vrcp.pop %v2349
    %v2354 = vrcp.pop %v2352
    %v2355 = vmul.f32 %v2344, %v2353
    %v2356 = vmul.f32 %v2346, %v2354
    %v2358 = vsel %vm685, %v2355, 0
    %2360 = vmatprep.subr.mxu0 0.0
    %2361 = vmatpush1.msra.mxu0 %v2175
    %2362 = vmatprep.subr.mxu0 0.0
    %2363 = vmatpush1.msra.mxu0 0.0
    %2364 = vmatprep.subr.mxu0 0.0
    %2365 = vmatpush1.msra.mxu0 0.0
    %2366 = vmatprep.subr.mxu0 0.0
    %2367 = vmatpush1.msra.mxu0 0.0
    %2368 = vmatprep.subr.mxu0 0.0
    %2369 = vmatpush1.msra.mxu0 0.0
    %2370 = vmatprep.subr.mxu0 0.0
    %2371 = vmatpush1.msra.mxu0 0.0
    %2372 = vmatprep.subr.mxu0 0.0
    %2373 = vmatpush1.msra.mxu0 0.0
    %2374 = vmatprep.subr.mxu0 0.0
    %2375 = vmatpush1.msra.mxu0 0.0
    %2376 = vmatprep.subr.mxu0 0.0
    %2377 = vmatpush1.msra.mxu0 0.0
    %2378 = vmatprep.subr.mxu0 0.0
    %2379 = vmatpush1.msra.mxu0 0.0
    %2380 = vmatprep.subr.mxu0 0.0
    %2381 = vmatpush1.msra.mxu0 0.0
    %2382 = vmatprep.subr.mxu0 0.0
    %2383 = vmatpush1.msra.mxu0 0.0
    %2384 = vmatprep.subr.mxu0 0.0
    %2385 = vmatpush1.msra.mxu0 0.0
    %2386 = vmatprep.subr.mxu0 0.0
    %2387 = vmatpush1.msra.mxu0 0.0
    %2388 = vmatprep.subr.mxu0 0.0
    %2389 = vmatpush1.msra.mxu0 0.0
    %2390 = vmatprep.subr.mxu0 0.0
    %2391 = vmatpush1.msra.mxu0 0.0
    %2392 = vmatprep.subr.mxu0 0.0
    %2393 = vmatpush1.msra.mxu0 0.0
    %2394 = vmatprep.subr.mxu0 0.0
    %2395 = vmatpush1.msra.mxu0 0.0
    %2396 = vmatprep.subr.mxu0 0.0
    %2397 = vmatpush1.msra.mxu0 0.0
    %2398 = vmatprep.subr.mxu0 0.0
    %2399 = vmatpush1.msra.mxu0 0.0
    %2400 = vmatprep.subr.mxu0 0.0
    %2401 = vmatpush1.msra.mxu0 0.0
    %2402 = vmatprep.subr.mxu0 0.0
    %2403 = vmatpush1.msra.mxu0 0.0
    %2404 = vmatprep.subr.mxu0 0.0
    %2405 = vmatpush1.msra.mxu0 0.0
    %2406 = vmatprep.subr.mxu0 0.0
    %2407 = vmatpush1.msra.mxu0 0.0
    %2408 = vmatprep.subr.mxu0 0.0
    %2409 = vmatpush1.msra.mxu0 0.0
    %2410 = vmatprep.subr.mxu0 0.0
    %2411 = vmatpush1.msra.mxu0 0.0
    %2412 = vmatprep.subr.mxu0 0.0
    %2413 = vmatpush1.msra.mxu0 0.0
    %2414 = vmatprep.subr.mxu0 0.0
    %2415 = vmatpush1.msra.mxu0 0.0
    %2416 = vmatprep.subr.mxu0 0.0
    %2417 = vmatpush1.msra.mxu0 0.0
    %2418 = vmatprep.subr.mxu0 0.0
    %2419 = vmatpush1.msra.mxu0 0.0
    %2420 = vmatprep.subr.mxu0 0.0
    %2421 = vmatpush1.msra.mxu0 0.0
    %2422 = vmatprep.subr.mxu0 0.0
    %2423 = vmatpush1.msra.mxu0 0.0
    %2424 = vmatprep.mubr.f32.mxu0 0.0
    %2425 = vmatmul.mubr.f32.gmra.mrb[0].mxu0 %v2358
    %v2426 = vpop.f32.mrb[0].mxu0
    %v2427 = vadd.f32 0.0, %v2426
    %v2428 = vpop.f32.mrb[0].mxu0
    %2429 = vdwg.mxu0
    %v2431 = vsel %vm685, %v2356, 0
    %2433 = vmatprep.subr.mxu0 0.0
    %2434 = vmatpush1.msra.mxu0 %v2180
    %2435 = vmatprep.subr.mxu0 0.0
    %2436 = vmatpush1.msra.mxu0 0.0
    %2437 = vmatprep.subr.mxu0 0.0
    %2438 = vmatpush1.msra.mxu0 0.0
    %2439 = vmatprep.subr.mxu0 0.0
    %2440 = vmatpush1.msra.mxu0 0.0
    %2441 = vmatprep.subr.mxu0 0.0
    %2442 = vmatpush1.msra.mxu0 0.0
    %2443 = vmatprep.subr.mxu0 0.0
    %2444 = vmatpush1.msra.mxu0 0.0
    %2445 = vmatprep.subr.mxu0 0.0
    %2446 = vmatpush1.msra.mxu0 0.0
    %2447 = vmatprep.subr.mxu0 0.0
    %2448 = vmatpush1.msra.mxu0 0.0
    %2449 = vmatprep.subr.mxu0 0.0
    %2450 = vmatpush1.msra.mxu0 0.0
    %2451 = vmatprep.subr.mxu0 0.0
    %2452 = vmatpush1.msra.mxu0 0.0
    %2453 = vmatprep.subr.mxu0 0.0
    %2454 = vmatpush1.msra.mxu0 0.0
    %2455 = vmatprep.subr.mxu0 0.0
    %2456 = vmatpush1.msra.mxu0 0.0
    %2457 = vmatprep.subr.mxu0 0.0
    %2458 = vmatpush1.msra.mxu0 0.0
    %2459 = vmatprep.subr.mxu0 0.0
    %2460 = vmatpush1.msra.mxu0 0.0
    %2461 = vmatprep.subr.mxu0 0.0
    %2462 = vmatpush1.msra.mxu0 0.0
    %2463 = vmatprep.subr.mxu0 0.0
    %2464 = vmatpush1.msra.mxu0 0.0
    %2465 = vmatprep.subr.mxu0 0.0
    %2466 = vmatpush1.msra.mxu0 0.0
    %2467 = vmatprep.subr.mxu0 0.0
    %2468 = vmatpush1.msra.mxu0 0.0
    %2469 = vmatprep.subr.mxu0 0.0
    %2470 = vmatpush1.msra.mxu0 0.0
    %2471 = vmatprep.subr.mxu0 0.0
    %2472 = vmatpush1.msra.mxu0 0.0
    %2473 = vmatprep.subr.mxu0 0.0
    %2474 = vmatpush1.msra.mxu0 0.0
    %2475 = vmatprep.subr.mxu0 0.0
    %2476 = vmatpush1.msra.mxu0 0.0
    %2477 = vmatprep.subr.mxu0 0.0
    %2478 = vmatpush1.msra.mxu0 0.0
    %2479 = vmatprep.subr.mxu0 0.0
    %2480 = vmatpush1.msra.mxu0 0.0
    %2481 = vmatprep.subr.mxu0 0.0
    %2482 = vmatpush1.msra.mxu0 0.0
    %2483 = vmatprep.subr.mxu0 0.0
    %2484 = vmatpush1.msra.mxu0 0.0
    %2485 = vmatprep.subr.mxu0 0.0
    %2486 = vmatpush1.msra.mxu0 0.0
    %2487 = vmatprep.subr.mxu0 0.0
    %2488 = vmatpush1.msra.mxu0 0.0
    %2489 = vmatprep.subr.mxu0 0.0
    %2490 = vmatpush1.msra.mxu0 0.0
    %2491 = vmatprep.subr.mxu0 0.0
    %2492 = vmatpush1.msra.mxu0 0.0
    %2493 = vmatprep.subr.mxu0 0.0
    %2494 = vmatpush1.msra.mxu0 0.0
    %2495 = vmatprep.subr.mxu0 0.0
    %2496 = vmatpush1.msra.mxu0 0.0
    %2497 = vmatprep.mubr.f32.mxu0 0.0
    %2498 = vmatmul.mubr.f32.gmra.mrb[0].mxu0 %v2431
    %v2499 = vpop.f32.mrb[0].mxu0
    %v2500 = vadd.f32 0.0, %v2499
    %v2501 = vpop.f32.mrb[0].mxu0
    %2502 = vdwg.mxu0
    %s2503 = scalar_lea.vmem %s8, 32
    %v2504 = vld [vmem:[%s2503] sm:$0xff]
    %v2505 = vld [vmem:[%s2503 + $0x8] sm:$0xff]
    %s2506 = scalar_lea.vmem %s6, 224
    %v2507 = vld [vmem:[%s2506] sm:$0xff]
    %v2508 = vld [vmem:[%s2506 + $0x8] sm:$0xff]
    %v2509 = vld [vmem:[%s2506 + $0x10] sm:$0xff]
    %v2510 = vld [vmem:[%s2506 + $0x18] sm:$0xff]
    %s2511 = scalar_lea.vmem %s7, 7
    %v2512 = vld [vmem:[%s2511] sm:$0x1]
    %v2514 = vlaneseq
    %v2515 = vshrl.u32 %v2514, 7
    %v2516 = vsub.s32 0, %v2515
    %v2517 = vrot.slane %v2512, %v2516
    %2519 = vmatprep.subr.mxu0 0.0
    %2520 = vmatpush1.msra.mxu0 %v2507
    %2521 = vmatprep.subr.mxu0 0.0
    %2522 = vmatpush1.msra.mxu0 %v2508
    %2523 = vmatprep.subr.mxu0 0.0
    %2524 = vmatpush1.msra.mxu0 %v2509
    %2525 = vmatprep.subr.mxu0 0.0
    %2526 = vmatpush1.msra.mxu0 %v2510
    %2527 = vmatprep.subr.mxu0 0.0
    %2528 = vmatpush1.msra.mxu0 0.0
    %2529 = vmatprep.subr.mxu0 0.0
    %2530 = vmatpush1.msra.mxu0 0.0
    %2531 = vmatprep.subr.mxu0 0.0
    %2532 = vmatpush1.msra.mxu0 0.0
    %2533 = vmatprep.subr.mxu0 0.0
    %2534 = vmatpush1.msra.mxu0 0.0
    %2535 = vmatprep.subr.mxu0 0.0
    %2536 = vmatpush1.msra.mxu0 0.0
    %2537 = vmatprep.subr.mxu0 0.0
    %2538 = vmatpush1.msra.mxu0 0.0
    %2539 = vmatprep.subr.mxu0 0.0
    %2540 = vmatpush1.msra.mxu0 0.0
    %2541 = vmatprep.subr.mxu0 0.0
    %2542 = vmatpush1.msra.mxu0 0.0
    %2543 = vmatprep.subr.mxu0 0.0
    %2544 = vmatpush1.msra.mxu0 0.0
    %2545 = vmatprep.subr.mxu0 0.0
    %2546 = vmatpush1.msra.mxu0 0.0
    %2547 = vmatprep.subr.mxu0 0.0
    %2548 = vmatpush1.msra.mxu0 0.0
    %2549 = vmatprep.subr.mxu0 0.0
    %2550 = vmatpush1.msra.mxu0 0.0
    %2551 = vmatprep.subr.mxu0 0.0
    %2552 = vmatpush1.msra.mxu0 0.0
    %2553 = vmatprep.subr.mxu0 0.0
    %2554 = vmatpush1.msra.mxu0 0.0
    %2555 = vmatprep.subr.mxu0 0.0
    %2556 = vmatpush1.msra.mxu0 0.0
    %2557 = vmatprep.subr.mxu0 0.0
    %2558 = vmatpush1.msra.mxu0 0.0
    %2559 = vmatprep.subr.mxu0 0.0
    %2560 = vmatpush1.msra.mxu0 0.0
    %2561 = vmatprep.subr.mxu0 0.0
    %2562 = vmatpush1.msra.mxu0 0.0
    %2563 = vmatprep.subr.mxu0 0.0
    %2564 = vmatpush1.msra.mxu0 0.0
    %2565 = vmatprep.subr.mxu0 0.0
    %2566 = vmatpush1.msra.mxu0 0.0
    %2567 = vmatprep.subr.mxu0 0.0
    %2568 = vmatpush1.msra.mxu0 0.0
    %2569 = vmatprep.subr.mxu0 0.0
    %2570 = vmatpush1.msra.mxu0 0.0
    %2571 = vmatprep.subr.mxu0 0.0
    %2572 = vmatpush1.msra.mxu0 0.0
    %2573 = vmatprep.subr.mxu0 0.0
    %2574 = vmatpush1.msra.mxu0 0.0
    %2575 = vmatprep.subr.mxu0 0.0
    %2576 = vmatpush1.msra.mxu0 0.0
    %2577 = vmatprep.subr.mxu0 0.0
    %2578 = vmatpush1.msra.mxu0 0.0
    %2579 = vmatprep.subr.mxu0 0.0
    %2580 = vmatpush1.msra.mxu0 0.0
    %2581 = vmatprep.subr.mxu0 0.0
    %2582 = vmatpush1.msra.mxu0 0.0
    %2583 = vmatprep.mubr.f32.mxu0 0.0
    %2584 = vmatmul.mubr.f32.gmra.mrb[0].mxu0 %v1927
    %v2585 = vpop.f32.mrb[0].mxu0
    %v2586 = vadd.f32 %v2517, %v2585
    %v2587 = vpop.f32.mrb[0].mxu0
    %2588 = vmatprep.mubr.f32.mxu0 0.0
    %2589 = vmatmul.mubr.f32.gmra.mrb[0].mxu0 %v1930
    %v2590 = vpop.f32.mrb[0].mxu0
    %v2591 = vadd.f32 %v2517, %v2590
    %v2592 = vpop.f32.mrb[0].mxu0
    %2593 = vdwg.mxu0
    %s2594 = scalar_lea.vmem %s6, 288
    %v2595 = vld [vmem:[%s2594] sm:$0xff]
    %v2596 = vld [vmem:[%s2594 + $0x8] sm:$0xff]
    %v2597 = vld [vmem:[%s2594 + $0x10] sm:$0xff]
    %v2598 = vld [vmem:[%s2594 + $0x18] sm:$0xff]
    %s2599 = scalar_lea.vmem %s7, 9
    %v2600 = vld [vmem:[%s2599] sm:$0x1]
    %v2602 = vlaneseq
    %v2603 = vshrl.u32 %v2602, 7
    %v2604 = vsub.s32 0, %v2603
    %v2605 = vrot.slane %v2600, %v2604
    %2607 = vmatprep.subr.mxu0 0.0
    %2608 = vmatpush1.msra.mxu0 %v2595
    %2609 = vmatprep.subr.mxu0 0.0
    %2610 = vmatpush1.msra.mxu0 %v2596
    %2611 = vmatprep.subr.mxu0 0.0
    %2612 = vmatpush1.msra.mxu0 %v2597
    %2613 = vmatprep.subr.mxu0 0.0
    %2614 = vmatpush1.msra.mxu0 %v2598
    %2615 = vmatprep.subr.mxu0 0.0
    %2616 = vmatpush1.msra.mxu0 0.0
    %2617 = vmatprep.subr.mxu0 0.0
    %2618 = vmatpush1.msra.mxu0 0.0
    %2619 = vmatprep.subr.mxu0 0.0
    %2620 = vmatpush1.msra.mxu0 0.0
    %2621 = vmatprep.subr.mxu0 0.0
    %2622 = vmatpush1.msra.mxu0 0.0
    %2623 = vmatprep.subr.mxu0 0.0
    %2624 = vmatpush1.msra.mxu0 0.0
    %2625 = vmatprep.subr.mxu0 0.0
    %2626 = vmatpush1.msra.mxu0 0.0
    %2627 = vmatprep.subr.mxu0 0.0
    %2628 = vmatpush1.msra.mxu0 0.0
    %2629 = vmatprep.subr.mxu0 0.0
    %2630 = vmatpush1.msra.mxu0 0.0
    %2631 = vmatprep.subr.mxu0 0.0
    %2632 = vmatpush1.msra.mxu0 0.0
    %2633 = vmatprep.subr.mxu0 0.0
    %2634 = vmatpush1.msra.mxu0 0.0
    %2635 = vmatprep.subr.mxu0 0.0
    %2636 = vmatpush1.msra.mxu0 0.0
    %2637 = vmatprep.subr.mxu0 0.0
    %2638 = vmatpush1.msra.mxu0 0.0
    %2639 = vmatprep.subr.mxu0 0.0
    %2640 = vmatpush1.msra.mxu0 0.0
    %2641 = vmatprep.subr.mxu0 0.0
    %2642 = vmatpush1.msra.mxu0 0.0
    %2643 = vmatprep.subr.mxu0 0.0
    %2644 = vmatpush1.msra.mxu0 0.0
    %2645 = vmatprep.subr.mxu0 0.0
    %2646 = vmatpush1.msra.mxu0 0.0
    %2647 = vmatprep.subr.mxu0 0.0
    %2648 = vmatpush1.msra.mxu0 0.0
    %2649 = vmatprep.subr.mxu0 0.0
    %2650 = vmatpush1.msra.mxu0 0.0
    %2651 = vmatprep.subr.mxu0 0.0
    %2652 = vmatpush1.msra.mxu0 0.0
    %2653 = vmatprep.subr.mxu0 0.0
    %2654 = vmatpush1.msra.mxu0 0.0
    %2655 = vmatprep.subr.mxu0 0.0
    %2656 = vmatpush1.msra.mxu0 0.0
    %2657 = vmatprep.subr.mxu0 0.0
    %2658 = vmatpush1.msra.mxu0 0.0
    %2659 = vmatprep.subr.mxu0 0.0
    %2660 = vmatpush1.msra.mxu0 0.0
    %2661 = vmatprep.subr.mxu0 0.0
    %2662 = vmatpush1.msra.mxu0 0.0
    %2663 = vmatprep.subr.mxu0 0.0
    %2664 = vmatpush1.msra.mxu0 0.0
    %2665 = vmatprep.subr.mxu0 0.0
    %2666 = vmatpush1.msra.mxu0 0.0
    %2667 = vmatprep.subr.mxu0 0.0
    %2668 = vmatpush1.msra.mxu0 0.0
    %2669 = vmatprep.subr.mxu0 0.0
    %2670 = vmatpush1.msra.mxu0 0.0
    %2671 = vmatprep.mubr.f32.mxu0 0.0
    %2672 = vmatmul.mubr.f32.gmra.mrb[0].mxu0 %v1927
    %v2673 = vpop.f32.mrb[0].mxu0
    %v2674 = vadd.f32 %v2605, %v2673
    %v2675 = vpop.f32.mrb[0].mxu0
    %2676 = vmatprep.mubr.f32.mxu0 0.0
    %2677 = vmatmul.mubr.f32.gmra.mrb[0].mxu0 %v1930
    %v2678 = vpop.f32.mrb[0].mxu0
    %v2679 = vadd.f32 %v2605, %v2678
    %v2680 = vpop.f32.mrb[0].mxu0
    %2681 = vdwg.mxu0
    %s2682 = scalar_lea.vmem %s6, 352
    %v2683 = vld [vmem:[%s2682] sm:$0xff]
    %v2684 = vld [vmem:[%s2682 + $0x8] sm:$0xff]
    %v2685 = vld [vmem:[%s2682 + $0x10] sm:$0xff]
    %v2686 = vld [vmem:[%s2682 + $0x18] sm:$0xff]
    %s2687 = scalar_lea.vmem %s7, 11
    %v2688 = vld [vmem:[%s2687] sm:$0x1]
    %v2690 = vlaneseq
    %v2691 = vshrl.u32 %v2690, 7
    %v2692 = vsub.s32 0, %v2691
    %v2693 = vrot.slane %v2688, %v2692
    %2695 = vmatprep.subr.mxu0 0.0
    %2696 = vmatpush1.msra.mxu0 %v2683
    %2697 = vmatprep.subr.mxu0 0.0
    %2698 = vmatpush1.msra.mxu0 %v2684
    %2699 = vmatprep.subr.mxu0 0.0
    %2700 = vmatpush1.msra.mxu0 %v2685
    %2701 = vmatprep.subr.mxu0 0.0
    %2702 = vmatpush1.msra.mxu0 %v2686
    %2703 = vmatprep.subr.mxu0 0.0
    %2704 = vmatpush1.msra.mxu0 0.0
    %2705 = vmatprep.subr.mxu0 0.0
    %2706 = vmatpush1.msra.mxu0 0.0
    %2707 = vmatprep.subr.mxu0 0.0
    %2708 = vmatpush1.msra.mxu0 0.0
    %2709 = vmatprep.subr.mxu0 0.0
    %2710 = vmatpush1.msra.mxu0 0.0
    %2711 = vmatprep.subr.mxu0 0.0
    %2712 = vmatpush1.msra.mxu0 0.0
    %2713 = vmatprep.subr.mxu0 0.0
    %2714 = vmatpush1.msra.mxu0 0.0
    %2715 = vmatprep.subr.mxu0 0.0
    %2716 = vmatpush1.msra.mxu0 0.0
    %2717 = vmatprep.subr.mxu0 0.0
    %2718 = vmatpush1.msra.mxu0 0.0
    %2719 = vmatprep.subr.mxu0 0.0
    %2720 = vmatpush1.msra.mxu0 0.0
    %2721 = vmatprep.subr.mxu0 0.0
    %2722 = vmatpush1.msra.mxu0 0.0
    %2723 = vmatprep.subr.mxu0 0.0
    %2724 = vmatpush1.msra.mxu0 0.0
    %2725 = vmatprep.subr.mxu0 0.0
    %2726 = vmatpush1.msra.mxu0 0.0
    %2727 = vmatprep.subr.mxu0 0.0
    %2728 = vmatpush1.msra.mxu0 0.0
    %2729 = vmatprep.subr.mxu0 0.0
    %2730 = vmatpush1.msra.mxu0 0.0
    %2731 = vmatprep.subr.mxu0 0.0
    %2732 = vmatpush1.msra.mxu0 0.0
    %2733 = vmatprep.subr.mxu0 0.0
    %2734 = vmatpush1.msra.mxu0 0.0
    %2735 = vmatprep.subr.mxu0 0.0
    %2736 = vmatpush1.msra.mxu0 0.0
    %2737 = vmatprep.subr.mxu0 0.0
    %2738 = vmatpush1.msra.mxu0 0.0
    %2739 = vmatprep.subr.mxu0 0.0
    %2740 = vmatpush1.msra.mxu0 0.0
    %2741 = vmatprep.subr.mxu0 0.0
    %2742 = vmatpush1.msra.mxu0 0.0
    %2743 = vmatprep.subr.mxu0 0.0
    %2744 = vmatpush1.msra.mxu0 0.0
    %2745 = vmatprep.subr.mxu0 0.0
    %2746 = vmatpush1.msra.mxu0 0.0
    %2747 = vmatprep.subr.mxu0 0.0
    %2748 = vmatpush1.msra.mxu0 0.0
    %2749 = vmatprep.subr.mxu0 0.0
    %2750 = vmatpush1.msra.mxu0 0.0
    %2751 = vmatprep.subr.mxu0 0.0
    %2752 = vmatpush1.msra.mxu0 0.0
    %2753 = vmatprep.subr.mxu0 0.0
    %2754 = vmatpush1.msra.mxu0 0.0
    %2755 = vmatprep.subr.mxu0 0.0
    %2756 = vmatpush1.msra.mxu0 0.0
    %2757 = vmatprep.subr.mxu0 0.0
    %2758 = vmatpush1.msra.mxu0 0.0
    %2759 = vmatprep.mubr.f32.mxu0 0.0
    %2760 = vmatmul.mubr.f32.gmra.mrb[0].mxu0 %v1927
    %v2761 = vpop.f32.mrb[0].mxu0
    %v2762 = vadd.f32 %v2693, %v2761
    %v2763 = vpop.f32.mrb[0].mxu0
    %2764 = vmatprep.mubr.f32.mxu0 0.0
    %2765 = vmatmul.mubr.f32.gmra.mrb[0].mxu0 %v1930
    %v2766 = vpop.f32.mrb[0].mxu0
    %v2767 = vadd.f32 %v2693, %v2766
    %v2768 = vpop.f32.mrb[0].mxu0
    %2769 = vdwg.mxu0
    %v2771 = vsel %vm532, %v2586, 0
    %v2774 = vsel %vm532, %v2674, 0
    %2776 = vmatprep.subr.mxu0 0.0
    %2777 = vmatpush1.xpose.msra.mxu0 %v2774
    %2778 = vmatprep.subr.mxu0 0.0
    %2779 = vmatpush1.xpose.msra.mxu0 0.0
    %2780 = vmatprep.subr.mxu0 0.0
    %2781 = vmatpush1.xpose.msra.mxu0 0.0
    %2782 = vmatprep.subr.mxu0 0.0
    %2783 = vmatpush1.xpose.msra.mxu0 0.0
    %2784 = vmatprep.subr.mxu0 0.0
    %2785 = vmatpush1.xpose.msra.mxu0 0.0
    %2786 = vmatprep.subr.mxu0 0.0
    %2787 = vmatpush1.xpose.msra.mxu0 0.0
    %2788 = vmatprep.subr.mxu0 0.0
    %2789 = vmatpush1.xpose.msra.mxu0 0.0
    %2790 = vmatprep.subr.mxu0 0.0
    %2791 = vmatpush1.xpose.msra.mxu0 0.0
    %2792 = vmatprep.subr.mxu0 0.0
    %2793 = vmatpush1.xpose.msra.mxu0 0.0
    %2794 = vmatprep.subr.mxu0 0.0
    %2795 = vmatpush1.xpose.msra.mxu0 0.0
    %2796 = vmatprep.subr.mxu0 0.0
    %2797 = vmatpush1.xpose.msra.mxu0 0.0
    %2798 = vmatprep.subr.mxu0 0.0
    %2799 = vmatpush1.xpose.msra.mxu0 0.0
    %2800 = vmatprep.subr.mxu0 0.0
    %2801 = vmatpush1.xpose.msra.mxu0 0.0
    %2802 = vmatprep.subr.mxu0 0.0
    %2803 = vmatpush1.xpose.msra.mxu0 0.0
    %2804 = vmatprep.subr.mxu0 0.0
    %2805 = vmatpush1.xpose.msra.mxu0 0.0
    %2806 = vmatprep.subr.mxu0 0.0
    %2807 = vmatpush1.xpose.msra.mxu0 0.0
    %2808 = vmatprep.subr.mxu0 0.0
    %2809 = vmatpush1.xpose.msra.mxu0 0.0
    %2810 = vmatprep.subr.mxu0 0.0
    %2811 = vmatpush1.xpose.msra.mxu0 0.0
    %2812 = vmatprep.subr.mxu0 0.0
    %2813 = vmatpush1.xpose.msra.mxu0 0.0
    %2814 = vmatprep.subr.mxu0 0.0
    %2815 = vmatpush1.xpose.msra.mxu0 0.0
    %2816 = vmatprep.subr.mxu0 0.0
    %2817 = vmatpush1.xpose.msra.mxu0 0.0
    %2818 = vmatprep.subr.mxu0 0.0
    %2819 = vmatpush1.xpose.msra.mxu0 0.0
    %2820 = vmatprep.subr.mxu0 0.0
    %2821 = vmatpush1.xpose.msra.mxu0 0.0
    %2822 = vmatprep.subr.mxu0 0.0
    %2823 = vmatpush1.xpose.msra.mxu0 0.0
    %2824 = vmatprep.subr.mxu0 0.0
    %2825 = vmatpush1.xpose.msra.mxu0 0.0
    %2826 = vmatprep.subr.mxu0 0.0
    %2827 = vmatpush1.xpose.msra.mxu0 0.0
    %2828 = vmatprep.subr.mxu0 0.0
    %2829 = vmatpush1.xpose.msra.mxu0 0.0
    %2830 = vmatprep.subr.mxu0 0.0
    %2831 = vmatpush1.xpose.msra.mxu0 0.0
    %2832 = vmatprep.subr.mxu0 0.0
    %2833 = vmatpush1.xpose.msra.mxu0 0.0
    %2834 = vmatprep.subr.mxu0 0.0
    %2835 = vmatpush1.xpose.msra.mxu0 0.0
    %2836 = vmatprep.subr.mxu0 0.0
    %2837 = vmatpush1.xpose.msra.mxu0 0.0
    %2838 = vmatprep.subr.mxu0 0.0
    %2839 = vmatpush1.xpose.msra.mxu0 0.0
    %2840 = vmatprep.mubr.f32.mxu0 0.0
    %2841 = vmatmul.mubr.f32.gmra.mrb[0].mxu0 %v2771
    %v2842 = vpop.f32.mrb[0].mxu0
    %v2843 = vadd.f32 %v525, %v2842
    %v2844 = vpop.f32.mrb[0].mxu0
    %2845 = vdwg.mxu0
    %v2847 = vsel %vm532, %v2591, 0
    %v2850 = vsel %vm532, %v2679, 0
    %2852 = vmatprep.subr.mxu0 0.0
    %2853 = vmatpush1.xpose.msra.mxu0 %v2850
    %2854 = vmatprep.subr.mxu0 0.0
    %2855 = vmatpush1.xpose.msra.mxu0 0.0
    %2856 = vmatprep.subr.mxu0 0.0
    %2857 = vmatpush1.xpose.msra.mxu0 0.0
    %2858 = vmatprep.subr.mxu0 0.0
    %2859 = vmatpush1.xpose.msra.mxu0 0.0
    %2860 = vmatprep.subr.mxu0 0.0
    %2861 = vmatpush1.xpose.msra.mxu0 0.0
    %2862 = vmatprep.subr.mxu0 0.0
    %2863 = vmatpush1.xpose.msra.mxu0 0.0
    %2864 = vmatprep.subr.mxu0 0.0
    %2865 = vmatpush1.xpose.msra.mxu0 0.0
    %2866 = vmatprep.subr.mxu0 0.0
    %2867 = vmatpush1.xpose.msra.mxu0 0.0
    %2868 = vmatprep.subr.mxu0 0.0
    %2869 = vmatpush1.xpose.msra.mxu0 0.0
    %2870 = vmatprep.subr.mxu0 0.0
    %2871 = vmatpush1.xpose.msra.mxu0 0.0
    %2872 = vmatprep.subr.mxu0 0.0
    %2873 = vmatpush1.xpose.msra.mxu0 0.0
    %2874 = vmatprep.subr.mxu0 0.0
    %2875 = vmatpush1.xpose.msra.mxu0 0.0
    %2876 = vmatprep.subr.mxu0 0.0
    %2877 = vmatpush1.xpose.msra.mxu0 0.0
    %2878 = vmatprep.subr.mxu0 0.0
    %2879 = vmatpush1.xpose.msra.mxu0 0.0
    %2880 = vmatprep.subr.mxu0 0.0
    %2881 = vmatpush1.xpose.msra.mxu0 0.0
    %2882 = vmatprep.subr.mxu0 0.0
    %2883 = vmatpush1.xpose.msra.mxu0 0.0
    %2884 = vmatprep.subr.mxu0 0.0
    %2885 = vmatpush1.xpose.msra.mxu0 0.0
    %2886 = vmatprep.subr.mxu0 0.0
    %2887 = vmatpush1.xpose.msra.mxu0 0.0
    %2888 = vmatprep.subr.mxu0 0.0
    %2889 = vmatpush1.xpose.msra.mxu0 0.0
    %2890 = vmatprep.subr.mxu0 0.0
    %2891 = vmatpush1.xpose.msra.mxu0 0.0
    %2892 = vmatprep.subr.mxu0 0.0
    %2893 = vmatpush1.xpose.msra.mxu0 0.0
    %2894 = vmatprep.subr.mxu0 0.0
    %2895 = vmatpush1.xpose.msra.mxu0 0.0
    %2896 = vmatprep.subr.mxu0 0.0
    %2897 = vmatpush1.xpose.msra.mxu0 0.0
    %2898 = vmatprep.subr.mxu0 0.0
    %2899 = vmatpush1.xpose.msra.mxu0 0.0
    %2900 = vmatprep.subr.mxu0 0.0
    %2901 = vmatpush1.xpose.msra.mxu0 0.0
    %2902 = vmatprep.subr.mxu0 0.0
    %2903 = vmatpush1.xpose.msra.mxu0 0.0
    %2904 = vmatprep.subr.mxu0 0.0
    %2905 = vmatpush1.xpose.msra.mxu0 0.0
    %2906 = vmatprep.subr.mxu0 0.0
    %2907 = vmatpush1.xpose.msra.mxu0 0.0
    %2908 = vmatprep.subr.mxu0 0.0
    %2909 = vmatpush1.xpose.msra.mxu0 0.0
    %2910 = vmatprep.subr.mxu0 0.0
    %2911 = vmatpush1.xpose.msra.mxu0 0.0
    %2912 = vmatprep.subr.mxu0 0.0
    %2913 = vmatpush1.xpose.msra.mxu0 0.0
    %2914 = vmatprep.subr.mxu0 0.0
    %2915 = vmatpush1.xpose.msra.mxu0 0.0
    %2916 = vmatprep.mubr.f32.mxu0 0.0
    %2917 = vmatmul.mubr.f32.gmra.mrb[0].mxu0 %v2847
    %v2918 = vpop.f32.mrb[0].mxu0
    %v2919 = vadd.f32 %v529, %v2918
    %v2920 = vpop.f32.mrb[0].mxu0
    %2921 = vdwg.mxu0
    %v2922 = vsel %vm685, %v2843, -inf
    %2923 = vmax.xlane.f32.xlu0 %v2922
    %v2924 = vpop.xlane.xlu0 %2923
    %v2925 = vsel %vm685, %v2919, -inf
    %2926 = vmax.xlane.f32.xlu0 %v2925
    %v2927 = vpop.xlane.xlu0 %2926
    %v2928 = vsub.f32 %v2843, %v2924
    %v2929 = vsub.f32 %v2919, %v2927
    %v2930 = vmul.f32 %v2928, 1.442695
    %v2931 = vpow.pop %v2930
    %v2932 = vmul.f32 %v2929, 1.442695
    %v2933 = vpow.pop %v2932
    %v2934 = vsel %vm685, %v2931, 0.0
    %2935 = vadd.xlane.f32.xlu0 %v2934
    %v2936 = vpop.xlane.xlu0 %2935
    %v2937 = vsel %vm685, %v2933, 0.0
    %2938 = vadd.xlane.f32.xlu0 %v2937
    %v2939 = vpop.xlane.xlu0 %2938
    %v2940 = vrcp.pop %v2936
    %v2941 = vrcp.pop %v2939
    %v2942 = vmul.f32 %v2931, %v2940
    %v2943 = vmul.f32 %v2933, %v2941
    %v2945 = vsel %vm685, %v2942, 0
    %2947 = vmatprep.subr.mxu0 0.0
    %2948 = vmatpush1.msra.mxu0 %v2762
    %2949 = vmatprep.subr.mxu0 0.0
    %2950 = vmatpush1.msra.mxu0 0.0
    %2951 = vmatprep.subr.mxu0 0.0
    %2952 = vmatpush1.msra.mxu0 0.0
    %2953 = vmatprep.subr.mxu0 0.0
    %2954 = vmatpush1.msra.mxu0 0.0
    %2955 = vmatprep.subr.mxu0 0.0
    %2956 = vmatpush1.msra.mxu0 0.0
    %2957 = vmatprep.subr.mxu0 0.0
    %2958 = vmatpush1.msra.mxu0 0.0
    %2959 = vmatprep.subr.mxu0 0.0
    %2960 = vmatpush1.msra.mxu0 0.0
    %2961 = vmatprep.subr.mxu0 0.0
    %2962 = vmatpush1.msra.mxu0 0.0
    %2963 = vmatprep.subr.mxu0 0.0
    %2964 = vmatpush1.msra.mxu0 0.0
    %2965 = vmatprep.subr.mxu0 0.0
    %2966 = vmatpush1.msra.mxu0 0.0
    %2967 = vmatprep.subr.mxu0 0.0
    %2968 = vmatpush1.msra.mxu0 0.0
    %2969 = vmatprep.subr.mxu0 0.0
    %2970 = vmatpush1.msra.mxu0 0.0
    %2971 = vmatprep.subr.mxu0 0.0
    %2972 = vmatpush1.msra.mxu0 0.0
    %2973 = vmatprep.subr.mxu0 0.0
    %2974 = vmatpush1.msra.mxu0 0.0
    %2975 = vmatprep.subr.mxu0 0.0
    %2976 = vmatpush1.msra.mxu0 0.0
    %2977 = vmatprep.subr.mxu0 0.0
    %2978 = vmatpush1.msra.mxu0 0.0
    %2979 = vmatprep.subr.mxu0 0.0
    %2980 = vmatpush1.msra.mxu0 0.0
    %2981 = vmatprep.subr.mxu0 0.0
    %2982 = vmatpush1.msra.mxu0 0.0
    %2983 = vmatprep.subr.mxu0 0.0
    %2984 = vmatpush1.msra.mxu0 0.0
    %2985 = vmatprep.subr.mxu0 0.0
    %2986 = vmatpush1.msra.mxu0 0.0
    %2987 = vmatprep.subr.mxu0 0.0
    %2988 = vmatpush1.msra.mxu0 0.0
    %2989 = vmatprep.subr.mxu0 0.0
    %2990 = vmatpush1.msra.mxu0 0.0
    %2991 = vmatprep.subr.mxu0 0.0
    %2992 = vmatpush1.msra.mxu0 0.0
    %2993 = vmatprep.subr.mxu0 0.0
    %2994 = vmatpush1.msra.mxu0 0.0
    %2995 = vmatprep.subr.mxu0 0.0
    %2996 = vmatpush1.msra.mxu0 0.0
    %2997 = vmatprep.subr.mxu0 0.0
    %2998 = vmatpush1.msra.mxu0 0.0
    %2999 = vmatprep.subr.mxu0 0.0
    %3000 = vmatpush1.msra.mxu0 0.0
    %3001 = vmatprep.subr.mxu0 0.0
    %3002 = vmatpush1.msra.mxu0 0.0
    %3003 = vmatprep.subr.mxu0 0.0
    %3004 = vmatpush1.msra.mxu0 0.0
    %3005 = vmatprep.subr.mxu0 0.0
    %3006 = vmatpush1.msra.mxu0 0.0
    %3007 = vmatprep.subr.mxu0 0.0
    %3008 = vmatpush1.msra.mxu0 0.0
    %3009 = vmatprep.subr.mxu0 0.0
    %3010 = vmatpush1.msra.mxu0 0.0
    %3011 = vmatprep.mubr.f32.mxu0 0.0
    %3012 = vmatmul.mubr.f32.gmra.mrb[0].mxu0 %v2945
    %v3013 = vpop.f32.mrb[0].mxu0
    %v3014 = vadd.f32 0.0, %v3013
    %v3015 = vpop.f32.mrb[0].mxu0
    %3016 = vdwg.mxu0
    %v3018 = vsel %vm685, %v2943, 0
    %3020 = vmatprep.subr.mxu0 0.0
    %3021 = vmatpush1.msra.mxu0 %v2767
    %3022 = vmatprep.subr.mxu0 0.0
    %3023 = vmatpush1.msra.mxu0 0.0
    %3024 = vmatprep.subr.mxu0 0.0
    %3025 = vmatpush1.msra.mxu0 0.0
    %3026 = vmatprep.subr.mxu0 0.0
    %3027 = vmatpush1.msra.mxu0 0.0
    %3028 = vmatprep.subr.mxu0 0.0
    %3029 = vmatpush1.msra.mxu0 0.0
    %3030 = vmatprep.subr.mxu0 0.0
    %3031 = vmatpush1.msra.mxu0 0.0
    %3032 = vmatprep.subr.mxu0 0.0
    %3033 = vmatpush1.msra.mxu0 0.0
    %3034 = vmatprep.subr.mxu0 0.0
    %3035 = vmatpush1.msra.mxu0 0.0
    %3036 = vmatprep.subr.mxu0 0.0
    %3037 = vmatpush1.msra.mxu0 0.0
    %3038 = vmatprep.subr.mxu0 0.0
    %3039 = vmatpush1.msra.mxu0 0.0
    %3040 = vmatprep.subr.mxu0 0.0
    %3041 = vmatpush1.msra.mxu0 0.0
    %3042 = vmatprep.subr.mxu0 0.0
    %3043 = vmatpush1.msra.mxu0 0.0
    %3044 = vmatprep.subr.mxu0 0.0
    %3045 = vmatpush1.msra.mxu0 0.0
    %3046 = vmatprep.subr.mxu0 0.0
    %3047 = vmatpush1.msra.mxu0 0.0
    %3048 = vmatprep.subr.mxu0 0.0
    %3049 = vmatpush1.msra.mxu0 0.0
    %3050 = vmatprep.subr.mxu0 0.0
    %3051 = vmatpush1.msra.mxu0 0.0
    %3052 = vmatprep.subr.mxu0 0.0
    %3053 = vmatpush1.msra.mxu0 0.0
    %3054 = vmatprep.subr.mxu0 0.0
    %3055 = vmatpush1.msra.mxu0 0.0
    %3056 = vmatprep.subr.mxu0 0.0
    %3057 = vmatpush1.msra.mxu0 0.0
    %3058 = vmatprep.subr.mxu0 0.0
    %3059 = vmatpush1.msra.mxu0 0.0
    %3060 = vmatprep.subr.mxu0 0.0
    %3061 = vmatpush1.msra.mxu0 0.0
    %3062 = vmatprep.subr.mxu0 0.0
    %3063 = vmatpush1.msra.mxu0 0.0
    %3064 = vmatprep.subr.mxu0 0.0
    %3065 = vmatpush1.msra.mxu0 0.0
    %3066 = vmatprep.subr.mxu0 0.0
    %3067 = vmatpush1.msra.mxu0 0.0
    %3068 = vmatprep.subr.mxu0 0.0
    %3069 = vmatpush1.msra.mxu0 0.0
    %3070 = vmatprep.subr.mxu0 0.0
    %3071 = vmatpush1.msra.mxu0 0.0
    %3072 = vmatprep.subr.mxu0 0.0
    %3073 = vmatpush1.msra.mxu0 0.0
    %3074 = vmatprep.subr.mxu0 0.0
    %3075 = vmatpush1.msra.mxu0 0.0
    %3076 = vmatprep.subr.mxu0 0.0
    %3077 = vmatpush1.msra.mxu0 0.0
    %3078 = vmatprep.subr.mxu0 0.0
    %3079 = vmatpush1.msra.mxu0 0.0
    %3080 = vmatprep.subr.mxu0 0.0
    %3081 = vmatpush1.msra.mxu0 0.0
    %3082 = vmatprep.subr.mxu0 0.0
    %3083 = vmatpush1.msra.mxu0 0.0
    %3084 = vmatprep.mubr.f32.mxu0 0.0
    %3085 = vmatmul.mubr.f32.gmra.mrb[0].mxu0 %v3018
    %v3086 = vpop.f32.mrb[0].mxu0
    %v3087 = vadd.f32 0.0, %v3086
    %v3088 = vpop.f32.mrb[0].mxu0
    %3089 = vdwg.mxu0
    %s3090 = scalar_lea.vmem %s8, 48
    %v3091 = vld [vmem:[%s3090] sm:$0xff]
    %v3092 = vld [vmem:[%s3090 + $0x8] sm:$0xff]
    %v3094 = vsel %vm532, %v3014, 0
    %v3097 = vsel %vm532, %v3087, 0
    %3099 = vmatprep.subr.mxu0 0.0
    %3100 = vmatpush1.msra.mxu0 %v3091
    %3101 = vmatprep.subr.mxu0 0.0
    %3102 = vmatpush1.msra.mxu0 %v3092
    %3103 = vmatprep.subr.mxu0 0.0
    %3104 = vmatpush1.msra.mxu0 0.0
    %3105 = vmatprep.subr.mxu0 0.0
    %3106 = vmatpush1.msra.mxu0 0.0
    %3107 = vmatprep.subr.mxu0 0.0
    %3108 = vmatpush1.msra.mxu0 0.0
    %3109 = vmatprep.subr.mxu0 0.0
    %3110 = vmatpush1.msra.mxu0 0.0
    %3111 = vmatprep.subr.mxu0 0.0
    %3112 = vmatpush1.msra.mxu0 0.0
    %3113 = vmatprep.subr.mxu0 0.0
    %3114 = vmatpush1.msra.mxu0 0.0
    %3115 = vmatprep.subr.mxu0 0.0
    %3116 = vmatpush1.msra.mxu0 0.0
    %3117 = vmatprep.subr.mxu0 0.0
    %3118 = vmatpush1.msra.mxu0 0.0
    %3119 = vmatprep.subr.mxu0 0.0
    %3120 = vmatpush1.msra.mxu0 0.0
    %3121 = vmatprep.subr.mxu0 0.0
    %3122 = vmatpush1.msra.mxu0 0.0
    %3123 = vmatprep.subr.mxu0 0.0
    %3124 = vmatpush1.msra.mxu0 0.0
    %3125 = vmatprep.subr.mxu0 0.0
    %3126 = vmatpush1.msra.mxu0 0.0
    %3127 = vmatprep.subr.mxu0 0.0
    %3128 = vmatpush1.msra.mxu0 0.0
    %3129 = vmatprep.subr.mxu0 0.0
    %3130 = vmatpush1.msra.mxu0 0.0
    %3131 = vmatprep.subr.mxu0 0.0
    %3132 = vmatpush1.msra.mxu0 0.0
    %3133 = vmatprep.subr.mxu0 0.0
    %3134 = vmatpush1.msra.mxu0 0.0
    %3135 = vmatprep.subr.mxu0 0.0
    %3136 = vmatpush1.msra.mxu0 0.0
    %3137 = vmatprep.subr.mxu0 0.0
    %3138 = vmatpush1.msra.mxu0 0.0
    %3139 = vmatprep.subr.mxu0 0.0
    %3140 = vmatpush1.msra.mxu0 0.0
    %3141 = vmatprep.subr.mxu0 0.0
    %3142 = vmatpush1.msra.mxu0 0.0
    %3143 = vmatprep.subr.mxu0 0.0
    %3144 = vmatpush1.msra.mxu0 0.0
    %3145 = vmatprep.subr.mxu0 0.0
    %3146 = vmatpush1.msra.mxu0 0.0
    %3147 = vmatprep.subr.mxu0 0.0
    %3148 = vmatpush1.msra.mxu0 0.0
    %3149 = vmatprep.subr.mxu0 0.0
    %3150 = vmatpush1.msra.mxu0 0.0
    %3151 = vmatprep.subr.mxu0 0.0
    %3152 = vmatpush1.msra.mxu0 0.0
    %3153 = vmatprep.subr.mxu0 0.0
    %3154 = vmatpush1.msra.mxu0 0.0
    %3155 = vmatprep.subr.mxu0 0.0
    %3156 = vmatpush1.msra.mxu0 0.0
    %3157 = vmatprep.subr.mxu0 0.0
    %3158 = vmatpush1.msra.mxu0 0.0
    %3159 = vmatprep.subr.mxu0 0.0
    %3160 = vmatpush1.msra.mxu0 0.0
    %3161 = vmatprep.subr.mxu0 0.0
    %3162 = vmatpush1.msra.mxu0 0.0
    %3163 = vmatprep.mubr.f32.mxu0 0.0
    %3164 = vmatmul.mubr.f32.gmra.mrb[0].mxu0 %v3094
    %v3165 = vpop.f32.mrb[0].mxu0
    %v3166 = vadd.f32 0.0, %v3165
    %v3167 = vpop.f32.mrb[0].mxu0
    %3168 = vmatprep.mubr.f32.mxu0 0.0
    %3169 = vmatmul.mubr.f32.gmra.mrb[0].mxu0 %v3097
    %v3170 = vpop.f32.mrb[0].mxu0
    %v3171 = vadd.f32 0.0, %v3170
    %v3172 = vpop.f32.mrb[0].mxu0
    %3173 = vdwg.mxu0
    %v3175 = vsel %vm532, %v2427, 0
    %v3178 = vsel %vm532, %v2500, 0
    %3180 = vmatprep.subr.mxu0 0.0
    %3181 = vmatpush1.msra.mxu0 %v2504
    %3182 = vmatprep.subr.mxu0 0.0
    %3183 = vmatpush1.msra.mxu0 %v2505
    %3184 = vmatprep.subr.mxu0 0.0
    %3185 = vmatpush1.msra.mxu0 0.0
    %3186 = vmatprep.subr.mxu0 0.0
    %3187 = vmatpush1.msra.mxu0 0.0
    %3188 = vmatprep.subr.mxu0 0.0
    %3189 = vmatpush1.msra.mxu0 0.0
    %3190 = vmatprep.subr.mxu0 0.0
    %3191 = vmatpush1.msra.mxu0 0.0
    %3192 = vmatprep.subr.mxu0 0.0
    %3193 = vmatpush1.msra.mxu0 0.0
    %3194 = vmatprep.subr.mxu0 0.0
    %3195 = vmatpush1.msra.mxu0 0.0
    %3196 = vmatprep.subr.mxu0 0.0
    %3197 = vmatpush1.msra.mxu0 0.0
    %3198 = vmatprep.subr.mxu0 0.0
    %3199 = vmatpush1.msra.mxu0 0.0
    %3200 = vmatprep.subr.mxu0 0.0
    %3201 = vmatpush1.msra.mxu0 0.0
    %3202 = vmatprep.subr.mxu0 0.0
    %3203 = vmatpush1.msra.mxu0 0.0
    %3204 = vmatprep.subr.mxu0 0.0
    %3205 = vmatpush1.msra.mxu0 0.0
    %3206 = vmatprep.subr.mxu0 0.0
    %3207 = vmatpush1.msra.mxu0 0.0
    %3208 = vmatprep.subr.mxu0 0.0
    %3209 = vmatpush1.msra.mxu0 0.0
    %3210 = vmatprep.subr.mxu0 0.0
    %3211 = vmatpush1.msra.mxu0 0.0
    %3212 = vmatprep.subr.mxu0 0.0
    %3213 = vmatpush1.msra.mxu0 0.0
    %3214 = vmatprep.subr.mxu0 0.0
    %3215 = vmatpush1.msra.mxu0 0.0
    %3216 = vmatprep.subr.mxu0 0.0
    %3217 = vmatpush1.msra.mxu0 0.0
    %3218 = vmatprep.subr.mxu0 0.0
    %3219 = vmatpush1.msra.mxu0 0.0
    %3220 = vmatprep.subr.mxu0 0.0
    %3221 = vmatpush1.msra.mxu0 0.0
    %3222 = vmatprep.subr.mxu0 0.0
    %3223 = vmatpush1.msra.mxu0 0.0
    %3224 = vmatprep.subr.mxu0 0.0
    %3225 = vmatpush1.msra.mxu0 0.0
    %3226 = vmatprep.subr.mxu0 0.0
    %3227 = vmatpush1.msra.mxu0 0.0
    %3228 = vmatprep.subr.mxu0 0.0
    %3229 = vmatpush1.msra.mxu0 0.0
    %3230 = vmatprep.subr.mxu0 0.0
    %3231 = vmatpush1.msra.mxu0 0.0
    %3232 = vmatprep.subr.mxu0 0.0
    %3233 = vmatpush1.msra.mxu0 0.0
    %3234 = vmatprep.subr.mxu0 0.0
    %3235 = vmatpush1.msra.mxu0 0.0
    %3236 = vmatprep.subr.mxu0 0.0
    %3237 = vmatpush1.msra.mxu0 0.0
    %3238 = vmatprep.subr.mxu0 0.0
    %3239 = vmatpush1.msra.mxu0 0.0
    %3240 = vmatprep.subr.mxu0 0.0
    %3241 = vmatpush1.msra.mxu0 0.0
    %3242 = vmatprep.subr.mxu0 0.0
    %3243 = vmatpush1.msra.mxu0 0.0
    %3244 = vmatprep.mubr.f32.mxu0 0.0
    %3245 = vmatmul.mubr.f32.gmra.mrb[0].mxu0 %v3175
    %v3246 = vpop.f32.mrb[0].mxu0
    %v3247 = vadd.f32 %v3166, %v3246
    %v3248 = vpop.f32.mrb[0].mxu0
    %3249 = vmatprep.mubr.f32.mxu0 0.0
    %3250 = vmatmul.mubr.f32.gmra.mrb[0].mxu0 %v3178
    %v3251 = vpop.f32.mrb[0].mxu0
    %v3252 = vadd.f32 %v3171, %v3251
    %v3253 = vpop.f32.mrb[0].mxu0
    %3254 = vdwg.mxu0
    %s3255 = scalar_lea.vmem %s9, 1
    %v3256 = vld [vmem:[%s3255] sm:$0x1]
    %v3258 = vlaneseq
    %v3259 = vshrl.u32 %v3258, 7
    %v3260 = vsub.s32 0, %v3259
    %v3261 = vrot.slane %v3256, %v3260
    %v3263 = vadd.f32 %v3247, %v3261
    %v3264 = vadd.f32 %v3252, %v3261
    %v3265 = vadd.f32 %v1911, %v3263
    %v3266 = vadd.f32 %v1912, %v3264
    %s3267 = scalar_lea.vmem %s10, 1
    %v3268 = vld [vmem:[%s3267] sm:$0x1]
    %s3269 = scalar_lea.vmem %s11, 1
    %v3270 = vld [vmem:[%s3269] sm:$0x1]
    %v3271 = vsel %vm183, %v3265, 0.0
    %3272 = vadd.xlane.f32.xlu0 %v3271
    %v3273 = vpop.xlane.xlu0 %3272
    %v3274 = vsel %vm183, %v3266, 0.0
    %3275 = vadd.xlane.f32.xlu0 %v3274
    %v3276 = vpop.xlane.xlu0 %3275
    %v3277 = vmul.f32 %v3273, %v190
    %v3278 = vmul.f32 %v3276, %v190
    %v3279 = vsub.f32 %v3265, %v3277
    %v3280 = vsub.f32 %v3266, %v3278
    %v3281 = vmul.f32 %v3279, %v3279
    %v3282 = vmul.f32 %v3280, %v3280
    %v3283 = vsel %vm183, %v3281, 0.0
    %3284 = vadd.xlane.f32.xlu0 %v3283
    %v3285 = vpop.xlane.xlu0 %3284
    %v3286 = vsel %vm183, %v3282, 0.0
    %3287 = vadd.xlane.f32.xlu0 %v3286
    %v3288 = vpop.xlane.xlu0 %3287
    %v3289 = vmul.f32 %v3285, %v190
    %v3290 = vmul.f32 %v3288, %v190
    %v3291 = vadd.f32 %v3289, 1e-12
    %v3292 = vadd.f32 %v3290, 1e-12
    %v3293 = vrsqrt.pop %v3291
    %v3294 = vrsqrt.pop %v3292
    %v3295 = vmul.f32 %v3279, %v3293
    %v3296 = vmul.f32 %v3280, %v3294
    %v3298 = vlaneseq
    %v3299 = vshrl.u32 %v3298, 7
    %v3300 = vsub.s32 0, %v3299
    %v3301 = vrot.slane %v3268, %v3300
    %v3303 = vmul.f32 %v3295, %v3301
    %v3304 = vmul.f32 %v3296, %v3301
    %v3306 = vlaneseq
    %v3307 = vshrl.u32 %v3306, 7
    %v3308 = vsub.s32 0, %v3307
    %v3309 = vrot.slane %v3270, %v3308
    %v3311 = vadd.f32 %v3303, %v3309
    %v3312 = vadd.f32 %v3304, %v3309
    %s3313 = scalar_lea.vmem %s12, 32
    %v3314 = vld [vmem:[%s3313] sm:$0xff]
    %v3315 = vld [vmem:[%s3313 + $0x8] sm:$0xff]
    %v3316 = vld [vmem:[%s3313 + $0x10] sm:$0xff]
    %v3317 = vld [vmem:[%s3313 + $0x18] sm:$0xff]
    %s3318 = scalar_lea.vmem %s13, 1
    %v3319 = vld [vmem:[%s3318] sm:$0x1]
    %v3321 = vlaneseq
    %v3322 = vshrl.u32 %v3321, 7
    %v3323 = vsub.s32 0, %v3322
    %v3324 = vrot.slane %v3319, %v3323
    %v3327 = vsel %vm183, %v3311, 0
    %v3330 = vsel %vm183, %v3312, 0
    %3332 = vmatprep.subr.mxu0 0.0
    %3333 = vmatpush1.msra.mxu0 %v3314
    %3334 = vmatprep.subr.mxu0 0.0
    %3335 = vmatpush1.msra.mxu0 %v3315
    %3336 = vmatprep.subr.mxu0 0.0
    %3337 = vmatpush1.msra.mxu0 %v3316
    %3338 = vmatprep.subr.mxu0 0.0
    %3339 = vmatpush1.msra.mxu0 %v3317
    %3340 = vmatprep.subr.mxu0 0.0
    %3341 = vmatpush1.msra.mxu0 0.0
    %3342 = vmatprep.subr.mxu0 0.0
    %3343 = vmatpush1.msra.mxu0 0.0
    %3344 = vmatprep.subr.mxu0 0.0
    %3345 = vmatpush1.msra.mxu0 0.0
    %3346 = vmatprep.subr.mxu0 0.0
    %3347 = vmatpush1.msra.mxu0 0.0
    %3348 = vmatprep.subr.mxu0 0.0
    %3349 = vmatpush1.msra.mxu0 0.0
    %3350 = vmatprep.subr.mxu0 0.0
    %3351 = vmatpush1.msra.mxu0 0.0
    %3352 = vmatprep.subr.mxu0 0.0
    %3353 = vmatpush1.msra.mxu0 0.0
    %3354 = vmatprep.subr.mxu0 0.0
    %3355 = vmatpush1.msra.mxu0 0.0
    %3356 = vmatprep.subr.mxu0 0.0
    %3357 = vmatpush1.msra.mxu0 0.0
    %3358 = vmatprep.subr.mxu0 0.0
    %3359 = vmatpush1.msra.mxu0 0.0
    %3360 = vmatprep.subr.mxu0 0.0
    %3361 = vmatpush1.msra.mxu0 0.0
    %3362 = vmatprep.subr.mxu0 0.0
    %3363 = vmatpush1.msra.mxu0 0.0
    %3364 = vmatprep.subr.mxu0 0.0
    %3365 = vmatpush1.msra.mxu0 0.0
    %3366 = vmatprep.subr.mxu0 0.0
    %3367 = vmatpush1.msra.mxu0 0.0
    %3368 = vmatprep.subr.mxu0 0.0
    %3369 = vmatpush1.msra.mxu0 0.0
    %3370 = vmatprep.subr.mxu0 0.0
    %3371 = vmatpush1.msra.mxu0 0.0
    %3372 = vmatprep.subr.mxu0 0.0
    %3373 = vmatpush1.msra.mxu0 0.0
    %3374 = vmatprep.subr.mxu0 0.0
    %3375 = vmatpush1.msra.mxu0 0.0
    %3376 = vmatprep.subr.mxu0 0.0
    %3377 = vmatpush1.msra.mxu0 0.0
    %3378 = vmatprep.subr.mxu0 0.0
    %3379 = vmatpush1.msra.mxu0 0.0
    %3380 = vmatprep.subr.mxu0 0.0
    %3381 = vmatpush1.msra.mxu0 0.0
    %3382 = vmatprep.subr.mxu0 0.0
    %3383 = vmatpush1.msra.mxu0 0.0
    %3384 = vmatprep.subr.mxu0 0.0
    %3385 = vmatpush1.msra.mxu0 0.0
    %3386 = vmatprep.subr.mxu0 0.0
    %3387 = vmatpush1.msra.mxu0 0.0
    %3388 = vmatprep.subr.mxu0 0.0
    %3389 = vmatpush1.msra.mxu0 0.0
    %3390 = vmatprep.subr.mxu0 0.0
    %3391 = vmatpush1.msra.mxu0 0.0
    %3392 = vmatprep.subr.mxu0 0.0
    %3393 = vmatpush1.msra.mxu0 0.0
    %3394 = vmatprep.subr.mxu0 0.0
    %3395 = vmatpush1.msra.mxu0 0.0
    %3396 = vmatprep.mubr.f32.mxu0 0.0
    %3397 = vmatmul.mubr.f32.gmra.mrb[0].mxu0 %v3327
    %v3398 = vpop.f32.mrb[0].mxu0
    %v3399 = vadd.f32 %v3324, %v3398
    %v3400 = vpop.f32.mrb[0].mxu0
    %3401 = vmatprep.mubr.f32.mxu0 0.0
    %3402 = vmatmul.mubr.f32.gmra.mrb[0].mxu0 %v3330
    %v3403 = vpop.f32.mrb[0].mxu0
    %v3404 = vadd.f32 %v3324, %v3403
    %v3405 = vpop.f32.mrb[0].mxu0
    %3406 = vdwg.mxu0
    %v3407 = vmul.f32 %v3399, %v3399
    %v3408 = vmul.f32 %v3404, %v3404
    %v3409 = vmul.f32 %v3399, %v3407
    %v3410 = vmul.f32 %v3404, %v3408
    %v3411 = vmul.f32 %v3409, 0.044715
    %v3412 = vmul.f32 %v3410, 0.044715
    %v3413 = vadd.f32 %v3399, %v3411
    %v3414 = vadd.f32 %v3404, %v3412
    %v3415 = vmul.f32 %v3413, 0.7978846
    %v3416 = vmul.f32 %v3414, 0.7978846
    %v3417 = vtanh.pop %v3415
    %v3418 = vtanh.pop %v3416
    %v3419 = vadd.f32 %v3417, 1.0
    %v3420 = vadd.f32 %v3418, 1.0
    %v3421 = vmul.f32 %v3419, 0.5
    %v3422 = vmul.f32 %v3420, 0.5
    %v3423 = vmul.f32 %v3399, %v3421
    %v3424 = vmul.f32 %v3404, %v3422
    %s3425 = scalar_lea.vmem %s14, 64
    %v3426 = vld [vmem:[%s3425] sm:$0xff]
    %v3427 = vld [vmem:[%s3425 + $0x8] sm:$0xff]
    %v3428 = vld [vmem:[%s3425 + $0x10] sm:$0xff]
    %v3429 = vld [vmem:[%s3425 + $0x18] sm:$0xff]
    %v3430 = vld [vmem:[%s3425 + $0x20] sm:$0xff]
    %v3431 = vld [vmem:[%s3425 + $0x28] sm:$0xff]
    %v3432 = vld [vmem:[%s3425 + $0x30] sm:$0xff]
    %v3433 = vld [vmem:[%s3425 + $0x38] sm:$0xff]
    %s3434 = scalar_lea.vmem %s15, 1
    %v3435 = vld [vmem:[%s3434] sm:$0x1]
    %v3437 = vlaneseq
    %v3438 = vshrl.u32 %v3437, 7
    %v3439 = vsub.s32 0, %v3438
    %v3440 = vrot.slane %v3435, %v3439
    %v3443 = vsel %vm1785, %v3423, 0
    %v3446 = vsel %vm1785, %v3424, 0
    %3448 = vmatprep.subr.mxu0 0.0
    %3449 = vmatpush1.msra.mxu0 %v3426
    %3450 = vmatprep.subr.mxu0 0.0
    %3451 = vmatpush1.msra.mxu0 %v3427
    %3452 = vmatprep.subr.mxu0 0.0
    %3453 = vmatpush1.msra.mxu0 %v3428
    %3454 = vmatprep.subr.mxu0 0.0
    %3455 = vmatpush1.msra.mxu0 %v3429
    %3456 = vmatprep.subr.mxu0 0.0
    %3457 = vmatpush1.msra.mxu0 %v3430
    %3458 = vmatprep.subr.mxu0 0.0
    %3459 = vmatpush1.msra.mxu0 %v3431
    %3460 = vmatprep.subr.mxu0 0.0
    %3461 = vmatpush1.msra.mxu0 %v3432
    %3462 = vmatprep.subr.mxu0 0.0
    %3463 = vmatpush1.msra.mxu0 %v3433
    %3464 = vmatprep.subr.mxu0 0.0
    %3465 = vmatpush1.msra.mxu0 0.0
    %3466 = vmatprep.subr.mxu0 0.0
    %3467 = vmatpush1.msra.mxu0 0.0
    %3468 = vmatprep.subr.mxu0 0.0
    %3469 = vmatpush1.msra.mxu0 0.0
    %3470 = vmatprep.subr.mxu0 0.0
    %3471 = vmatpush1.msra.mxu0 0.0
    %3472 = vmatprep.subr.mxu0 0.0
    %3473 = vmatpush1.msra.mxu0 0.0
    %3474 = vmatprep.subr.mxu0 0.0
    %3475 = vmatpush1.msra.mxu0 0.0
    %3476 = vmatprep.subr.mxu0 0.0
    %3477 = vmatpush1.msra.mxu0 0.0
    %3478 = vmatprep.subr.mxu0 0.0
    %3479 = vmatpush1.msra.mxu0 0.0
    %3480 = vmatprep.subr.mxu0 0.0
    %3481 = vmatpush1.msra.mxu0 0.0
    %3482 = vmatprep.subr.mxu0 0.0
    %3483 = vmatpush1.msra.mxu0 0.0
    %3484 = vmatprep.subr.mxu0 0.0
    %3485 = vmatpush1.msra.mxu0 0.0
    %3486 = vmatprep.subr.mxu0 0.0
    %3487 = vmatpush1.msra.mxu0 0.0
    %3488 = vmatprep.subr.mxu0 0.0
    %3489 = vmatpush1.msra.mxu0 0.0
    %3490 = vmatprep.subr.mxu0 0.0
    %3491 = vmatpush1.msra.mxu0 0.0
    %3492 = vmatprep.subr.mxu0 0.0
    %3493 = vmatpush1.msra.mxu0 0.0
    %3494 = vmatprep.subr.mxu0 0.0
    %3495 = vmatpush1.msra.mxu0 0.0
    %3496 = vmatprep.subr.mxu0 0.0
    %3497 = vmatpush1.msra.mxu0 0.0
    %3498 = vmatprep.subr.mxu0 0.0
    %3499 = vmatpush1.msra.mxu0 0.0
    %3500 = vmatprep.subr.mxu0 0.0
    %3501 = vmatpush1.msra.mxu0 0.0
    %3502 = vmatprep.subr.mxu0 0.0
    %3503 = vmatpush1.msra.mxu0 0.0
    %3504 = vmatprep.subr.mxu0 0.0
    %3505 = vmatpush1.msra.mxu0 0.0
    %3506 = vmatprep.subr.mxu0 0.0
    %3507 = vmatpush1.msra.mxu0 0.0
    %3508 = vmatprep.subr.mxu0 0.0
    %3509 = vmatpush1.msra.mxu0 0.0
    %3510 = vmatprep.subr.mxu0 0.0
    %3511 = vmatpush1.msra.mxu0 0.0
    %3512 = vmatprep.mubr.f32.mxu0 0.0
    %3513 = vmatmul.mubr.f32.gmra.mrb[0].mxu0 %v3443
    %v3514 = vpop.f32.mrb[0].mxu0
    %v3515 = vadd.f32 %v3440, %v3514
    %v3516 = vpop.f32.mrb[0].mxu0
    %3517 = vmatprep.mubr.f32.mxu0 0.0
    %3518 = vmatmul.mubr.f32.gmra.mrb[0].mxu0 %v3446
    %v3519 = vpop.f32.mrb[0].mxu0
    %v3520 = vadd.f32 %v3440, %v3519
    %v3521 = vpop.f32.mrb[0].mxu0
    %3522 = vdwg.mxu0
    %v3523 = vadd.f32 %v3311, %v3515
    %v3524 = vadd.f32 %v3312, %v3520
    %s3525 = scalar_lea.vmem %s16, 1
    %v3526 = vld [vmem:[%s3525] sm:$0x1]
    %s3527 = scalar_lea.vmem %s17, 1
    %v3528 = vld [vmem:[%s3527] sm:$0x1]
    %v3529 = vsel %vm183, %v3523, 0.0
    %3530 = vadd.xlane.f32.xlu0 %v3529
    %v3531 = vpop.xlane.xlu0 %3530
    %v3532 = vsel %vm183, %v3524, 0.0
    %3533 = vadd.xlane.f32.xlu0 %v3532
    %v3534 = vpop.xlane.xlu0 %3533
    %v3535 = vmul.f32 %v3531, %v190
    %v3536 = vmul.f32 %v3534, %v190
    %v3537 = vsub.f32 %v3523, %v3535
    %v3538 = vsub.f32 %v3524, %v3536
    %v3539 = vmul.f32 %v3537, %v3537
    %v3540 = vmul.f32 %v3538, %v3538
    %v3541 = vsel %vm183, %v3539, 0.0
    %3542 = vadd.xlane.f32.xlu0 %v3541
    %v3543 = vpop.xlane.xlu0 %3542
    %v3544 = vsel %vm183, %v3540, 0.0
    %3545 = vadd.xlane.f32.xlu0 %v3544
    %v3546 = vpop.xlane.xlu0 %3545
    %v3547 = vmul.f32 %v3543, %v190
    %v3548 = vmul.f32 %v3546, %v190
    %v3549 = vadd.f32 %v3547, 1e-12
    %v3550 = vadd.f32 %v3548, 1e-12
    %v3551 = vrsqrt.pop %v3549
    %v3552 = vrsqrt.pop %v3550
    %v3553 = vmul.f32 %v3537, %v3551
    %v3554 = vmul.f32 %v3538, %v3552
    %v3556 = vlaneseq
    %v3557 = vshrl.u32 %v3556, 7
    %v3558 = vsub.s32 0, %v3557
    %v3559 = vrot.slane %v3526, %v3558
    %v3561 = vmul.f32 %v3553, %v3559
    %v3562 = vmul.f32 %v3554, %v3559
    %v3564 = vlaneseq
    %v3565 = vshrl.u32 %v3564, 7
    %v3566 = vsub.s32 0, %v3565
    %v3567 = vrot.slane %v3528, %v3566
    %v3569 = vadd.f32 %v3561, %v3567
    %v3570 = vadd.f32 %v3562, %v3567
    %v3571 = vld [vmem:[%s18] sm:$0xff]
    %v3572 = vld [vmem:[%s18 + $0x8] sm:$0xff]
    %v3573 = vld [vmem:[%s18 + $0x10] sm:$0xff]
    %v3574 = vld [vmem:[%s18 + $0x18] sm:$0xff]
    %v3575 = vld [vmem:[%s19] sm:$0x1]
    %v3577 = vlaneseq
    %v3578 = vshrl.u32 %v3577, 7
    %v3579 = vsub.s32 0, %v3578
    %v3580 = vrot.slane %v3575, %v3579
    %v3584 = vrot.slane %v3570, 7
    %vm3585 = vcmask 1041409
    %v3586 = vsel %vm3585, %v3584, %v3569
    %v3587 = vsel %vm183, %v3586, 0
    %3589 = vmatprep.subr.mxu0 0.0
    %3590 = vmatpush1.msra.mxu0 %v3571
    %3591 = vmatprep.subr.mxu0 0.0
    %3592 = vmatpush1.msra.mxu0 %v3572
    %3593 = vmatprep.subr.mxu0 0.0
    %3594 = vmatpush1.msra.mxu0 %v3573
    %3595 = vmatprep.subr.mxu0 0.0
    %3596 = vmatpush1.msra.mxu0 %v3574
    %3597 = vmatprep.subr.mxu0 0.0
    %3598 = vmatpush1.msra.mxu0 0.0
    %3599 = vmatprep.subr.mxu0 0.0
    %3600 = vmatpush1.msra.mxu0 0.0
    %3601 = vmatprep.subr.mxu0 0.0
    %3602 = vmatpush1.msra.mxu0 0.0
    %3603 = vmatprep.subr.mxu0 0.0
    %3604 = vmatpush1.msra.mxu0 0.0
    %3605 = vmatprep.subr.mxu0 0.0
    %3606 = vmatpush1.msra.mxu0 0.0
    %3607 = vmatprep.subr.mxu0 0.0
    %3608 = vmatpush1.msra.mxu0 0.0
    %3609 = vmatprep.subr.mxu0 0.0
    %3610 = vmatpush1.msra.mxu0 0.0
    %3611 = vmatprep.subr.mxu0 0.0
    %3612 = vmatpush1.msra.mxu0 0.0
    %3613 = vmatprep.subr.mxu0 0.0
    %3614 = vmatpush1.msra.mxu0 0.0
    %3615 = vmatprep.subr.mxu0 0.0
    %3616 = vmatpush1.msra.mxu0 0.0
    %3617 = vmatprep.subr.mxu0 0.0
    %3618 = vmatpush1.msra.mxu0 0.0
    %3619 = vmatprep.subr.mxu0 0.0
    %3620 = vmatpush1.msra.mxu0 0.0
    %3621 = vmatprep.subr.mxu0 0.0
    %3622 = vmatpush1.msra.mxu0 0.0
    %3623 = vmatprep.subr.mxu0 0.0
    %3624 = vmatpush1.msra.mxu0 0.0
    %3625 = vmatprep.subr.mxu0 0.0
    %3626 = vmatpush1.msra.mxu0 0.0
    %3627 = vmatprep.subr.mxu0 0.0
    %3628 = vmatpush1.msra.mxu0 0.0
    %3629 = vmatprep.subr.mxu0 0.0
    %3630 = vmatpush1.msra.mxu0 0.0
    %3631 = vmatprep.subr.mxu0 0.0
    %3632 = vmatpush1.msra.mxu0 0.0
    %3633 = vmatprep.subr.mxu0 0.0
    %3634 = vmatpush1.msra.mxu0 0.0
    %3635 = vmatprep.subr.mxu0 0.0
    %3636 = vmatpush1.msra.mxu0 0.0
    %3637 = vmatprep.subr.mxu0 0.0
    %3638 = vmatpush1.msra.mxu0 0.0
    %3639 = vmatprep.subr.mxu0 0.0
    %3640 = vmatpush1.msra.mxu0 0.0
    %3641 = vmatprep.subr.mxu0 0.0
    %3642 = vmatpush1.msra.mxu0 0.0
    %3643 = vmatprep.subr.mxu0 0.0
    %3644 = vmatpush1.msra.mxu0 0.0
    %3645 = vmatprep.subr.mxu0 0.0
    %3646 = vmatpush1.msra.mxu0 0.0
    %3647 = vmatprep.subr.mxu0 0.0
    %3648 = vmatpush1.msra.mxu0 0.0
    %3649 = vmatprep.subr.mxu0 0.0
    %3650 = vmatpush1.msra.mxu0 0.0
    %3651 = vmatprep.subr.mxu0 0.0
    %3652 = vmatpush1.msra.mxu0 0.0
    %3653 = vmatprep.mubr.f32.mxu0 0.0
    %3654 = vmatmul.mubr.f32.gmra.mrb[0].mxu0 %v3587
    %v3655 = vpop.f32.mrb[0].mxu0
    %v3656 = vadd.f32 %v3580, %v3655
    %v3657 = vpop.f32.mrb[0].mxu0
    %3658 = vdwg.mxu0
    %v3659 = vtanh.pop %v3656
    %v3660 = vld [vmem:[%s20] sm:$0xff]
    %v3661 = vld [vmem:[%s20 + $0x8] sm:$0xff]
    %v3662 = vld [vmem:[%s20 + $0x10] sm:$0xff]
    %v3663 = vld [vmem:[%s20 + $0x18] sm:$0xff]
    %v3664 = vld [vmem:[%s21] sm:$0x1]
    %v3666 = vlaneseq
    %v3667 = vshrl.u32 %v3666, 7
    %v3668 = vsub.s32 0, %v3667
    %v3669 = vrot.slane %v3664, %v3668
    %v3672 = vsel %vm183, %v3659, 0
    %3674 = vmatprep.subr.mxu0 0.0
    %3675 = vmatpush1.msra.mxu0 %v3660
    %3676 = vmatprep.subr.mxu0 0.0
    %3677 = vmatpush1.msra.mxu0 %v3661
    %3678 = vmatprep.subr.mxu0 0.0
    %3679 = vmatpush1.msra.mxu0 %v3662
    %3680 = vmatprep.subr.mxu0 0.0
    %3681 = vmatpush1.msra.mxu0 %v3663
    %3682 = vmatprep.subr.mxu0 0.0
    %3683 = vmatpush1.msra.mxu0 0.0
    %3684 = vmatprep.subr.mxu0 0.0
    %3685 = vmatpush1.msra.mxu0 0.0
    %3686 = vmatprep.subr.mxu0 0.0
    %3687 = vmatpush1.msra.mxu0 0.0
    %3688 = vmatprep.subr.mxu0 0.0
    %3689 = vmatpush1.msra.mxu0 0.0
    %3690 = vmatprep.subr.mxu0 0.0
    %3691 = vmatpush1.msra.mxu0 0.0
    %3692 = vmatprep.subr.mxu0 0.0
    %3693 = vmatpush1.msra.mxu0 0.0
    %3694 = vmatprep.subr.mxu0 0.0
    %3695 = vmatpush1.msra.mxu0 0.0
    %3696 = vmatprep.subr.mxu0 0.0
    %3697 = vmatpush1.msra.mxu0 0.0
    %3698 = vmatprep.subr.mxu0 0.0
    %3699 = vmatpush1.msra.mxu0 0.0
    %3700 = vmatprep.subr.mxu0 0.0
    %3701 = vmatpush1.msra.mxu0 0.0
    %3702 = vmatprep.subr.mxu0 0.0
    %3703 = vmatpush1.msra.mxu0 0.0
    %3704 = vmatprep.subr.mxu0 0.0
    %3705 = vmatpush1.msra.mxu0 0.0
    %3706 = vmatprep.subr.mxu0 0.0
    %3707 = vmatpush1.msra.mxu0 0.0
    %3708 = vmatprep.subr.mxu0 0.0
    %3709 = vmatpush1.msra.mxu0 0.0
    %3710 = vmatprep.subr.mxu0 0.0
    %3711 = vmatpush1.msra.mxu0 0.0
    %3712 = vmatprep.subr.mxu0 0.0
    %3713 = vmatpush1.msra.mxu0 0.0
    %3714 = vmatprep.subr.mxu0 0.0
    %3715 = vmatpush1.msra.mxu0 0.0
    %3716 = vmatprep.subr.mxu0 0.0
    %3717 = vmatpush1.msra.mxu0 0.0
    %3718 = vmatprep.subr.mxu0 0.0
    %3719 = vmatpush1.msra.mxu0 0.0
    %3720 = vmatprep.subr.mxu0 0.0
    %3721 = vmatpush1.msra.mxu0 0.0
    %3722 = vmatprep.subr.mxu0 0.0
    %3723 = vmatpush1.msra.mxu0 0.0
    %3724 = vmatprep.subr.mxu0 0.0
    %3725 = vmatpush1.msra.mxu0 0.0
    %3726 = vmatprep.subr.mxu0 0.0
    %3727 = vmatpush1.msra.mxu0 0.0
    %3728 = vmatprep.subr.mxu0 0.0
    %3729 = vmatpush1.msra.mxu0 0.0
    %3730 = vmatprep.subr.mxu0 0.0
    %3731 = vmatpush1.msra.mxu0 0.0
    %3732 = vmatprep.subr.mxu0 0.0
    %3733 = vmatpush1.msra.mxu0 0.0
    %3734 = vmatprep.subr.mxu0 0.0
    %3735 = vmatpush1.msra.mxu0 0.0
    %3736 = vmatprep.subr.mxu0 0.0
    %3737 = vmatpush1.msra.mxu0 0.0
    %3738 = vmatprep.mubr.f32.mxu0 0.0
    %3739 = vmatmul.mubr.f32.gmra.mrb[0].mxu0 %v3672
    %v3740 = vpop.f32.mrb[0].mxu0
    %v3741 = vadd.f32 %v3669, %v3740
    %v3742 = vpop.f32.mrb[0].mxu0
    %3743 = vdwg.mxu0
    %v3744 = vxor.u32 %v3741, 2147483648
    %v3745 = vmul.f32 %v3744, 1.442695
    %v3746 = vpow.pop %v3745
    %v3747 = vadd.f32 %v3746, 1.0
    %v3748 = vrcp.pop %v3747
    %v3749 = vmul.f32 1.0, %v3748
    %3750 = vst [vmem:[#allocation2] sm:$0x3] %v3749
    // Predicated region
    $region90: #{bert_forward.1} parent=1 // pred_check
      _
    $region91: #{bert_forward.1} parent=1 // pred_check_branch
      %3752 = sbr.rel (0) target = $region93
    $region92: #{bert_forward.1} parent=1 // pred_region
      %s3754 = ssub.s32 32, 32
      %3755 = vsyncadd [#allocation3], %s3754
      %s3757 = sshll.u32 [#allocation2], 4
      %s3758 = int_to_ptr.vmem [resolvable:$true] %s3757
      %3760 = dma.vmem_to_hbm [thread:$0]  %s3758, 32, %s22, [#allocation3]
    $region93: #{bert_forward.1} parent=1 // pred_fallthru
      _
    // Predicated region
    $region94: #{bert_forward.1} parent=1 // pred_check
      _
    $region95: #{bert_forward.1} parent=1 // pred_check_branch
      %3762 = sbr.rel (0) target = $region97
    $region96: #{bert_forward.1} parent=1 // pred_region
      %3763 = dma.done [#allocation3], 32
    $region97: #{bert_forward.1} parent=1 // pred_fallthru
      _
    %3764 = vsyncpa [#allocation3], 1

</llo_original>
